<compile_context>
chip_gen: v6e
topology: v6e:2x2x1
jax: 0.10.0
libtpu: 0.0.40
codegen_flags: <defaults>
</compile_context>

<pallas_src>
import jax
import jax.numpy as jnp
from jax.experimental import pallas as pl
from jax.experimental.pallas import tpu as pltpu


def _round_up(x, m):
    return (x + m - 1) // m * m


def _pick_rows_group(Ho, Wo, target_rows=1024):
    """Largest divisor of Ho whose row-group (rows*Wo) keeps the f32 accumulator modest."""
    best = 1
    for d in range(1, Ho + 1):
        if Ho % d == 0 and d * Wo <= target_rows:
            best = d
    return best


def _make_conv_bn_relu_kernel(KH, KW, rows_group):
    def kernel(x_ref, w_ref, ss_ref, o_ref):
        # x_ref : (1, Hp, Wp, Cin)   padded NHWC image (matmul dtype, e.g. bf16)
        # w_ref : (KH*KW, Cin, NT)   per-tap weights, resident across the batch axis
        # ss_ref: (2, NT)            row 0 = folded BN scale, row 1 = folded BN shift (f32)
        # o_ref : (1, Ho, Wo, NT)    lane-dense output tile
        Ho, Wo, NT = o_ref.shape[1], o_ref.shape[2], o_ref.shape[3]
        Cin = x_ref.shape[3]
        scale = ss_ref[0:1, :]
        shift = ss_ref[1:2, :]

        n_groups = Ho // rows_group
        for g in range(n_groups):                       # static, fully unrolled
            r0 = g * rows_group
            # Halo'd row slab: loaded once, reused by all KH*KW taps.
            slab = x_ref[0, r0:r0 + rows_group + KH - 1, :, :]   # (rows+KH-1, Wp, Cin)
            acc = jnp.zeros((rows_group * Wo, NT), jnp.float32)
            for kh in range(KH):
                for kw in range(KW):
                    a = slab[kh:kh + rows_group, kw:kw + Wo, :]   # (rows, Wo, Cin)
                    a = a.reshape(rows_group * Wo, Cin)
                    acc = acc + jnp.dot(a, w_ref[kh * KW + kw],
                                        preferred_element_type=jnp.float32)
            y = jnp.maximum(acc * scale + shift, 0.0)             # fused BN + ReLU (f32)
            o_ref[0, r0:r0 + rows_group, :, :] = y.reshape(
                rows_group, Wo, NT).astype(o_ref.dtype)
    return kernel


def conv_bn_relu_nhwc(x_nhwc, weight, conv_bias, gamma, beta, running_mean, running_var,
                      *, eps=1e-5, stride=1, padding=1,
                      matmul_dtype=jnp.bfloat16, out_dtype=jnp.bfloat16, n_tile=None):
    """Fused Conv2d(3x3) + BatchNorm2d(eval) + ReLU on NHWC activations.

    x_nhwc : (N, H, W, Cin)    weight : (Cout, Cin, KH, KW)   returns (N, Ho, Wo, Cout).
    """
    N, H, W, Cin = x_nhwc.shape
    Cout, Cin_w, KH, KW = weight.shape
    assert Cin == Cin_w, "channel mismatch"
    sh, sw = (stride, stride) if isinstance(stride, int) else stride
    assert sh == 1 and sw == 1, "fused Pallas path implements stride=1 (see TODO above)"
    ph, pw = (padding, padding) if isinstance(padding, int) else padding

    Ho = H + 2 * ph - KH + 1
    Wo = W + 2 * pw - KW + 1
    Hp, Wp = H + 2 * ph, W + 2 * pw

    # ---- one-time layout prep (plain JAX) ----------------------------------
    x_pad = jnp.pad(x_nhwc, ((0, 0), (ph, ph), (pw, pw), (0, 0))).astype(matmul_dtype)

    Cout_pad = _round_up(Cout, 128)
    w = jnp.transpose(weight, (2, 3, 1, 0)).reshape(KH * KW, Cin, Cout)
    w = jnp.pad(w, ((0, 0), (0, 0), (0, Cout_pad - Cout))).astype(matmul_dtype)

    # fold conv bias + eval-mode BatchNorm into a per-channel affine (f32)
    if conv_bias is None:
        conv_bias = jnp.zeros((Cout,), jnp.float32)
    inv_std = jax.lax.rsqrt(running_var.astype(jnp.float32) + eps)
    scale = gamma.astype(jnp.float32) * inv_std
    shift = beta.astype(jnp.float32) + (conv_bias.astype(jnp.float32)
                                        - running_mean.astype(jnp.float32)) * scale
    ss = jnp.stack([scale, shift], axis=0)                      # (2, Cout)
    ss = jnp.pad(ss, ((0, 0), (0, Cout_pad - Cout)))            # padded lanes -> relu(0)=0

    # ---- tiling -------------------------------------------------------------
    if n_tile is None:
        if Cout_pad <= 512:
            n_tile = Cout_pad                 # whole weight slab resident
        else:
            n_tile = 256 if Cout_pad % 256 == 0 else 128
    assert Cout_pad % n_tile == 0
    rows_group = _pick_rows_group(Ho, Wo)

    grid = (Cout_pad // n_tile, N)            # j outermost: weights constant across n

    out = pl.pallas_call(
        _make_conv_bn_relu_kernel(KH, KW, rows_group),
        out_shape=jax.ShapeDtypeStruct((N, Ho, Wo, Cout_pad), out_dtype),
        grid=grid,
        in_specs=[
            pl.BlockSpec((1, Hp, Wp, Cin), lambda j, n: (n, 0, 0, 0)),
            pl.BlockSpec((KH * KW, Cin, n_tile), lambda j, n: (0, 0, j)),
            pl.BlockSpec((2, n_tile), lambda j, n: (0, j)),
        ],
        out_specs=pl.BlockSpec((1, Ho, Wo, n_tile), lambda j, n: (n, 0, 0, j)),
        compiler_params=pltpu.CompilerParams(
            dimension_semantics=("parallel", "parallel"),
            vmem_limit_bytes=32 * 1024 * 1024),
    )(x_pad, w, ss)

    return out[..., :Cout]


def conv_bn_relu_nchw(x_nchw, weight, conv_bias, gamma, beta, running_mean, running_var,
                      **kwargs):
    """PyTorch-layout wrapper (NCHW in / NCHW out) around the NHWC fused kernel."""
    x = jnp.transpose(x_nchw, (0, 2, 3, 1))
    y = conv_bn_relu_nhwc(x, weight, conv_bias, gamma, beta,
                          running_mean, running_var, **kwargs)
    return jnp.transpose(y, (0, 3, 1, 2))


def _reference(x_nchw, weight, conv_bias, gamma, beta, mean, var, eps=1e-5, padding=1):
    y = jax.lax.conv_general_dilated(
        x_nchw, weight, window_strides=(1, 1),
        padding=((padding, padding), (padding, padding)),
        dimension_numbers=("NCHW", "OIHW", "NCHW"))
    if conv_bias is not None:
        y = y + conv_bias[None, :, None, None]
    y = (y - mean[None, :, None, None]) / jnp.sqrt(var[None, :, None, None] + eps)
    y = gamma[None, :, None, None] * y + beta[None, :, None, None]
    return jnp.maximum(y, 0.0)


if __name__ == "__main__":
    # Small shapes consistent with the module's forward (NCHW input).
    N, Cin, H, W = 2, 4, 16, 16
    Cout, KH, KW = 8, 3, 3

    key = jax.random.PRNGKey(0)
    k_x, k_w, k_b, k_g, k_bt, k_m, k_v = jax.random.split(key, 7)

    x = jax.random.normal(k_x, (N, Cin, H, W), dtype=jnp.float32)
    weight = jax.random.normal(k_w, (Cout, Cin, KH, KW), dtype=jnp.float32) * 0.1
    conv_bias = jax.random.normal(k_b, (Cout,), dtype=jnp.float32) * 0.05
    gamma = 1.0 + 0.1 * jax.random.normal(k_g, (Cout,), dtype=jnp.float32)
    beta = 0.1 * jax.random.normal(k_bt, (Cout,), dtype=jnp.float32)
    running_mean = 0.1 * jax.random.normal(k_m, (Cout,), dtype=jnp.float32)
    running_var = jnp.abs(1.0 + 0.1 * jax.random.normal(k_v, (Cout,), dtype=jnp.float32))

    ref = _reference(x, weight, conv_bias, gamma, beta, running_mean, running_var)

    # f32 validation path (tight check vs the XLA conv reference).
    out_f32 = conv_bn_relu_nchw(x, weight, conv_bias, gamma, beta,
                                running_mean, running_var,
                                matmul_dtype=jnp.float32, out_dtype=jnp.float32)
    out_f32 = jax.block_until_ready(out_f32)
    assert out_f32.shape == (N, Cout, H, W)
    assert jnp.allclose(out_f32, ref, atol=1e-3, rtol=1e-3), "f32 mismatch vs reference"

    # Default deployment path: bf16 matmul inputs, f32 accumulation/epilogue, bf16 output.
    out_bf16 = conv_bn_relu_nchw(x, weight, conv_bias, gamma, beta,
                                 running_mean, running_var)
    out_bf16 = jax.block_until_ready(out_bf16)
    assert out_bf16.dtype == jnp.bfloat16
    assert jnp.allclose(out_bf16.astype(jnp.float32), ref, atol=5e-2, rtol=5e-2), \
        "bf16 mismatch vs reference"

    # No-bias variant (PyTorch Conv2d(bias=False) followed by BN, the usual MobileNet case).
    ref_nb = _reference(x, weight, None, gamma, beta, running_mean, running_var)
    out_nb = conv_bn_relu_nchw(x, weight, None, gamma, beta, running_mean, running_var)
    out_nb = jax.block_until_ready(out_nb)
    assert jnp.allclose(out_nb.astype(jnp.float32), ref_nb, atol=5e-2, rtol=5e-2), \
        "bias=None mismatch vs reference"

    print("KERNEL_OK")
</pallas_src>

<mosaic_0001>
module attributes {stable_mosaic.version = 11 : i64} {
  func.func @kernel(%arg0: i32, %arg1: i32, %arg2: memref<1x18x18x4xf32, #tpu.memory_space<vmem>>, %arg3: memref<9x4x128xf32, #tpu.memory_space<vmem>>, %arg4: memref<2x128xf32, #tpu.memory_space<vmem>>, %arg5: memref<1x16x16x128xf32, #tpu.memory_space<vmem>>) attributes {dimension_semantics = [#tpu.dimension_semantics<parallel>, #tpu.dimension_semantics<parallel>], iteration_bounds = array<i64: 1, 2>, scalar_prefetch = 0 : i64, scratch_operands = 0 : i64, tpu.core_type = #tpu.core_type<tc>, window_params = [{transform_indices = @transform_0, window_bounds = array<i64: 1, 18, 18, 4>}, {transform_indices = @transform_1, window_bounds = array<i64: 9, 4, 128>}, {transform_indices = @transform_2, window_bounds = array<i64: 2, 128>}, {transform_indices = @transform_3, window_bounds = array<i64: 1, 16, 16, 128>}]} {
    %c0 = arith.constant 0 : index
    %c0_0 = arith.constant 0 : index
    %0 = vector.load %arg4[%c0, %c0_0] : memref<2x128xf32, #tpu.memory_space<vmem>>, vector<1x128xf32>
    %c1 = arith.constant 1 : index
    %c0_1 = arith.constant 0 : index
    %1 = vector.load %arg4[%c1, %c0_1] : memref<2x128xf32, #tpu.memory_space<vmem>>, vector<1x128xf32>
    %c0_2 = arith.constant 0 : index
    %c0_3 = arith.constant 0 : index
    %c0_4 = arith.constant 0 : index
    %c0_5 = arith.constant 0 : index
    %2 = vector.load %arg2[%c0_2, %c0_3, %c0_4, %c0_5] : memref<1x18x18x4xf32, #tpu.memory_space<vmem>>, vector<1x18x18x4xf32>
    %3 = vector.shape_cast %2 : vector<1x18x18x4xf32> to vector<18x18x4xf32>
    %cst = arith.constant 0.000000e+00 : f32
    %4 = vector.broadcast %cst : f32 to vector<256x128xf32>
    %5 = vector.extract_strided_slice %3 {offsets = [0, 0, 0], sizes = [16, 16, 4], strides = [1, 1, 1]} : vector<18x18x4xf32> to vector<16x16x4xf32>
    %6 = vector.shape_cast %5 : vector<16x16x4xf32> to vector<256x4xf32>
    %c0_6 = arith.constant 0 : index
    %c0_7 = arith.constant 0 : index
    %c0_8 = arith.constant 0 : index
    %7 = vector.load %arg3[%c0_6, %c0_7, %c0_8] : memref<9x4x128xf32, #tpu.memory_space<vmem>>, vector<1x4x128xf32>
    %8 = vector.shape_cast %7 : vector<1x4x128xf32> to vector<4x128xf32>
    %cst_9 = arith.constant dense<0.000000e+00> : vector<256x128xf32>
    %9 = tpu.matmul %6, %8, %cst_9 {dimension_numbers = #tpu.dot_dimension_numbers<[1], [0], [0], [1], [0, 0, 1, 1], [], []>} : vector<256x4xf32>, vector<4x128xf32>, vector<256x128xf32> -> vector<256x128xf32>
    %10 = arith.addf %4, %9 : vector<256x128xf32>
    %11 = vector.extract_strided_slice %3 {offsets = [0, 1, 0], sizes = [16, 16, 4], strides = [1, 1, 1]} : vector<18x18x4xf32> to vector<16x16x4xf32>
    %12 = vector.shape_cast %11 : vector<16x16x4xf32> to vector<256x4xf32>
    %c1_10 = arith.constant 1 : index
    %c0_11 = arith.constant 0 : index
    %c0_12 = arith.constant 0 : index
    %13 = vector.load %arg3[%c1_10, %c0_11, %c0_12] : memref<9x4x128xf32, #tpu.memory_space<vmem>>, vector<1x4x128xf32>
    %14 = vector.shape_cast %13 : vector<1x4x128xf32> to vector<4x128xf32>
    %cst_13 = arith.constant dense<0.000000e+00> : vector<256x128xf32>
    %15 = tpu.matmul %12, %14, %cst_13 {dimension_numbers = #tpu.dot_dimension_numbers<[1], [0], [0], [1], [0, 0, 1, 1], [], []>} : vector<256x4xf32>, vector<4x128xf32>, vector<256x128xf32> -> vector<256x128xf32>
    %16 = arith.addf %10, %15 : vector<256x128xf32>
    %17 = vector.extract_strided_slice %3 {offsets = [0, 2, 0], sizes = [16, 16, 4], strides = [1, 1, 1]} : vector<18x18x4xf32> to vector<16x16x4xf32>
    %18 = vector.shape_cast %17 : vector<16x16x4xf32> to vector<256x4xf32>
    %c2 = arith.constant 2 : index
    %c0_14 = arith.constant 0 : index
    %c0_15 = arith.constant 0 : index
    %19 = vector.load %arg3[%c2, %c0_14, %c0_15] : memref<9x4x128xf32, #tpu.memory_space<vmem>>, vector<1x4x128xf32>
    %20 = vector.shape_cast %19 : vector<1x4x128xf32> to vector<4x128xf32>
    %cst_16 = arith.constant dense<0.000000e+00> : vector<256x128xf32>
    %21 = tpu.matmul %18, %20, %cst_16 {dimension_numbers = #tpu.dot_dimension_numbers<[1], [0], [0], [1], [0, 0, 1, 1], [], []>} : vector<256x4xf32>, vector<4x128xf32>, vector<256x128xf32> -> vector<256x128xf32>
    %22 = arith.addf %16, %21 : vector<256x128xf32>
    %23 = vector.extract_strided_slice %3 {offsets = [1, 0, 0], sizes = [16, 16, 4], strides = [1, 1, 1]} : vector<18x18x4xf32> to vector<16x16x4xf32>
    %24 = vector.shape_cast %23 : vector<16x16x4xf32> to vector<256x4xf32>
    %c3 = arith.constant 3 : index
    %c0_17 = arith.constant 0 : index
    %c0_18 = arith.constant 0 : index
    %25 = vector.load %arg3[%c3, %c0_17, %c0_18] : memref<9x4x128xf32, #tpu.memory_space<vmem>>, vector<1x4x128xf32>
    %26 = vector.shape_cast %25 : vector<1x4x128xf32> to vector<4x128xf32>
    %cst_19 = arith.constant dense<0.000000e+00> : vector<256x128xf32>
    %27 = tpu.matmul %24, %26, %cst_19 {dimension_numbers = #tpu.dot_dimension_numbers<[1], [0], [0], [1], [0, 0, 1, 1], [], []>} : vector<256x4xf32>, vector<4x128xf32>, vector<256x128xf32> -> vector<256x128xf32>
    %28 = arith.addf %22, %27 : vector<256x128xf32>
    %29 = vector.extract_strided_slice %3 {offsets = [1, 1, 0], sizes = [16, 16, 4], strides = [1, 1, 1]} : vector<18x18x4xf32> to vector<16x16x4xf32>
    %30 = vector.shape_cast %29 : vector<16x16x4xf32> to vector<256x4xf32>
    %c4 = arith.constant 4 : index
    %c0_20 = arith.constant 0 : index
    %c0_21 = arith.constant 0 : index
    %31 = vector.load %arg3[%c4, %c0_20, %c0_21] : memref<9x4x128xf32, #tpu.memory_space<vmem>>, vector<1x4x128xf32>
    %32 = vector.shape_cast %31 : vector<1x4x128xf32> to vector<4x128xf32>
    %cst_22 = arith.constant dense<0.000000e+00> : vector<256x128xf32>
    %33 = tpu.matmul %30, %32, %cst_22 {dimension_numbers = #tpu.dot_dimension_numbers<[1], [0], [0], [1], [0, 0, 1, 1], [], []>} : vector<256x4xf32>, vector<4x128xf32>, vector<256x128xf32> -> vector<256x128xf32>
    %34 = arith.addf %28, %33 : vector<256x128xf32>
    %35 = vector.extract_strided_slice %3 {offsets = [1, 2, 0], sizes = [16, 16, 4], strides = [1, 1, 1]} : vector<18x18x4xf32> to vector<16x16x4xf32>
    %36 = vector.shape_cast %35 : vector<16x16x4xf32> to vector<256x4xf32>
    %c5 = arith.constant 5 : index
    %c0_23 = arith.constant 0 : index
    %c0_24 = arith.constant 0 : index
    %37 = vector.load %arg3[%c5, %c0_23, %c0_24] : memref<9x4x128xf32, #tpu.memory_space<vmem>>, vector<1x4x128xf32>
    %38 = vector.shape_cast %37 : vector<1x4x128xf32> to vector<4x128xf32>
    %cst_25 = arith.constant dense<0.000000e+00> : vector<256x128xf32>
    %39 = tpu.matmul %36, %38, %cst_25 {dimension_numbers = #tpu.dot_dimension_numbers<[1], [0], [0], [1], [0, 0, 1, 1], [], []>} : vector<256x4xf32>, vector<4x128xf32>, vector<256x128xf32> -> vector<256x128xf32>
    %40 = arith.addf %34, %39 : vector<256x128xf32>
    %41 = vector.extract_strided_slice %3 {offsets = [2, 0, 0], sizes = [16, 16, 4], strides = [1, 1, 1]} : vector<18x18x4xf32> to vector<16x16x4xf32>
    %42 = vector.shape_cast %41 : vector<16x16x4xf32> to vector<256x4xf32>
    %c6 = arith.constant 6 : index
    %c0_26 = arith.constant 0 : index
    %c0_27 = arith.constant 0 : index
    %43 = vector.load %arg3[%c6, %c0_26, %c0_27] : memref<9x4x128xf32, #tpu.memory_space<vmem>>, vector<1x4x128xf32>
    %44 = vector.shape_cast %43 : vector<1x4x128xf32> to vector<4x128xf32>
    %cst_28 = arith.constant dense<0.000000e+00> : vector<256x128xf32>
    %45 = tpu.matmul %42, %44, %cst_28 {dimension_numbers = #tpu.dot_dimension_numbers<[1], [0], [0], [1], [0, 0, 1, 1], [], []>} : vector<256x4xf32>, vector<4x128xf32>, vector<256x128xf32> -> vector<256x128xf32>
    %46 = arith.addf %40, %45 : vector<256x128xf32>
    %47 = vector.extract_strided_slice %3 {offsets = [2, 1, 0], sizes = [16, 16, 4], strides = [1, 1, 1]} : vector<18x18x4xf32> to vector<16x16x4xf32>
    %48 = vector.shape_cast %47 : vector<16x16x4xf32> to vector<256x4xf32>
    %c7 = arith.constant 7 : index
    %c0_29 = arith.constant 0 : index
    %c0_30 = arith.constant 0 : index
    %49 = vector.load %arg3[%c7, %c0_29, %c0_30] : memref<9x4x128xf32, #tpu.memory_space<vmem>>, vector<1x4x128xf32>
    %50 = vector.shape_cast %49 : vector<1x4x128xf32> to vector<4x128xf32>
    %cst_31 = arith.constant dense<0.000000e+00> : vector<256x128xf32>
    %51 = tpu.matmul %48, %50, %cst_31 {dimension_numbers = #tpu.dot_dimension_numbers<[1], [0], [0], [1], [0, 0, 1, 1], [], []>} : vector<256x4xf32>, vector<4x128xf32>, vector<256x128xf32> -> vector<256x128xf32>
    %52 = arith.addf %46, %51 : vector<256x128xf32>
    %53 = vector.extract_strided_slice %3 {offsets = [2, 2, 0], sizes = [16, 16, 4], strides = [1, 1, 1]} : vector<18x18x4xf32> to vector<16x16x4xf32>
    %54 = vector.shape_cast %53 : vector<16x16x4xf32> to vector<256x4xf32>
    %c8 = arith.constant 8 : index
    %c0_32 = arith.constant 0 : index
    %c0_33 = arith.constant 0 : index
    %55 = vector.load %arg3[%c8, %c0_32, %c0_33] : memref<9x4x128xf32, #tpu.memory_space<vmem>>, vector<1x4x128xf32>
    %56 = vector.shape_cast %55 : vector<1x4x128xf32> to vector<4x128xf32>
    %cst_34 = arith.constant dense<0.000000e+00> : vector<256x128xf32>
    %57 = tpu.matmul %54, %56, %cst_34 {dimension_numbers = #tpu.dot_dimension_numbers<[1], [0], [0], [1], [0, 0, 1, 1], [], []>} : vector<256x4xf32>, vector<4x128xf32>, vector<256x128xf32> -> vector<256x128xf32>
    %58 = arith.addf %52, %57 : vector<256x128xf32>
    %59 = vector.broadcast %0 : vector<1x128xf32> to vector<256x128xf32>
    %60 = arith.mulf %58, %59 : vector<256x128xf32>
    %61 = vector.broadcast %1 : vector<1x128xf32> to vector<256x128xf32>
    %62 = arith.addf %60, %61 : vector<256x128xf32>
    %cst_35 = arith.constant 0.000000e+00 : f32
    %63 = vector.broadcast %cst_35 : f32 to vector<256x128xf32>
    %64 = arith.maximumf %62, %63 : vector<256x128xf32>
    %65 = vector.shape_cast %64 : vector<256x128xf32> to vector<16x16x128xf32>
    %c0_36 = arith.constant 0 : index
    %c0_37 = arith.constant 0 : index
    %c0_38 = arith.constant 0 : index
    %c0_39 = arith.constant 0 : index
    %66 = vector.load %arg5[%c0_36, %c0_37, %c0_38, %c0_39] : memref<1x16x16x128xf32, #tpu.memory_space<vmem>>, vector<1x16x16x128xf32>
    %67 = vector.shape_cast %66 : vector<1x16x16x128xf32> to vector<16x16x128xf32>
    %68 = vector.shape_cast %65 : vector<16x16x128xf32> to vector<1x16x16x128xf32>
    tpu.vector_store %arg5[%c0_36, %c0_37, %c0_38, %c0_39], %68 {strides = array<i32>} : memref<1x16x16x128xf32, #tpu.memory_space<vmem>>, vector<1x16x16x128xf32>,
    return
  }
  func.func @transform_0(%arg0: i32, %arg1: i32) -> (i32, i32, i32, i32) {
    %c0_i32 = arith.constant 0 : i32
    %c0_i32_0 = arith.constant 0 : i32
    %c0_i32_1 = arith.constant 0 : i32
    %c0_i32_2 = arith.constant 0 : i32
    return %arg1, %c0_i32, %c0_i32_0, %c0_i32_1 : i32, i32, i32, i32
  }
  func.func @transform_1(%arg0: i32, %arg1: i32) -> (i32, i32, i32) {
    %c0_i32 = arith.constant 0 : i32
    %c0_i32_0 = arith.constant 0 : i32
    %c0_i32_1 = arith.constant 0 : i32
    return %c0_i32, %c0_i32_0, %arg0 : i32, i32, i32
  }
  func.func @transform_2(%arg0: i32, %arg1: i32) -> (i32, i32) {
    %c0_i32 = arith.constant 0 : i32
    %c0_i32_0 = arith.constant 0 : i32
    return %c0_i32, %arg0 : i32, i32
  }
  func.func @transform_3(%arg0: i32, %arg1: i32) -> (i32, i32, i32, i32) {
    %c0_i32 = arith.constant 0 : i32
    %c0_i32_0 = arith.constant 0 : i32
    %c0_i32_1 = arith.constant 0 : i32
    return %arg1, %c0_i32, %c0_i32_0, %arg0 : i32, i32, i32, i32
  }
}

</mosaic_0001>

<llo_original>
// kernel: tpu_custom_call.1
$region0: #{tpu_custom_call.1}
  #allocation0 [shape = 'u32[]', space=smem, size = 0x4, offset = 0x4, fixed_abs, tag = 'smem constant byte address 0x4 - core index']
  #allocation1 [shape = 'u32[144,128]{1,0:T(1,128)}', space=vmem, size = 0x12000, scoped, tag = 'internal scratch']
  %s0 = inlined_call_operand.vmem [shape: f32[2,18,18,4], index: 0, kind: input, shape index: {}]
  %s1 = inlined_call_operand.vmem [shape: f32[9,4,128], index: 1, kind: input, shape index: {}]
  %s2 = inlined_call_operand.vmem [shape: f32[2,128], index: 2, kind: input, shape index: {}]
  %s3 = inlined_call_operand.hbm [shape: f32[2,16,16,128], index: 3, kind: output, shape index: {}]
  %s4 = sld [smem:[#allocation0]]
  $region45: #{tpu_custom_call.1} parent=0
    _
  %s6 = ssub.s32 1, %s4
  %s7 = scalar_select 0, %s6, %s4
  $region1: #{tpu_custom_call.1} parent=0
    #allocation2 [shape = 'u8[262144]{0}', space=vmem, size = 0x40000, scoped, tag = 'output window, operand 0']
    #allocation3 [shape = 's32[2]{0}', space=sflag, size = 0x8, scoped, tag = 'scoped memory for tpu_custom_call.1']
    %8 = vsyncpa [#allocation3], 0
    %s9 = scalar_lea.sflag [#allocation3], 1
    %10 = vsyncpa %s9, 0
    loop: start=0, step=1, limit=4
    $region2: #{tpu_custom_call.1} parent=1 // loop_pre_header
      _
    $region3: #{tpu_custom_call.1} parent=1 // loop_header
      %s12 = sphi 0, %s16
      %p13 = scmp.ge.s32.totalorder %s12, 4
      %s19 = sphi 0, %s31
      %s20 = sphi 0, %s27
      %s21 = sphi 0, %s19
      %s22 = sphi 0, %s20
      %s23 = sphi 0, %s21
      %s24 = sphi 0, %s22
      %s34 = sphi 0, %s36
      %s37 = sphi 0, %s34
      %s38 = sphi 0, %s37
      %s54 = sphi 0, %s38
      %s60 = sphi 0, %s62
      %s63 = sphi 0, %s60
      %s64 = sphi 0, %s63
      %s80 = sphi 0, %s64
      %s86 = sphi 0, %s88
      %s89 = sphi 0, %s86
      %s90 = sphi 0, %s89
      %s106 = sphi 0, %s90
      %s114 = sphi 0, %s116
      %s117 = sphi 0, %s114
      %s118 = sphi 0, %s117
      %s134 = sphi 0, %s118
    $region4: #{tpu_custom_call.1} parent=1 // loop_header_branch
      %15 = sbr.rel (%p13) target = $region8
    $region5: #{tpu_custom_call.1} parent=1 // loop_body
      %s17 = ssub.s32 %s12, 1
      %s18 = ssub.s32 %s12, 2
      %s25 = sadd.s32 1, %s20
      %p26 = scmp.ge.s32.totalorder %s25, 2
      %s27 = scalar_select %p26, 0, %s25
      %s28 = sadd.s32 1, %s19
      %s29 = scalar_select %p26, %s28, %s19
      %p30 = scmp.ge.s32.totalorder %s29, 1
      %s31 = scalar_select %p30, 0, %s29
      %s32 = ssub.s32 %s20, %s27
      %p33 = scmp.eq.s32.totalorder %s32, 0
      %s35 = sadd.s32 %s34, 1
      %s36 = scalar_select %p33, %s34, %s35
      %p39 = pneg %p33
      %p40 = scmp.eq.s32.totalorder %s12, 1
      %p41 = por %p39, %p40
      %p42 = scmp.ne.s32.totalorder %s34, %s37
      %p43 = scmp.eq.s32.totalorder %s12, 0
      %p44 = por %p42, %p43
      %p45 = scmp.ne.s32.totalorder %s34, %s37
      %p46 = scmp.eq.s32.totalorder %s17, 1
      %p47 = por %p45, %p46
      %p48 = scmp.ne.s32.totalorder %s37, %s38
      %p49 = scmp.eq.s32.totalorder %s17, 0
      %p50 = por %p48, %p49
      %p51 = scmp.ne.s32.totalorder %s37, %s38
      %p52 = scmp.eq.s32.totalorder %s18, 1
      %p53 = por %p51, %p52
      %p55 = scmp.ne.s32.totalorder %s38, %s54
      %p56 = scmp.eq.s32.totalorder %s18, 0
      %p57 = por %p55, %p56
      %s58 = ssub.s32 %s19, %s31
      %p59 = scmp.eq.s32.totalorder %s58, 0
      %s61 = sadd.s32 %s60, 1
      %s62 = scalar_select %p59, %s60, %s61
      %p65 = pneg %p59
      %p66 = scmp.eq.s32.totalorder %s12, 1
      %p67 = por %p65, %p66
      %p68 = scmp.ne.s32.totalorder %s60, %s63
      %p69 = scmp.eq.s32.totalorder %s12, 0
      %p70 = por %p68, %p69
      %p71 = scmp.ne.s32.totalorder %s60, %s63
      %p72 = scmp.eq.s32.totalorder %s17, 1
      %p73 = por %p71, %p72
      %p74 = scmp.ne.s32.totalorder %s63, %s64
      %p75 = scmp.eq.s32.totalorder %s17, 0
      %p76 = por %p74, %p75
      %p77 = scmp.ne.s32.totalorder %s63, %s64
      %p78 = scmp.eq.s32.totalorder %s18, 1
      %p79 = por %p77, %p78
      %p81 = scmp.ne.s32.totalorder %s64, %s80
      %p82 = scmp.eq.s32.totalorder %s18, 0
      %p83 = por %p81, %p82
      %s84 = ssub.s32 %s19, %s31
      %p85 = scmp.eq.s32.totalorder %s84, 0
      %s87 = sadd.s32 %s86, 1
      %s88 = scalar_select %p85, %s86, %s87
      %p91 = pneg %p85
      %p92 = scmp.eq.s32.totalorder %s12, 1
      %p93 = por %p91, %p92
      %p94 = scmp.ne.s32.totalorder %s86, %s89
      %p95 = scmp.eq.s32.totalorder %s12, 0
      %p96 = por %p94, %p95
      %p97 = scmp.ne.s32.totalorder %s86, %s89
      %p98 = scmp.eq.s32.totalorder %s17, 1
      %p99 = por %p97, %p98
      %p100 = scmp.ne.s32.totalorder %s89, %s90
      %p101 = scmp.eq.s32.totalorder %s17, 0
      %p102 = por %p100, %p101
      %p103 = scmp.ne.s32.totalorder %s89, %s90
      %p104 = scmp.eq.s32.totalorder %s18, 1
      %p105 = por %p103, %p104
      %p107 = scmp.ne.s32.totalorder %s90, %s106
      %p108 = scmp.eq.s32.totalorder %s18, 0
      %p109 = por %p107, %p108
      %s110 = ssub.s32 %s20, %s27
      %s111 = ssub.s32 %s19, %s31
      %s112 = sor.u32 %s110, %s111
      %p113 = scmp.eq.s32.totalorder %s112, 0
      %s115 = sadd.s32 %s114, 1
      %s116 = scalar_select %p113, %s114, %s115
      %p119 = pneg %p113
      %p120 = scmp.eq.s32.totalorder %s12, 1
      %p121 = por %p119, %p120
      %p122 = scmp.ne.s32.totalorder %s114, %s117
      %p123 = scmp.eq.s32.totalorder %s12, 0
      %p124 = por %p122, %p123
      %p125 = scmp.ne.s32.totalorder %s114, %s117
      %p126 = scmp.eq.s32.totalorder %s17, 1
      %p127 = por %p125, %p126
      %p128 = scmp.ne.s32.totalorder %s117, %s118
      %p129 = scmp.eq.s32.totalorder %s17, 0
      %p130 = por %p128, %p129
      %p131 = scmp.ne.s32.totalorder %s117, %s118
      %p132 = scmp.eq.s32.totalorder %s18, 1
      %p133 = por %p131, %p132
      %p135 = scmp.ne.s32.totalorder %s118, %s134
      %p136 = scmp.eq.s32.totalorder %s18, 0
      %p137 = por %p135, %p136
      %p138 = scmp.le.s32.totalorder 1, %s12
      %p139 = scmp.lt.s32.totalorder %s12, 3
      %p140 = pnand %p138, %p139
      %p141 = pneg %p140
      // Predicated region
      $region9: #{tpu_custom_call.1} parent=5 // pred_check
        _
      $region10: #{tpu_custom_call.1} parent=5 // pred_check_branch
        %143 = sbr.rel (%p140) target = $region12
      $region11: #{tpu_custom_call.1} parent=5 // pred_region
        %s144 = ssub.s32 %s12, 1
        // Predicated region
        $region13: #{tpu_custom_call.1} parent=11 // pred_check
          %p145 = pneg %p76
        $region14: #{tpu_custom_call.1} parent=11 // pred_check_branch
          %147 = sbr.rel (%p145) target = $region16
        $region15: #{tpu_custom_call.1} parent=11 // pred_region
          %p148 = scmp.lt.s32.totalorder %s21, 0
          %s149 = scalar_select %p148, %s21, 0
          %s150 = smul.addr %s149, 4
          %s151 = scalar_lea.vmem %s1, %s150
        $region16: #{tpu_custom_call.1} parent=11 // pred_fallthru
          _
        // Predicated region
        $region17: #{tpu_custom_call.1} parent=11 // pred_check
          %p152 = pneg %p102
        $region18: #{tpu_custom_call.1} parent=11 // pred_check_branch
          %154 = sbr.rel (%p152) target = $region20
        $region19: #{tpu_custom_call.1} parent=11 // pred_region
          %p155 = scmp.lt.s32.totalorder %s21, 0
          %s156 = scalar_select %p155, %s21, 0
          %s157 = smul.addr %s156, 2
          %s158 = scalar_lea.vmem %s2, %s157
        $region20: #{tpu_custom_call.1} parent=11 // pred_fallthru
          _
      $region12: #{tpu_custom_call.1} parent=5 // pred_fallthru
        _
      %p159 = scmp.lt.s32.totalorder %s12, 2
      // Predicated region
      $region21: #{tpu_custom_call.1} parent=5 // pred_check
        %p160 = pneg %p159
      $region22: #{tpu_custom_call.1} parent=5 // pred_check_branch
        %162 = sbr.rel (%p160) target = $region24
      $region23: #{tpu_custom_call.1} parent=5 // pred_region
        // Predicated region
        $region25: #{tpu_custom_call.1} parent=23 // pred_check
          %p163 = pneg %p44
        $region26: #{tpu_custom_call.1} parent=23 // pred_check_branch
          %165 = sbr.rel (%p163) target = $region28
        $region27: #{tpu_custom_call.1} parent=23 // pred_region
          %p166 = scmp.lt.s32.totalorder %s20, 1
          %s167 = scalar_select %p166, %s20, 1
          %s168 = smul.addr %s167, 54
          %s169 = smul.addr %s168, 8
          %s170 = scalar_lea.vmem %s0, %s169
        $region28: #{tpu_custom_call.1} parent=23 // pred_fallthru
          _
      $region24: #{tpu_custom_call.1} parent=5 // pred_fallthru
        _
      %p171 = scmp.le.s32.totalorder 1, %s12
      %p172 = scmp.lt.s32.totalorder %s12, 3
      %p173 = pnand %p171, %p172
      %p174 = pneg %p173
      // Predicated region
      $region29: #{tpu_custom_call.1} parent=5 // pred_check
        _
      $region30: #{tpu_custom_call.1} parent=5 // pred_check_branch
        %176 = sbr.rel (%p173) target = $region32
      $region31: #{tpu_custom_call.1} parent=5 // pred_region
        %s177 = ssub.s32 %s12, 1
        %p178 = scmp.lt.s32.totalorder %s22, 1
        %s179 = scalar_select %p178, %s22, 1
        %s180 = smul.addr %s179, 54
        %s181 = smul.addr %s180, 8
        %s182 = scalar_lea.vmem %s0, %s181
        %p183 = pneg %p50
        %p184 = pneg %p47
        %p185 = scmp.lt.s32.totalorder %s21, 0
        %s186 = scalar_select %p185, %s21, 0
        %s187 = smul.addr %s186, 4
        %s188 = scalar_lea.vmem %s1, %s187
        %p189 = pneg %p76
        %p190 = pneg %p73
        %p191 = scmp.lt.s32.totalorder %s21, 0
        %s192 = scalar_select %p191, %s21, 0
        %s193 = smul.addr %s192, 2
        %s194 = scalar_lea.vmem %s2, %s193
        %p195 = pneg %p102
        %p196 = pneg %p99
        %p197 = pneg %p130
        %p198 = pneg %p127
        %s199 = sand.u32 %s117, 1
        %s200 = scalar_lea.sflag [#allocation3], %s199
        %s201 = sand.u32 %s117, 1
        %s202 = smul.addr %s201, 256
        %s203 = scalar_lea.vmem [#allocation2], %s202
        %p204 = scmp.lt.s32.totalorder %s22, 1
        %s205 = scalar_select %p204, %s22, 1
        %s206 = smul.addr %s205, 54
        %s207 = smul.addr %s206, 8
        %s208 = scalar_lea.vmem %s0, %s207
        %p209 = scmp.lt.s32.totalorder %s21, 0
        %s210 = scalar_select %p209, %s21, 0
        %s211 = smul.addr %s210, 4
        %s212 = scalar_lea.vmem %s1, %s211
        %p213 = scmp.lt.s32.totalorder %s21, 0
        %s214 = scalar_select %p213, %s21, 0
        %s215 = smul.addr %s214, 2
        %s216 = scalar_lea.vmem %s2, %s215
        %v217 = vld [vmem:[%s216] sm:$0x1]
        %v218 = vld [vmem:[%s216 + $0x1] sm:$0x1]
        %v219 = vld [vmem:[%s208] sm:$0xff]
        %v220 = vld [vmem:[%s208 + $0x8] sm:$0xff]
        %v221 = vld [vmem:[%s208 + $0x10] sm:$0x3]
        %v222 = vld [vmem:[%s208 + $0x18] sm:$0xff]
        %v223 = vld [vmem:[%s208 + $0x20] sm:$0xff]
        %v224 = vld [vmem:[%s208 + $0x28] sm:$0x3]
        %v225 = vld [vmem:[%s208 + $0x30] sm:$0xff]
        %v226 = vld [vmem:[%s208 + $0x38] sm:$0xff]
        %v227 = vld [vmem:[%s208 + $0x40] sm:$0x3]
        %v228 = vld [vmem:[%s208 + $0x48] sm:$0xff]
        %v229 = vld [vmem:[%s208 + $0x50] sm:$0xff]
        %v230 = vld [vmem:[%s208 + $0x58] sm:$0x3]
        %v231 = vld [vmem:[%s208 + $0x60] sm:$0xff]
        %v232 = vld [vmem:[%s208 + $0x68] sm:$0xff]
        %v233 = vld [vmem:[%s208 + $0x70] sm:$0x3]
        %v234 = vld [vmem:[%s208 + $0x78] sm:$0xff]
        %v235 = vld [vmem:[%s208 + $0x80] sm:$0xff]
        %v236 = vld [vmem:[%s208 + $0x88] sm:$0x3]
        %v237 = vld [vmem:[%s208 + $0x90] sm:$0xff]
        %v238 = vld [vmem:[%s208 + $0x98] sm:$0xff]
        %v239 = vld [vmem:[%s208 + $0xa0] sm:$0x3]
        %v240 = vld [vmem:[%s208 + $0xa8] sm:$0xff]
        %v241 = vld [vmem:[%s208 + $0xb0] sm:$0xff]
        %v242 = vld [vmem:[%s208 + $0xb8] sm:$0x3]
        %v243 = vld [vmem:[%s208 + $0xc0] sm:$0xff]
        %v244 = vld [vmem:[%s208 + $0xc8] sm:$0xff]
        %v245 = vld [vmem:[%s208 + $0xd0] sm:$0x3]
        %v246 = vld [vmem:[%s208 + $0xd8] sm:$0xff]
        %v247 = vld [vmem:[%s208 + $0xe0] sm:$0xff]
        %v248 = vld [vmem:[%s208 + $0xe8] sm:$0x3]
        %v249 = vld [vmem:[%s208 + $0xf0] sm:$0xff]
        %v250 = vld [vmem:[%s208 + $0xf8] sm:$0xff]
        %v251 = vld [vmem:[%s208 + $0x100] sm:$0x3]
        %v252 = vld [vmem:[%s208 + $0x108] sm:$0xff]
        %v253 = vld [vmem:[%s208 + $0x110] sm:$0xff]
        %v254 = vld [vmem:[%s208 + $0x118] sm:$0x3]
        %v255 = vld [vmem:[%s208 + $0x120] sm:$0xff]
        %v256 = vld [vmem:[%s208 + $0x128] sm:$0xff]
        %v257 = vld [vmem:[%s208 + $0x130] sm:$0x3]
        %v258 = vld [vmem:[%s208 + $0x138] sm:$0xff]
        %v259 = vld [vmem:[%s208 + $0x140] sm:$0xff]
        %v260 = vld [vmem:[%s208 + $0x148] sm:$0x3]
        %v261 = vld [vmem:[%s208 + $0x150] sm:$0xff]
        %v262 = vld [vmem:[%s208 + $0x158] sm:$0xff]
        %v263 = vld [vmem:[%s208 + $0x160] sm:$0x3]
        %v264 = vld [vmem:[%s208 + $0x168] sm:$0xff]
        %v265 = vld [vmem:[%s208 + $0x170] sm:$0xff]
        %v266 = vld [vmem:[%s208 + $0x178] sm:$0x3]
        %v267 = vld [vmem:[%s208 + $0x180] sm:$0xff]
        %v268 = vld [vmem:[%s208 + $0x188] sm:$0xff]
        %v269 = vld [vmem:[%s208 + $0x190] sm:$0x3]
        %v270 = vld [vmem:[%s208 + $0x198] sm:$0xff]
        %v271 = vld [vmem:[%s208 + $0x1a0] sm:$0xff]
        %v272 = vld [vmem:[%s208 + $0x1a8] sm:$0x3]
        %v273 = vld [vmem:[%s212] sm:$0xf]
        %vm322 = vcmask 1046528
        %v323 = vrot.slane %v219, 1
        %v324 = vrot.slane %v220, 1
        %v325 = vsel %vm322, %v323, %v324
        %v326 = vrot.slane %v221, 1
        %v327 = vsel %vm322, %v324, %v326
        %v328 = vrot.slane %v222, 1
        %v329 = vrot.slane %v223, 1
        %v330 = vsel %vm322, %v328, %v329
        %v331 = vrot.slane %v224, 1
        %v332 = vsel %vm322, %v329, %v331
        %v333 = vrot.slane %v225, 1
        %v334 = vrot.slane %v226, 1
        %v335 = vsel %vm322, %v333, %v334
        %v336 = vrot.slane %v227, 1
        %v337 = vsel %vm322, %v334, %v336
        %v338 = vrot.slane %v228, 1
        %v339 = vrot.slane %v229, 1
        %v340 = vsel %vm322, %v338, %v339
        %v341 = vrot.slane %v230, 1
        %v342 = vsel %vm322, %v339, %v341
        %v343 = vrot.slane %v231, 1
        %v344 = vrot.slane %v232, 1
        %v345 = vsel %vm322, %v343, %v344
        %v346 = vrot.slane %v233, 1
        %v347 = vsel %vm322, %v344, %v346
        %v348 = vrot.slane %v234, 1
        %v349 = vrot.slane %v235, 1
        %v350 = vsel %vm322, %v348, %v349
        %v351 = vrot.slane %v236, 1
        %v352 = vsel %vm322, %v349, %v351
        %v353 = vrot.slane %v237, 1
        %v354 = vrot.slane %v238, 1
        %v355 = vsel %vm322, %v353, %v354
        %v356 = vrot.slane %v239, 1
        %v357 = vsel %vm322, %v354, %v356
        %v358 = vrot.slane %v240, 1
        %v359 = vrot.slane %v241, 1
        %v360 = vsel %vm322, %v358, %v359
        %v361 = vrot.slane %v242, 1
        %v362 = vsel %vm322, %v359, %v361
        %v363 = vrot.slane %v243, 1
        %v364 = vrot.slane %v244, 1
        %v365 = vsel %vm322, %v363, %v364
        %v366 = vrot.slane %v245, 1
        %v367 = vsel %vm322, %v364, %v366
        %v368 = vrot.slane %v246, 1
        %v369 = vrot.slane %v247, 1
        %v370 = vsel %vm322, %v368, %v369
        %v371 = vrot.slane %v248, 1
        %v372 = vsel %vm322, %v369, %v371
        %v373 = vrot.slane %v249, 1
        %v374 = vrot.slane %v250, 1
        %v375 = vsel %vm322, %v373, %v374
        %v376 = vrot.slane %v251, 1
        %v377 = vsel %vm322, %v374, %v376
        %v378 = vrot.slane %v252, 1
        %v379 = vrot.slane %v253, 1
        %v380 = vsel %vm322, %v378, %v379
        %v381 = vrot.slane %v254, 1
        %v382 = vsel %vm322, %v379, %v381
        %v383 = vrot.slane %v255, 1
        %v384 = vrot.slane %v256, 1
        %v385 = vsel %vm322, %v383, %v384
        %v386 = vrot.slane %v257, 1
        %v387 = vsel %vm322, %v384, %v386
        %v388 = vrot.slane %v258, 1
        %v389 = vrot.slane %v259, 1
        %v390 = vsel %vm322, %v388, %v389
        %v391 = vrot.slane %v260, 1
        %v392 = vsel %vm322, %v389, %v391
        %v393 = vrot.slane %v261, 1
        %v394 = vrot.slane %v262, 1
        %v395 = vsel %vm322, %v393, %v394
        %v396 = vrot.slane %v263, 1
        %v397 = vsel %vm322, %v394, %v396
        %v398 = vrot.slane %v264, 1
        %v399 = vrot.slane %v265, 1
        %v400 = vsel %vm322, %v398, %v399
        %v401 = vrot.slane %v266, 1
        %v402 = vsel %vm322, %v399, %v401
        %s403 = scalar_lea.vmem %s212, 4
        %v404 = vld [vmem:[%s403] sm:$0xf]
        %vm405 = vcmask 31744
        %v406 = vsel %vm405, %v325, 0
        %v408 = vsel %vm405, %v327, 0
        %v410 = vsel %vm405, %v330, 0
        %v412 = vsel %vm405, %v332, 0
        %v414 = vsel %vm405, %v335, 0
        %v416 = vsel %vm405, %v337, 0
        %v418 = vsel %vm405, %v340, 0
        %v420 = vsel %vm405, %v342, 0
        %v422 = vsel %vm405, %v345, 0
        %v424 = vsel %vm405, %v347, 0
        %v426 = vsel %vm405, %v350, 0
        %v428 = vsel %vm405, %v352, 0
        %v430 = vsel %vm405, %v355, 0
        %v432 = vsel %vm405, %v357, 0
        %v434 = vsel %vm405, %v360, 0
        %v436 = vsel %vm405, %v362, 0
        %v438 = vsel %vm405, %v365, 0
        %v440 = vsel %vm405, %v367, 0
        %v442 = vsel %vm405, %v370, 0
        %v444 = vsel %vm405, %v372, 0
        %v446 = vsel %vm405, %v375, 0
        %v448 = vsel %vm405, %v377, 0
        %v450 = vsel %vm405, %v380, 0
        %v452 = vsel %vm405, %v382, 0
        %v454 = vsel %vm405, %v385, 0
        %v456 = vsel %vm405, %v387, 0
        %v458 = vsel %vm405, %v390, 0
        %v460 = vsel %vm405, %v392, 0
        %v462 = vsel %vm405, %v395, 0
        %v464 = vsel %vm405, %v397, 0
        %v466 = vsel %vm405, %v400, 0
        %v468 = vsel %vm405, %v402, 0
        %vm470 = vcmask 1043456
        %v472 = vsel %vm470, %v404, 0
        %474 = vmatprep.subr.mxu0 0.0
        %475 = vmatpush1.msra.mxu0 0.0
        %476 = vmatprep.subr.mxu0 0.0
        %477 = vmatpush1.msra.mxu0 0.0
        %478 = vmatprep.subr.mxu0 0.0
        %479 = vmatpush1.msra.mxu0 0.0
        %480 = vmatprep.subr.mxu0 0.0
        %481 = vmatpush1.msra.mxu0 0.0
        %482 = vmatprep.subr.mxu0 0.0
        %483 = vmatpush1.msra.mxu0 0.0
        %484 = vmatprep.subr.mxu0 0.0
        %485 = vmatpush1.msra.mxu0 0.0
        %486 = vmatprep.subr.mxu0 0.0
        %487 = vmatpush1.msra.mxu0 0.0
        %488 = vmatprep.subr.mxu0 0.0
        %489 = vmatpush1.msra.mxu0 0.0
        %490 = vmatprep.subr.mxu0 0.0
        %491 = vmatpush1.msra.mxu0 0.0
        %492 = vmatprep.subr.mxu0 0.0
        %493 = vmatpush1.msra.mxu0 0.0
        %494 = vmatprep.subr.mxu0 0.0
        %495 = vmatpush1.msra.mxu0 0.0
        %496 = vmatprep.subr.mxu0 0.0
        %497 = vmatpush1.msra.mxu0 0.0
        %498 = vmatprep.subr.mxu0 0.0
        %499 = vmatpush1.msra.mxu0 0.0
        %500 = vmatprep.subr.mxu0 0.0
        %501 = vmatpush1.msra.mxu0 0.0
        %502 = vmatprep.subr.mxu0 0.0
        %503 = vmatpush1.msra.mxu0 0.0
        %504 = vmatprep.subr.mxu0 0.0
        %505 = vmatpush1.msra.mxu0 %v472
        %506 = vmatprep.subr.mxu0 0.0
        %507 = vmatpush2.msra.mxu0 0.0
        %508 = vmatprep.subr.mxu0 0.0
        %509 = vmatpush2.msra.mxu0 0.0
        %510 = vmatprep.subr.mxu0 0.0
        %511 = vmatpush2.msra.mxu0 0.0
        %512 = vmatprep.subr.mxu0 0.0
        %513 = vmatpush2.msra.mxu0 0.0
        %514 = vmatprep.subr.mxu0 0.0
        %515 = vmatpush2.msra.mxu0 0.0
        %516 = vmatprep.subr.mxu0 0.0
        %517 = vmatpush2.msra.mxu0 0.0
        %518 = vmatprep.subr.mxu0 0.0
        %519 = vmatpush2.msra.mxu0 0.0
        %520 = vmatprep.subr.mxu0 0.0
        %521 = vmatpush2.msra.mxu0 0.0
        %522 = vmatprep.subr.mxu0 0.0
        %523 = vmatpush2.msra.mxu0 0.0
        %524 = vmatprep.subr.mxu0 0.0
        %525 = vmatpush2.msra.mxu0 0.0
        %526 = vmatprep.subr.mxu0 0.0
        %527 = vmatpush2.msra.mxu0 0.0
        %528 = vmatprep.subr.mxu0 0.0
        %529 = vmatpush2.msra.mxu0 0.0
        %530 = vmatprep.subr.mxu0 0.0
        %531 = vmatpush2.msra.mxu0 0.0
        %532 = vmatprep.subr.mxu0 0.0
        %533 = vmatpush2.msra.mxu0 0.0
        %534 = vmatprep.subr.mxu0 0.0
        %535 = vmatpush2.msra.mxu0 0.0
        %536 = vmatprep.subr.mxu0 0.0
        %537 = vmatpush2.msra.mxu0 0.0
        %538 = vmatprep.mubr.f32.mxu0 0.0
        %539 = vmatmul.mubr.f32.gmra.mxu0 %v406
        %v540 = vpop.f32.mrf.mxu0
        %v541 = vadd.f32 0.0, %v540
        %v542 = vpop.f32.mrf.mxu0
        %543 = vmatprep.mubr.f32.mxu0 0.0
        %544 = vmatmul.mubr.f32.gmra.mxu0 %v408
        %v545 = vpop.f32.mrf.mxu0
        %v546 = vadd.f32 0.0, %v545
        %v547 = vpop.f32.mrf.mxu0
        %548 = vmatprep.mubr.f32.mxu0 0.0
        %549 = vmatmul.mubr.f32.gmra.mxu0 %v410
        %v550 = vpop.f32.mrf.mxu0
        %v551 = vadd.f32 0.0, %v550
        %v552 = vpop.f32.mrf.mxu0
        %553 = vmatprep.mubr.f32.mxu0 0.0
        %554 = vmatmul.mubr.f32.gmra.mxu0 %v412
        %v555 = vpop.f32.mrf.mxu0
        %v556 = vadd.f32 0.0, %v555
        %v557 = vpop.f32.mrf.mxu0
        %558 = vmatprep.mubr.f32.mxu0 0.0
        %559 = vmatmul.mubr.f32.gmra.mxu0 %v414
        %v560 = vpop.f32.mrf.mxu0
        %v561 = vadd.f32 0.0, %v560
        %v562 = vpop.f32.mrf.mxu0
        %563 = vmatprep.mubr.f32.mxu0 0.0
        %564 = vmatmul.mubr.f32.gmra.mxu0 %v416
        %v565 = vpop.f32.mrf.mxu0
        %v566 = vadd.f32 0.0, %v565
        %v567 = vpop.f32.mrf.mxu0
        %568 = vmatprep.mubr.f32.mxu0 0.0
        %569 = vmatmul.mubr.f32.gmra.mxu0 %v418
        %v570 = vpop.f32.mrf.mxu0
        %v571 = vadd.f32 0.0, %v570
        %v572 = vpop.f32.mrf.mxu0
        %573 = vmatprep.mubr.f32.mxu0 0.0
        %574 = vmatmul.mubr.f32.gmra.mxu0 %v420
        %v575 = vpop.f32.mrf.mxu0
        %v576 = vadd.f32 0.0, %v575
        %v577 = vpop.f32.mrf.mxu0
        %578 = vmatprep.mubr.f32.mxu0 0.0
        %579 = vmatmul.mubr.f32.gmra.mxu0 %v422
        %v580 = vpop.f32.mrf.mxu0
        %v581 = vadd.f32 0.0, %v580
        %v582 = vpop.f32.mrf.mxu0
        %583 = vmatprep.mubr.f32.mxu0 0.0
        %584 = vmatmul.mubr.f32.gmra.mxu0 %v424
        %v585 = vpop.f32.mrf.mxu0
        %v586 = vadd.f32 0.0, %v585
        %v587 = vpop.f32.mrf.mxu0
        %588 = vmatprep.mubr.f32.mxu0 0.0
        %589 = vmatmul.mubr.f32.gmra.mxu0 %v426
        %v590 = vpop.f32.mrf.mxu0
        %v591 = vadd.f32 0.0, %v590
        %v592 = vpop.f32.mrf.mxu0
        %593 = vmatprep.mubr.f32.mxu0 0.0
        %594 = vmatmul.mubr.f32.gmra.mxu0 %v428
        %v595 = vpop.f32.mrf.mxu0
        %v596 = vadd.f32 0.0, %v595
        %v597 = vpop.f32.mrf.mxu0
        %598 = vmatprep.mubr.f32.mxu0 0.0
        %599 = vmatmul.mubr.f32.gmra.mxu0 %v430
        %v600 = vpop.f32.mrf.mxu0
        %v601 = vadd.f32 0.0, %v600
        %v602 = vpop.f32.mrf.mxu0
        %603 = vmatprep.mubr.f32.mxu0 0.0
        %604 = vmatmul.mubr.f32.gmra.mxu0 %v432
        %v605 = vpop.f32.mrf.mxu0
        %v606 = vadd.f32 0.0, %v605
        %v607 = vpop.f32.mrf.mxu0
        %608 = vmatprep.mubr.f32.mxu0 0.0
        %609 = vmatmul.mubr.f32.gmra.mxu0 %v434
        %v610 = vpop.f32.mrf.mxu0
        %v611 = vadd.f32 0.0, %v610
        %v612 = vpop.f32.mrf.mxu0
        %613 = vmatprep.mubr.f32.mxu0 0.0
        %614 = vmatmul.mubr.f32.gmra.mxu0 %v436
        %v615 = vpop.f32.mrf.mxu0
        %v616 = vadd.f32 0.0, %v615
        %v617 = vpop.f32.mrf.mxu0
        %618 = vmatprep.mubr.f32.mxu0 0.0
        %619 = vmatmul.mubr.f32.gmra.mxu0 %v438
        %v620 = vpop.f32.mrf.mxu0
        %v621 = vadd.f32 0.0, %v620
        %v622 = vpop.f32.mrf.mxu0
        %623 = vmatprep.mubr.f32.mxu0 0.0
        %624 = vmatmul.mubr.f32.gmra.mxu0 %v440
        %v625 = vpop.f32.mrf.mxu0
        %v626 = vadd.f32 0.0, %v625
        %v627 = vpop.f32.mrf.mxu0
        %628 = vmatprep.mubr.f32.mxu0 0.0
        %629 = vmatmul.mubr.f32.gmra.mxu0 %v442
        %v630 = vpop.f32.mrf.mxu0
        %v631 = vadd.f32 0.0, %v630
        %v632 = vpop.f32.mrf.mxu0
        %633 = vmatprep.mubr.f32.mxu0 0.0
        %634 = vmatmul.mubr.f32.gmra.mxu0 %v444
        %v635 = vpop.f32.mrf.mxu0
        %v636 = vadd.f32 0.0, %v635
        %v637 = vpop.f32.mrf.mxu0
        %638 = vmatprep.mubr.f32.mxu0 0.0
        %639 = vmatmul.mubr.f32.gmra.mxu0 %v446
        %v640 = vpop.f32.mrf.mxu0
        %v641 = vadd.f32 0.0, %v640
        %v642 = vpop.f32.mrf.mxu0
        %643 = vmatprep.mubr.f32.mxu0 0.0
        %644 = vmatmul.mubr.f32.gmra.mxu0 %v448
        %v645 = vpop.f32.mrf.mxu0
        %v646 = vadd.f32 0.0, %v645
        %v647 = vpop.f32.mrf.mxu0
        %648 = vmatprep.mubr.f32.mxu0 0.0
        %649 = vmatmul.mubr.f32.gmra.mxu0 %v450
        %v650 = vpop.f32.mrf.mxu0
        %v651 = vadd.f32 0.0, %v650
        %v652 = vpop.f32.mrf.mxu0
        %653 = vmatprep.mubr.f32.mxu0 0.0
        %654 = vmatmul.mubr.f32.gmra.mxu0 %v452
        %v655 = vpop.f32.mrf.mxu0
        %v656 = vadd.f32 0.0, %v655
        %v657 = vpop.f32.mrf.mxu0
        %658 = vmatprep.mubr.f32.mxu0 0.0
        %659 = vmatmul.mubr.f32.gmra.mxu0 %v454
        %v660 = vpop.f32.mrf.mxu0
        %v661 = vadd.f32 0.0, %v660
        %v662 = vpop.f32.mrf.mxu0
        %663 = vmatprep.mubr.f32.mxu0 0.0
        %664 = vmatmul.mubr.f32.gmra.mxu0 %v456
        %v665 = vpop.f32.mrf.mxu0
        %v666 = vadd.f32 0.0, %v665
        %v667 = vpop.f32.mrf.mxu0
        %668 = vmatprep.mubr.f32.mxu0 0.0
        %669 = vmatmul.mubr.f32.gmra.mxu0 %v458
        %v670 = vpop.f32.mrf.mxu0
        %v671 = vadd.f32 0.0, %v670
        %v672 = vpop.f32.mrf.mxu0
        %673 = vmatprep.mubr.f32.mxu0 0.0
        %674 = vmatmul.mubr.f32.gmra.mxu0 %v460
        %v675 = vpop.f32.mrf.mxu0
        %v676 = vadd.f32 0.0, %v675
        %v677 = vpop.f32.mrf.mxu0
        %678 = vmatprep.mubr.f32.mxu0 0.0
        %679 = vmatmul.mubr.f32.gmra.mxu0 %v462
        %v680 = vpop.f32.mrf.mxu0
        %v681 = vadd.f32 0.0, %v680
        %v682 = vpop.f32.mrf.mxu0
        %683 = vmatprep.mubr.f32.mxu0 0.0
        %684 = vmatmul.mubr.f32.gmra.mxu0 %v464
        %v685 = vpop.f32.mrf.mxu0
        %v686 = vadd.f32 0.0, %v685
        %v687 = vpop.f32.mrf.mxu0
        %688 = vmatprep.mubr.f32.mxu0 0.0
        %689 = vmatmul.mubr.f32.gmra.mxu0 %v466
        %v690 = vpop.f32.mrf.mxu0
        %v691 = vadd.f32 0.0, %v690
        %v692 = vpop.f32.mrf.mxu0
        %693 = vmatprep.mubr.f32.mxu0 0.0
        %694 = vmatmul.mubr.f32.gmra.mxu0 %v468
        %v695 = vpop.f32.mrf.mxu0
        %v696 = vadd.f32 0.0, %v695
        %v697 = vpop.f32.mrf.mxu0
        %698 = vdwg.mxu0
        %v699 = vsel %vm405, %v219, 0
        %v701 = vsel %vm405, %v220, 0
        %v703 = vsel %vm405, %v222, 0
        %v705 = vsel %vm405, %v223, 0
        %v707 = vsel %vm405, %v225, 0
        %v709 = vsel %vm405, %v226, 0
        %v711 = vsel %vm405, %v228, 0
        %v713 = vsel %vm405, %v229, 0
        %v715 = vsel %vm405, %v231, 0
        %v717 = vsel %vm405, %v232, 0
        %v719 = vsel %vm405, %v234, 0
        %v721 = vsel %vm405, %v235, 0
        %v723 = vsel %vm405, %v237, 0
        %v725 = vsel %vm405, %v238, 0
        %v727 = vsel %vm405, %v240, 0
        %v729 = vsel %vm405, %v241, 0
        %v731 = vsel %vm405, %v243, 0
        %v733 = vsel %vm405, %v244, 0
        %v735 = vsel %vm405, %v246, 0
        %v737 = vsel %vm405, %v247, 0
        %v739 = vsel %vm405, %v249, 0
        %v741 = vsel %vm405, %v250, 0
        %v743 = vsel %vm405, %v252, 0
        %v745 = vsel %vm405, %v253, 0
        %v747 = vsel %vm405, %v255, 0
        %v749 = vsel %vm405, %v256, 0
        %v751 = vsel %vm405, %v258, 0
        %v753 = vsel %vm405, %v259, 0
        %v755 = vsel %vm405, %v261, 0
        %v757 = vsel %vm405, %v262, 0
        %v759 = vsel %vm405, %v264, 0
        %v761 = vsel %vm405, %v265, 0
        %v764 = vsel %vm470, %v273, 0
        %766 = vmatprep.subr.mxu0 0.0
        %767 = vmatpush1.msra.mxu0 0.0
        %768 = vmatprep.subr.mxu0 0.0
        %769 = vmatpush1.msra.mxu0 0.0
        %770 = vmatprep.subr.mxu0 0.0
        %771 = vmatpush1.msra.mxu0 0.0
        %772 = vmatprep.subr.mxu0 0.0
        %773 = vmatpush1.msra.mxu0 0.0
        %774 = vmatprep.subr.mxu0 0.0
        %775 = vmatpush1.msra.mxu0 0.0
        %776 = vmatprep.subr.mxu0 0.0
        %777 = vmatpush1.msra.mxu0 0.0
        %778 = vmatprep.subr.mxu0 0.0
        %779 = vmatpush1.msra.mxu0 0.0
        %780 = vmatprep.subr.mxu0 0.0
        %781 = vmatpush1.msra.mxu0 0.0
        %782 = vmatprep.subr.mxu0 0.0
        %783 = vmatpush1.msra.mxu0 0.0
        %784 = vmatprep.subr.mxu0 0.0
        %785 = vmatpush1.msra.mxu0 0.0
        %786 = vmatprep.subr.mxu0 0.0
        %787 = vmatpush1.msra.mxu0 0.0
        %788 = vmatprep.subr.mxu0 0.0
        %789 = vmatpush1.msra.mxu0 0.0
        %790 = vmatprep.subr.mxu0 0.0
        %791 = vmatpush1.msra.mxu0 0.0
        %792 = vmatprep.subr.mxu0 0.0
        %793 = vmatpush1.msra.mxu0 0.0
        %794 = vmatprep.subr.mxu0 0.0
        %795 = vmatpush1.msra.mxu0 0.0
        %796 = vmatprep.subr.mxu0 0.0
        %797 = vmatpush1.msra.mxu0 %v764
        %798 = vmatprep.subr.mxu0 0.0
        %799 = vmatpush2.msra.mxu0 0.0
        %800 = vmatprep.subr.mxu0 0.0
        %801 = vmatpush2.msra.mxu0 0.0
        %802 = vmatprep.subr.mxu0 0.0
        %803 = vmatpush2.msra.mxu0 0.0
        %804 = vmatprep.subr.mxu0 0.0
        %805 = vmatpush2.msra.mxu0 0.0
        %806 = vmatprep.subr.mxu0 0.0
        %807 = vmatpush2.msra.mxu0 0.0
        %808 = vmatprep.subr.mxu0 0.0
        %809 = vmatpush2.msra.mxu0 0.0
        %810 = vmatprep.subr.mxu0 0.0
        %811 = vmatpush2.msra.mxu0 0.0
        %812 = vmatprep.subr.mxu0 0.0
        %813 = vmatpush2.msra.mxu0 0.0
        %814 = vmatprep.subr.mxu0 0.0
        %815 = vmatpush2.msra.mxu0 0.0
        %816 = vmatprep.subr.mxu0 0.0
        %817 = vmatpush2.msra.mxu0 0.0
        %818 = vmatprep.subr.mxu0 0.0
        %819 = vmatpush2.msra.mxu0 0.0
        %820 = vmatprep.subr.mxu0 0.0
        %821 = vmatpush2.msra.mxu0 0.0
        %822 = vmatprep.subr.mxu0 0.0
        %823 = vmatpush2.msra.mxu0 0.0
        %824 = vmatprep.subr.mxu0 0.0
        %825 = vmatpush2.msra.mxu0 0.0
        %826 = vmatprep.subr.mxu0 0.0
        %827 = vmatpush2.msra.mxu0 0.0
        %828 = vmatprep.subr.mxu0 0.0
        %829 = vmatpush2.msra.mxu0 0.0
        %830 = vmatprep.mubr.f32.mxu0 0.0
        %831 = vmatmul.mubr.f32.gmra.mxu0 %v699
        %v832 = vpop.f32.mrf.mxu0
        %v833 = vadd.f32 %v541, %v832
        %v834 = vpop.f32.mrf.mxu0
        %835 = vmatprep.mubr.f32.mxu0 0.0
        %836 = vmatmul.mubr.f32.gmra.mxu0 %v701
        %v837 = vpop.f32.mrf.mxu0
        %v838 = vadd.f32 %v546, %v837
        %v839 = vpop.f32.mrf.mxu0
        %840 = vmatprep.mubr.f32.mxu0 0.0
        %841 = vmatmul.mubr.f32.gmra.mxu0 %v703
        %v842 = vpop.f32.mrf.mxu0
        %v843 = vadd.f32 %v551, %v842
        %v844 = vpop.f32.mrf.mxu0
        %845 = vmatprep.mubr.f32.mxu0 0.0
        %846 = vmatmul.mubr.f32.gmra.mxu0 %v705
        %v847 = vpop.f32.mrf.mxu0
        %v848 = vadd.f32 %v556, %v847
        %v849 = vpop.f32.mrf.mxu0
        %850 = vmatprep.mubr.f32.mxu0 0.0
        %851 = vmatmul.mubr.f32.gmra.mxu0 %v707
        %v852 = vpop.f32.mrf.mxu0
        %v853 = vadd.f32 %v561, %v852
        %v854 = vpop.f32.mrf.mxu0
        %855 = vmatprep.mubr.f32.mxu0 0.0
        %856 = vmatmul.mubr.f32.gmra.mxu0 %v709
        %v857 = vpop.f32.mrf.mxu0
        %v858 = vadd.f32 %v566, %v857
        %v859 = vpop.f32.mrf.mxu0
        %860 = vmatprep.mubr.f32.mxu0 0.0
        %861 = vmatmul.mubr.f32.gmra.mxu0 %v711
        %v862 = vpop.f32.mrf.mxu0
        %v863 = vadd.f32 %v571, %v862
        %v864 = vpop.f32.mrf.mxu0
        %865 = vmatprep.mubr.f32.mxu0 0.0
        %866 = vmatmul.mubr.f32.gmra.mxu0 %v713
        %v867 = vpop.f32.mrf.mxu0
        %v868 = vadd.f32 %v576, %v867
        %v869 = vpop.f32.mrf.mxu0
        %870 = vmatprep.mubr.f32.mxu0 0.0
        %871 = vmatmul.mubr.f32.gmra.mxu0 %v715
        %v872 = vpop.f32.mrf.mxu0
        %v873 = vadd.f32 %v581, %v872
        %v874 = vpop.f32.mrf.mxu0
        %875 = vmatprep.mubr.f32.mxu0 0.0
        %876 = vmatmul.mubr.f32.gmra.mxu0 %v717
        %v877 = vpop.f32.mrf.mxu0
        %v878 = vadd.f32 %v586, %v877
        %v879 = vpop.f32.mrf.mxu0
        %880 = vmatprep.mubr.f32.mxu0 0.0
        %881 = vmatmul.mubr.f32.gmra.mxu0 %v719
        %v882 = vpop.f32.mrf.mxu0
        %v883 = vadd.f32 %v591, %v882
        %v884 = vpop.f32.mrf.mxu0
        %885 = vmatprep.mubr.f32.mxu0 0.0
        %886 = vmatmul.mubr.f32.gmra.mxu0 %v721
        %v887 = vpop.f32.mrf.mxu0
        %v888 = vadd.f32 %v596, %v887
        %v889 = vpop.f32.mrf.mxu0
        %890 = vmatprep.mubr.f32.mxu0 0.0
        %891 = vmatmul.mubr.f32.gmra.mxu0 %v723
        %v892 = vpop.f32.mrf.mxu0
        %v893 = vadd.f32 %v601, %v892
        %v894 = vpop.f32.mrf.mxu0
        %895 = vmatprep.mubr.f32.mxu0 0.0
        %896 = vmatmul.mubr.f32.gmra.mxu0 %v725
        %v897 = vpop.f32.mrf.mxu0
        %v898 = vadd.f32 %v606, %v897
        %v899 = vpop.f32.mrf.mxu0
        %900 = vmatprep.mubr.f32.mxu0 0.0
        %901 = vmatmul.mubr.f32.gmra.mxu0 %v727
        %v902 = vpop.f32.mrf.mxu0
        %v903 = vadd.f32 %v611, %v902
        %v904 = vpop.f32.mrf.mxu0
        %905 = vmatprep.mubr.f32.mxu0 0.0
        %906 = vmatmul.mubr.f32.gmra.mxu0 %v729
        %v907 = vpop.f32.mrf.mxu0
        %v908 = vadd.f32 %v616, %v907
        %v909 = vpop.f32.mrf.mxu0
        %910 = vmatprep.mubr.f32.mxu0 0.0
        %911 = vmatmul.mubr.f32.gmra.mxu0 %v731
        %v912 = vpop.f32.mrf.mxu0
        %v913 = vadd.f32 %v621, %v912
        %v914 = vpop.f32.mrf.mxu0
        %915 = vmatprep.mubr.f32.mxu0 0.0
        %916 = vmatmul.mubr.f32.gmra.mxu0 %v733
        %v917 = vpop.f32.mrf.mxu0
        %v918 = vadd.f32 %v626, %v917
        %v919 = vpop.f32.mrf.mxu0
        %920 = vmatprep.mubr.f32.mxu0 0.0
        %921 = vmatmul.mubr.f32.gmra.mxu0 %v735
        %v922 = vpop.f32.mrf.mxu0
        %v923 = vadd.f32 %v631, %v922
        %v924 = vpop.f32.mrf.mxu0
        %925 = vmatprep.mubr.f32.mxu0 0.0
        %926 = vmatmul.mubr.f32.gmra.mxu0 %v737
        %v927 = vpop.f32.mrf.mxu0
        %v928 = vadd.f32 %v636, %v927
        %v929 = vpop.f32.mrf.mxu0
        %930 = vmatprep.mubr.f32.mxu0 0.0
        %931 = vmatmul.mubr.f32.gmra.mxu0 %v739
        %v932 = vpop.f32.mrf.mxu0
        %v933 = vadd.f32 %v641, %v932
        %v934 = vpop.f32.mrf.mxu0
        %935 = vmatprep.mubr.f32.mxu0 0.0
        %936 = vmatmul.mubr.f32.gmra.mxu0 %v741
        %v937 = vpop.f32.mrf.mxu0
        %v938 = vadd.f32 %v646, %v937
        %v939 = vpop.f32.mrf.mxu0
        %940 = vmatprep.mubr.f32.mxu0 0.0
        %941 = vmatmul.mubr.f32.gmra.mxu0 %v743
        %v942 = vpop.f32.mrf.mxu0
        %v943 = vadd.f32 %v651, %v942
        %v944 = vpop.f32.mrf.mxu0
        %945 = vmatprep.mubr.f32.mxu0 0.0
        %946 = vmatmul.mubr.f32.gmra.mxu0 %v745
        %v947 = vpop.f32.mrf.mxu0
        %v948 = vadd.f32 %v656, %v947
        %v949 = vpop.f32.mrf.mxu0
        %950 = vmatprep.mubr.f32.mxu0 0.0
        %951 = vmatmul.mubr.f32.gmra.mxu0 %v747
        %v952 = vpop.f32.mrf.mxu0
        %v953 = vadd.f32 %v661, %v952
        %v954 = vpop.f32.mrf.mxu0
        %955 = vmatprep.mubr.f32.mxu0 0.0
        %956 = vmatmul.mubr.f32.gmra.mxu0 %v749
        %v957 = vpop.f32.mrf.mxu0
        %v958 = vadd.f32 %v666, %v957
        %v959 = vpop.f32.mrf.mxu0
        %960 = vmatprep.mubr.f32.mxu0 0.0
        %961 = vmatmul.mubr.f32.gmra.mxu0 %v751
        %v962 = vpop.f32.mrf.mxu0
        %v963 = vadd.f32 %v671, %v962
        %v964 = vpop.f32.mrf.mxu0
        %965 = vmatprep.mubr.f32.mxu0 0.0
        %966 = vmatmul.mubr.f32.gmra.mxu0 %v753
        %v967 = vpop.f32.mrf.mxu0
        %v968 = vadd.f32 %v676, %v967
        %v969 = vpop.f32.mrf.mxu0
        %970 = vmatprep.mubr.f32.mxu0 0.0
        %971 = vmatmul.mubr.f32.gmra.mxu0 %v755
        %v972 = vpop.f32.mrf.mxu0
        %v973 = vadd.f32 %v681, %v972
        %v974 = vpop.f32.mrf.mxu0
        %975 = vmatprep.mubr.f32.mxu0 0.0
        %976 = vmatmul.mubr.f32.gmra.mxu0 %v757
        %v977 = vpop.f32.mrf.mxu0
        %v978 = vadd.f32 %v686, %v977
        %v979 = vpop.f32.mrf.mxu0
        %980 = vmatprep.mubr.f32.mxu0 0.0
        %981 = vmatmul.mubr.f32.gmra.mxu0 %v759
        %v982 = vpop.f32.mrf.mxu0
        %v983 = vadd.f32 %v691, %v982
        %v984 = vpop.f32.mrf.mxu0
        %985 = vmatprep.mubr.f32.mxu0 0.0
        %986 = vmatmul.mubr.f32.gmra.mxu0 %v761
        %v987 = vpop.f32.mrf.mxu0
        %v988 = vadd.f32 %v696, %v987
        %v989 = vpop.f32.mrf.mxu0
        %990 = vdwg.mxu0
        %vm991 = vcmask 1045504
        %v992 = vrot.slane %v219, 2
        %v993 = vrot.slane %v220, 2
        %v994 = vsel %vm991, %v992, %v993
        %v995 = vrot.slane %v221, 2
        %v996 = vsel %vm991, %v993, %v995
        %v997 = vrot.slane %v222, 2
        %v998 = vrot.slane %v223, 2
        %v999 = vsel %vm991, %v997, %v998
        %v1000 = vrot.slane %v224, 2
        %v1001 = vsel %vm991, %v998, %v1000
        %v1002 = vrot.slane %v225, 2
        %v1003 = vrot.slane %v226, 2
        %v1004 = vsel %vm991, %v1002, %v1003
        %v1005 = vrot.slane %v227, 2
        %v1006 = vsel %vm991, %v1003, %v1005
        %v1007 = vrot.slane %v228, 2
        %v1008 = vrot.slane %v229, 2
        %v1009 = vsel %vm991, %v1007, %v1008
        %v1010 = vrot.slane %v230, 2
        %v1011 = vsel %vm991, %v1008, %v1010
        %v1012 = vrot.slane %v231, 2
        %v1013 = vrot.slane %v232, 2
        %v1014 = vsel %vm991, %v1012, %v1013
        %v1015 = vrot.slane %v233, 2
        %v1016 = vsel %vm991, %v1013, %v1015
        %v1017 = vrot.slane %v234, 2
        %v1018 = vrot.slane %v235, 2
        %v1019 = vsel %vm991, %v1017, %v1018
        %v1020 = vrot.slane %v236, 2
        %v1021 = vsel %vm991, %v1018, %v1020
        %v1022 = vrot.slane %v237, 2
        %v1023 = vrot.slane %v238, 2
        %v1024 = vsel %vm991, %v1022, %v1023
        %v1025 = vrot.slane %v239, 2
        %v1026 = vsel %vm991, %v1023, %v1025
        %v1027 = vrot.slane %v240, 2
        %v1028 = vrot.slane %v241, 2
        %v1029 = vsel %vm991, %v1027, %v1028
        %v1030 = vrot.slane %v242, 2
        %v1031 = vsel %vm991, %v1028, %v1030
        %v1032 = vrot.slane %v243, 2
        %v1033 = vrot.slane %v244, 2
        %v1034 = vsel %vm991, %v1032, %v1033
        %v1035 = vrot.slane %v245, 2
        %v1036 = vsel %vm991, %v1033, %v1035
        %v1037 = vrot.slane %v246, 2
        %v1038 = vrot.slane %v247, 2
        %v1039 = vsel %vm991, %v1037, %v1038
        %v1040 = vrot.slane %v248, 2
        %v1041 = vsel %vm991, %v1038, %v1040
        %v1042 = vrot.slane %v249, 2
        %v1043 = vrot.slane %v250, 2
        %v1044 = vsel %vm991, %v1042, %v1043
        %v1045 = vrot.slane %v251, 2
        %v1046 = vsel %vm991, %v1043, %v1045
        %v1047 = vrot.slane %v252, 2
        %v1048 = vrot.slane %v253, 2
        %v1049 = vsel %vm991, %v1047, %v1048
        %v1050 = vrot.slane %v254, 2
        %v1051 = vsel %vm991, %v1048, %v1050
        %v1052 = vrot.slane %v255, 2
        %v1053 = vrot.slane %v256, 2
        %v1054 = vsel %vm991, %v1052, %v1053
        %v1055 = vrot.slane %v257, 2
        %v1056 = vsel %vm991, %v1053, %v1055
        %v1057 = vrot.slane %v258, 2
        %v1058 = vrot.slane %v259, 2
        %v1059 = vsel %vm991, %v1057, %v1058
        %v1060 = vrot.slane %v260, 2
        %v1061 = vsel %vm991, %v1058, %v1060
        %v1062 = vrot.slane %v261, 2
        %v1063 = vrot.slane %v262, 2
        %v1064 = vsel %vm991, %v1062, %v1063
        %v1065 = vrot.slane %v263, 2
        %v1066 = vsel %vm991, %v1063, %v1065
        %v1067 = vrot.slane %v264, 2
        %v1068 = vrot.slane %v265, 2
        %v1069 = vsel %vm991, %v1067, %v1068
        %v1070 = vrot.slane %v266, 2
        %v1071 = vsel %vm991, %v1068, %v1070
        %s1072 = scalar_lea.vmem %s212, 8
        %v1073 = vld [vmem:[%s1072] sm:$0xf]
        %v1074 = vsel %vm405, %v994, 0
        %v1076 = vsel %vm405, %v996, 0
        %v1078 = vsel %vm405, %v999, 0
        %v1080 = vsel %vm405, %v1001, 0
        %v1082 = vsel %vm405, %v1004, 0
        %v1084 = vsel %vm405, %v1006, 0
        %v1086 = vsel %vm405, %v1009, 0
        %v1088 = vsel %vm405, %v1011, 0
        %v1090 = vsel %vm405, %v1014, 0
        %v1092 = vsel %vm405, %v1016, 0
        %v1094 = vsel %vm405, %v1019, 0
        %v1096 = vsel %vm405, %v1021, 0
        %v1098 = vsel %vm405, %v1024, 0
        %v1100 = vsel %vm405, %v1026, 0
        %v1102 = vsel %vm405, %v1029, 0
        %v1104 = vsel %vm405, %v1031, 0
        %v1106 = vsel %vm405, %v1034, 0
        %v1108 = vsel %vm405, %v1036, 0
        %v1110 = vsel %vm405, %v1039, 0
        %v1112 = vsel %vm405, %v1041, 0
        %v1114 = vsel %vm405, %v1044, 0
        %v1116 = vsel %vm405, %v1046, 0
        %v1118 = vsel %vm405, %v1049, 0
        %v1120 = vsel %vm405, %v1051, 0
        %v1122 = vsel %vm405, %v1054, 0
        %v1124 = vsel %vm405, %v1056, 0
        %v1126 = vsel %vm405, %v1059, 0
        %v1128 = vsel %vm405, %v1061, 0
        %v1130 = vsel %vm405, %v1064, 0
        %v1132 = vsel %vm405, %v1066, 0
        %v1134 = vsel %vm405, %v1069, 0
        %v1136 = vsel %vm405, %v1071, 0
        %v1139 = vsel %vm470, %v1073, 0
        %1141 = vmatprep.subr.mxu0 0.0
        %1142 = vmatpush1.msra.mxu0 0.0
        %1143 = vmatprep.subr.mxu0 0.0
        %1144 = vmatpush1.msra.mxu0 0.0
        %1145 = vmatprep.subr.mxu0 0.0
        %1146 = vmatpush1.msra.mxu0 0.0
        %1147 = vmatprep.subr.mxu0 0.0
        %1148 = vmatpush1.msra.mxu0 0.0
        %1149 = vmatprep.subr.mxu0 0.0
        %1150 = vmatpush1.msra.mxu0 0.0
        %1151 = vmatprep.subr.mxu0 0.0
        %1152 = vmatpush1.msra.mxu0 0.0
        %1153 = vmatprep.subr.mxu0 0.0
        %1154 = vmatpush1.msra.mxu0 0.0
        %1155 = vmatprep.subr.mxu0 0.0
        %1156 = vmatpush1.msra.mxu0 0.0
        %1157 = vmatprep.subr.mxu0 0.0
        %1158 = vmatpush1.msra.mxu0 0.0
        %1159 = vmatprep.subr.mxu0 0.0
        %1160 = vmatpush1.msra.mxu0 0.0
        %1161 = vmatprep.subr.mxu0 0.0
        %1162 = vmatpush1.msra.mxu0 0.0
        %1163 = vmatprep.subr.mxu0 0.0
        %1164 = vmatpush1.msra.mxu0 0.0
        %1165 = vmatprep.subr.mxu0 0.0
        %1166 = vmatpush1.msra.mxu0 0.0
        %1167 = vmatprep.subr.mxu0 0.0
        %1168 = vmatpush1.msra.mxu0 0.0
        %1169 = vmatprep.subr.mxu0 0.0
        %1170 = vmatpush1.msra.mxu0 0.0
        %1171 = vmatprep.subr.mxu0 0.0
        %1172 = vmatpush1.msra.mxu0 %v1139
        %1173 = vmatprep.subr.mxu0 0.0
        %1174 = vmatpush2.msra.mxu0 0.0
        %1175 = vmatprep.subr.mxu0 0.0
        %1176 = vmatpush2.msra.mxu0 0.0
        %1177 = vmatprep.subr.mxu0 0.0
        %1178 = vmatpush2.msra.mxu0 0.0
        %1179 = vmatprep.subr.mxu0 0.0
        %1180 = vmatpush2.msra.mxu0 0.0
        %1181 = vmatprep.subr.mxu0 0.0
        %1182 = vmatpush2.msra.mxu0 0.0
        %1183 = vmatprep.subr.mxu0 0.0
        %1184 = vmatpush2.msra.mxu0 0.0
        %1185 = vmatprep.subr.mxu0 0.0
        %1186 = vmatpush2.msra.mxu0 0.0
        %1187 = vmatprep.subr.mxu0 0.0
        %1188 = vmatpush2.msra.mxu0 0.0
        %1189 = vmatprep.subr.mxu0 0.0
        %1190 = vmatpush2.msra.mxu0 0.0
        %1191 = vmatprep.subr.mxu0 0.0
        %1192 = vmatpush2.msra.mxu0 0.0
        %1193 = vmatprep.subr.mxu0 0.0
        %1194 = vmatpush2.msra.mxu0 0.0
        %1195 = vmatprep.subr.mxu0 0.0
        %1196 = vmatpush2.msra.mxu0 0.0
        %1197 = vmatprep.subr.mxu0 0.0
        %1198 = vmatpush2.msra.mxu0 0.0
        %1199 = vmatprep.subr.mxu0 0.0
        %1200 = vmatpush2.msra.mxu0 0.0
        %1201 = vmatprep.subr.mxu0 0.0
        %1202 = vmatpush2.msra.mxu0 0.0
        %1203 = vmatprep.subr.mxu0 0.0
        %1204 = vmatpush2.msra.mxu0 0.0
        %1205 = vmatprep.mubr.f32.mxu0 0.0
        %1206 = vmatmul.mubr.f32.gmra.mxu0 %v1074
        %v1207 = vpop.f32.mrf.mxu0
        %v1208 = vadd.f32 0.0, %v1207
        %v1209 = vpop.f32.mrf.mxu0
        %1210 = vmatprep.mubr.f32.mxu0 0.0
        %1211 = vmatmul.mubr.f32.gmra.mxu0 %v1076
        %v1212 = vpop.f32.mrf.mxu0
        %v1213 = vadd.f32 0.0, %v1212
        %v1214 = vpop.f32.mrf.mxu0
        %1215 = vmatprep.mubr.f32.mxu0 0.0
        %1216 = vmatmul.mubr.f32.gmra.mxu0 %v1078
        %v1217 = vpop.f32.mrf.mxu0
        %v1218 = vadd.f32 0.0, %v1217
        %v1219 = vpop.f32.mrf.mxu0
        %1220 = vmatprep.mubr.f32.mxu0 0.0
        %1221 = vmatmul.mubr.f32.gmra.mxu0 %v1080
        %v1222 = vpop.f32.mrf.mxu0
        %v1223 = vadd.f32 0.0, %v1222
        %v1224 = vpop.f32.mrf.mxu0
        %1225 = vmatprep.mubr.f32.mxu0 0.0
        %1226 = vmatmul.mubr.f32.gmra.mxu0 %v1082
        %v1227 = vpop.f32.mrf.mxu0
        %v1228 = vadd.f32 0.0, %v1227
        %v1229 = vpop.f32.mrf.mxu0
        %1230 = vmatprep.mubr.f32.mxu0 0.0
        %1231 = vmatmul.mubr.f32.gmra.mxu0 %v1084
        %v1232 = vpop.f32.mrf.mxu0
        %v1233 = vadd.f32 0.0, %v1232
        %v1234 = vpop.f32.mrf.mxu0
        %1235 = vmatprep.mubr.f32.mxu0 0.0
        %1236 = vmatmul.mubr.f32.gmra.mxu0 %v1086
        %v1237 = vpop.f32.mrf.mxu0
        %v1238 = vadd.f32 0.0, %v1237
        %v1239 = vpop.f32.mrf.mxu0
        %1240 = vmatprep.mubr.f32.mxu0 0.0
        %1241 = vmatmul.mubr.f32.gmra.mxu0 %v1088
        %v1242 = vpop.f32.mrf.mxu0
        %v1243 = vadd.f32 0.0, %v1242
        %v1244 = vpop.f32.mrf.mxu0
        %1245 = vmatprep.mubr.f32.mxu0 0.0
        %1246 = vmatmul.mubr.f32.gmra.mxu0 %v1090
        %v1247 = vpop.f32.mrf.mxu0
        %v1248 = vadd.f32 0.0, %v1247
        %v1249 = vpop.f32.mrf.mxu0
        %1250 = vmatprep.mubr.f32.mxu0 0.0
        %1251 = vmatmul.mubr.f32.gmra.mxu0 %v1092
        %v1252 = vpop.f32.mrf.mxu0
        %v1253 = vadd.f32 0.0, %v1252
        %v1254 = vpop.f32.mrf.mxu0
        %1255 = vmatprep.mubr.f32.mxu0 0.0
        %1256 = vmatmul.mubr.f32.gmra.mxu0 %v1094
        %v1257 = vpop.f32.mrf.mxu0
        %v1258 = vadd.f32 0.0, %v1257
        %v1259 = vpop.f32.mrf.mxu0
        %1260 = vmatprep.mubr.f32.mxu0 0.0
        %1261 = vmatmul.mubr.f32.gmra.mxu0 %v1096
        %v1262 = vpop.f32.mrf.mxu0
        %v1263 = vadd.f32 0.0, %v1262
        %v1264 = vpop.f32.mrf.mxu0
        %1265 = vmatprep.mubr.f32.mxu0 0.0
        %1266 = vmatmul.mubr.f32.gmra.mxu0 %v1098
        %v1267 = vpop.f32.mrf.mxu0
        %v1268 = vadd.f32 0.0, %v1267
        %v1269 = vpop.f32.mrf.mxu0
        %1270 = vmatprep.mubr.f32.mxu0 0.0
        %1271 = vmatmul.mubr.f32.gmra.mxu0 %v1100
        %v1272 = vpop.f32.mrf.mxu0
        %v1273 = vadd.f32 0.0, %v1272
        %v1274 = vpop.f32.mrf.mxu0
        %1275 = vmatprep.mubr.f32.mxu0 0.0
        %1276 = vmatmul.mubr.f32.gmra.mxu0 %v1102
        %v1277 = vpop.f32.mrf.mxu0
        %v1278 = vadd.f32 0.0, %v1277
        %v1279 = vpop.f32.mrf.mxu0
        %1280 = vmatprep.mubr.f32.mxu0 0.0
        %1281 = vmatmul.mubr.f32.gmra.mxu0 %v1104
        %v1282 = vpop.f32.mrf.mxu0
        %v1283 = vadd.f32 0.0, %v1282
        %v1284 = vpop.f32.mrf.mxu0
        %1285 = vmatprep.mubr.f32.mxu0 0.0
        %1286 = vmatmul.mubr.f32.gmra.mxu0 %v1106
        %v1287 = vpop.f32.mrf.mxu0
        %v1288 = vadd.f32 0.0, %v1287
        %v1289 = vpop.f32.mrf.mxu0
        %1290 = vmatprep.mubr.f32.mxu0 0.0
        %1291 = vmatmul.mubr.f32.gmra.mxu0 %v1108
        %v1292 = vpop.f32.mrf.mxu0
        %v1293 = vadd.f32 0.0, %v1292
        %v1294 = vpop.f32.mrf.mxu0
        %1295 = vmatprep.mubr.f32.mxu0 0.0
        %1296 = vmatmul.mubr.f32.gmra.mxu0 %v1110
        %v1297 = vpop.f32.mrf.mxu0
        %v1298 = vadd.f32 0.0, %v1297
        %v1299 = vpop.f32.mrf.mxu0
        %1300 = vmatprep.mubr.f32.mxu0 0.0
        %1301 = vmatmul.mubr.f32.gmra.mxu0 %v1112
        %v1302 = vpop.f32.mrf.mxu0
        %v1303 = vadd.f32 0.0, %v1302
        %v1304 = vpop.f32.mrf.mxu0
        %1305 = vmatprep.mubr.f32.mxu0 0.0
        %1306 = vmatmul.mubr.f32.gmra.mxu0 %v1114
        %v1307 = vpop.f32.mrf.mxu0
        %v1308 = vadd.f32 0.0, %v1307
        %v1309 = vpop.f32.mrf.mxu0
        %1310 = vmatprep.mubr.f32.mxu0 0.0
        %1311 = vmatmul.mubr.f32.gmra.mxu0 %v1116
        %v1312 = vpop.f32.mrf.mxu0
        %v1313 = vadd.f32 0.0, %v1312
        %v1314 = vpop.f32.mrf.mxu0
        %1315 = vmatprep.mubr.f32.mxu0 0.0
        %1316 = vmatmul.mubr.f32.gmra.mxu0 %v1118
        %v1317 = vpop.f32.mrf.mxu0
        %v1318 = vadd.f32 0.0, %v1317
        %v1319 = vpop.f32.mrf.mxu0
        %1320 = vmatprep.mubr.f32.mxu0 0.0
        %1321 = vmatmul.mubr.f32.gmra.mxu0 %v1120
        %v1322 = vpop.f32.mrf.mxu0
        %v1323 = vadd.f32 0.0, %v1322
        %v1324 = vpop.f32.mrf.mxu0
        %1325 = vmatprep.mubr.f32.mxu0 0.0
        %1326 = vmatmul.mubr.f32.gmra.mxu0 %v1122
        %v1327 = vpop.f32.mrf.mxu0
        %v1328 = vadd.f32 0.0, %v1327
        %v1329 = vpop.f32.mrf.mxu0
        %1330 = vmatprep.mubr.f32.mxu0 0.0
        %1331 = vmatmul.mubr.f32.gmra.mxu0 %v1124
        %v1332 = vpop.f32.mrf.mxu0
        %v1333 = vadd.f32 0.0, %v1332
        %v1334 = vpop.f32.mrf.mxu0
        %1335 = vmatprep.mubr.f32.mxu0 0.0
        %1336 = vmatmul.mubr.f32.gmra.mxu0 %v1126
        %v1337 = vpop.f32.mrf.mxu0
        %v1338 = vadd.f32 0.0, %v1337
        %v1339 = vpop.f32.mrf.mxu0
        %1340 = vmatprep.mubr.f32.mxu0 0.0
        %1341 = vmatmul.mubr.f32.gmra.mxu0 %v1128
        %v1342 = vpop.f32.mrf.mxu0
        %v1343 = vadd.f32 0.0, %v1342
        %v1344 = vpop.f32.mrf.mxu0
        %1345 = vmatprep.mubr.f32.mxu0 0.0
        %1346 = vmatmul.mubr.f32.gmra.mxu0 %v1130
        %v1347 = vpop.f32.mrf.mxu0
        %v1348 = vadd.f32 0.0, %v1347
        %v1349 = vpop.f32.mrf.mxu0
        %1350 = vmatprep.mubr.f32.mxu0 0.0
        %1351 = vmatmul.mubr.f32.gmra.mxu0 %v1132
        %v1352 = vpop.f32.mrf.mxu0
        %v1353 = vadd.f32 0.0, %v1352
        %v1354 = vpop.f32.mrf.mxu0
        %1355 = vmatprep.mubr.f32.mxu0 0.0
        %1356 = vmatmul.mubr.f32.gmra.mxu0 %v1134
        %v1357 = vpop.f32.mrf.mxu0
        %v1358 = vadd.f32 0.0, %v1357
        %v1359 = vpop.f32.mrf.mxu0
        %1360 = vmatprep.mubr.f32.mxu0 0.0
        %1361 = vmatmul.mubr.f32.gmra.mxu0 %v1136
        %v1362 = vpop.f32.mrf.mxu0
        %v1363 = vadd.f32 0.0, %v1362
        %v1364 = vpop.f32.mrf.mxu0
        %1365 = vdwg.mxu0
        %v1366 = vadd.f32 %v833, %v1208
        %v1367 = vadd.f32 %v838, %v1213
        %v1368 = vadd.f32 %v843, %v1218
        %v1369 = vadd.f32 %v848, %v1223
        %v1370 = vadd.f32 %v853, %v1228
        %v1371 = vadd.f32 %v858, %v1233
        %v1372 = vadd.f32 %v863, %v1238
        %v1373 = vadd.f32 %v868, %v1243
        %v1374 = vadd.f32 %v873, %v1248
        %v1375 = vadd.f32 %v878, %v1253
        %v1376 = vadd.f32 %v883, %v1258
        %v1377 = vadd.f32 %v888, %v1263
        %v1378 = vadd.f32 %v893, %v1268
        %v1379 = vadd.f32 %v898, %v1273
        %v1380 = vadd.f32 %v903, %v1278
        %v1381 = vadd.f32 %v908, %v1283
        %v1382 = vadd.f32 %v913, %v1288
        %v1383 = vadd.f32 %v918, %v1293
        %v1384 = vadd.f32 %v923, %v1298
        %v1385 = vadd.f32 %v928, %v1303
        %v1386 = vadd.f32 %v933, %v1308
        %v1387 = vadd.f32 %v938, %v1313
        %v1388 = vadd.f32 %v943, %v1318
        %v1389 = vadd.f32 %v948, %v1323
        %v1390 = vadd.f32 %v953, %v1328
        %v1391 = vadd.f32 %v958, %v1333
        %v1392 = vadd.f32 %v963, %v1338
        %v1393 = vadd.f32 %v968, %v1343
        %v1394 = vadd.f32 %v973, %v1348
        %v1395 = vadd.f32 %v978, %v1353
        %v1396 = vadd.f32 %v983, %v1358
        %v1397 = vadd.f32 %v988, %v1363
        %s1398 = scalar_lea.vmem %s212, 12
        %v1399 = vld [vmem:[%s1398] sm:$0xf]
        %v1401 = vsel %vm405, %v267, 0
        %v1404 = vsel %vm405, %v268, 0
        %v1407 = vsel %vm470, %v1399, 0
        %1409 = vmatprep.subr.mxu0 0.0
        %1410 = vmatpush1.msra.mxu0 0.0
        %1411 = vmatprep.subr.mxu0 0.0
        %1412 = vmatpush1.msra.mxu0 0.0
        %1413 = vmatprep.subr.mxu0 0.0
        %1414 = vmatpush1.msra.mxu0 0.0
        %1415 = vmatprep.subr.mxu0 0.0
        %1416 = vmatpush1.msra.mxu0 0.0
        %1417 = vmatprep.subr.mxu0 0.0
        %1418 = vmatpush1.msra.mxu0 0.0
        %1419 = vmatprep.subr.mxu0 0.0
        %1420 = vmatpush1.msra.mxu0 0.0
        %1421 = vmatprep.subr.mxu0 0.0
        %1422 = vmatpush1.msra.mxu0 0.0
        %1423 = vmatprep.subr.mxu0 0.0
        %1424 = vmatpush1.msra.mxu0 0.0
        %1425 = vmatprep.subr.mxu0 0.0
        %1426 = vmatpush1.msra.mxu0 0.0
        %1427 = vmatprep.subr.mxu0 0.0
        %1428 = vmatpush1.msra.mxu0 0.0
        %1429 = vmatprep.subr.mxu0 0.0
        %1430 = vmatpush1.msra.mxu0 0.0
        %1431 = vmatprep.subr.mxu0 0.0
        %1432 = vmatpush1.msra.mxu0 0.0
        %1433 = vmatprep.subr.mxu0 0.0
        %1434 = vmatpush1.msra.mxu0 0.0
        %1435 = vmatprep.subr.mxu0 0.0
        %1436 = vmatpush1.msra.mxu0 0.0
        %1437 = vmatprep.subr.mxu0 0.0
        %1438 = vmatpush1.msra.mxu0 0.0
        %1439 = vmatprep.subr.mxu0 0.0
        %1440 = vmatpush1.msra.mxu0 %v1407
        %1441 = vmatprep.subr.mxu0 0.0
        %1442 = vmatpush2.msra.mxu0 0.0
        %1443 = vmatprep.subr.mxu0 0.0
        %1444 = vmatpush2.msra.mxu0 0.0
        %1445 = vmatprep.subr.mxu0 0.0
        %1446 = vmatpush2.msra.mxu0 0.0
        %1447 = vmatprep.subr.mxu0 0.0
        %1448 = vmatpush2.msra.mxu0 0.0
        %1449 = vmatprep.subr.mxu0 0.0
        %1450 = vmatpush2.msra.mxu0 0.0
        %1451 = vmatprep.subr.mxu0 0.0
        %1452 = vmatpush2.msra.mxu0 0.0
        %1453 = vmatprep.subr.mxu0 0.0
        %1454 = vmatpush2.msra.mxu0 0.0
        %1455 = vmatprep.subr.mxu0 0.0
        %1456 = vmatpush2.msra.mxu0 0.0
        %1457 = vmatprep.subr.mxu0 0.0
        %1458 = vmatpush2.msra.mxu0 0.0
        %1459 = vmatprep.subr.mxu0 0.0
        %1460 = vmatpush2.msra.mxu0 0.0
        %1461 = vmatprep.subr.mxu0 0.0
        %1462 = vmatpush2.msra.mxu0 0.0
        %1463 = vmatprep.subr.mxu0 0.0
        %1464 = vmatpush2.msra.mxu0 0.0
        %1465 = vmatprep.subr.mxu0 0.0
        %1466 = vmatpush2.msra.mxu0 0.0
        %1467 = vmatprep.subr.mxu0 0.0
        %1468 = vmatpush2.msra.mxu0 0.0
        %1469 = vmatprep.subr.mxu0 0.0
        %1470 = vmatpush2.msra.mxu0 0.0
        %1471 = vmatprep.subr.mxu0 0.0
        %1472 = vmatpush2.msra.mxu0 0.0
        %1473 = vmatprep.mubr.f32.mxu0 0.0
        %1474 = vmatmul.mubr.f32.gmra.mxu0 %v703
        %v1475 = vpop.f32.mrf.mxu0
        %v1476 = vadd.f32 0.0, %v1475
        %v1477 = vpop.f32.mrf.mxu0
        %1478 = vmatprep.mubr.f32.mxu0 0.0
        %1479 = vmatmul.mubr.f32.gmra.mxu0 %v705
        %v1480 = vpop.f32.mrf.mxu0
        %v1481 = vadd.f32 0.0, %v1480
        %v1482 = vpop.f32.mrf.mxu0
        %1483 = vmatprep.mubr.f32.mxu0 0.0
        %1484 = vmatmul.mubr.f32.gmra.mxu0 %v707
        %v1485 = vpop.f32.mrf.mxu0
        %v1486 = vadd.f32 0.0, %v1485
        %v1487 = vpop.f32.mrf.mxu0
        %1488 = vmatprep.mubr.f32.mxu0 0.0
        %1489 = vmatmul.mubr.f32.gmra.mxu0 %v709
        %v1490 = vpop.f32.mrf.mxu0
        %v1491 = vadd.f32 0.0, %v1490
        %v1492 = vpop.f32.mrf.mxu0
        %1493 = vmatprep.mubr.f32.mxu0 0.0
        %1494 = vmatmul.mubr.f32.gmra.mxu0 %v711
        %v1495 = vpop.f32.mrf.mxu0
        %v1496 = vadd.f32 0.0, %v1495
        %v1497 = vpop.f32.mrf.mxu0
        %1498 = vmatprep.mubr.f32.mxu0 0.0
        %1499 = vmatmul.mubr.f32.gmra.mxu0 %v713
        %v1500 = vpop.f32.mrf.mxu0
        %v1501 = vadd.f32 0.0, %v1500
        %v1502 = vpop.f32.mrf.mxu0
        %1503 = vmatprep.mubr.f32.mxu0 0.0
        %1504 = vmatmul.mubr.f32.gmra.mxu0 %v715
        %v1505 = vpop.f32.mrf.mxu0
        %v1506 = vadd.f32 0.0, %v1505
        %v1507 = vpop.f32.mrf.mxu0
        %1508 = vmatprep.mubr.f32.mxu0 0.0
        %1509 = vmatmul.mubr.f32.gmra.mxu0 %v717
        %v1510 = vpop.f32.mrf.mxu0
        %v1511 = vadd.f32 0.0, %v1510
        %v1512 = vpop.f32.mrf.mxu0
        %1513 = vmatprep.mubr.f32.mxu0 0.0
        %1514 = vmatmul.mubr.f32.gmra.mxu0 %v719
        %v1515 = vpop.f32.mrf.mxu0
        %v1516 = vadd.f32 0.0, %v1515
        %v1517 = vpop.f32.mrf.mxu0
        %1518 = vmatprep.mubr.f32.mxu0 0.0
        %1519 = vmatmul.mubr.f32.gmra.mxu0 %v721
        %v1520 = vpop.f32.mrf.mxu0
        %v1521 = vadd.f32 0.0, %v1520
        %v1522 = vpop.f32.mrf.mxu0
        %1523 = vmatprep.mubr.f32.mxu0 0.0
        %1524 = vmatmul.mubr.f32.gmra.mxu0 %v723
        %v1525 = vpop.f32.mrf.mxu0
        %v1526 = vadd.f32 0.0, %v1525
        %v1527 = vpop.f32.mrf.mxu0
        %1528 = vmatprep.mubr.f32.mxu0 0.0
        %1529 = vmatmul.mubr.f32.gmra.mxu0 %v725
        %v1530 = vpop.f32.mrf.mxu0
        %v1531 = vadd.f32 0.0, %v1530
        %v1532 = vpop.f32.mrf.mxu0
        %1533 = vmatprep.mubr.f32.mxu0 0.0
        %1534 = vmatmul.mubr.f32.gmra.mxu0 %v727
        %v1535 = vpop.f32.mrf.mxu0
        %v1536 = vadd.f32 0.0, %v1535
        %v1537 = vpop.f32.mrf.mxu0
        %1538 = vmatprep.mubr.f32.mxu0 0.0
        %1539 = vmatmul.mubr.f32.gmra.mxu0 %v729
        %v1540 = vpop.f32.mrf.mxu0
        %v1541 = vadd.f32 0.0, %v1540
        %v1542 = vpop.f32.mrf.mxu0
        %1543 = vmatprep.mubr.f32.mxu0 0.0
        %1544 = vmatmul.mubr.f32.gmra.mxu0 %v731
        %v1545 = vpop.f32.mrf.mxu0
        %v1546 = vadd.f32 0.0, %v1545
        %v1547 = vpop.f32.mrf.mxu0
        %1548 = vmatprep.mubr.f32.mxu0 0.0
        %1549 = vmatmul.mubr.f32.gmra.mxu0 %v733
        %v1550 = vpop.f32.mrf.mxu0
        %v1551 = vadd.f32 0.0, %v1550
        %v1552 = vpop.f32.mrf.mxu0
        %1553 = vmatprep.mubr.f32.mxu0 0.0
        %1554 = vmatmul.mubr.f32.gmra.mxu0 %v735
        %v1555 = vpop.f32.mrf.mxu0
        %v1556 = vadd.f32 0.0, %v1555
        %v1557 = vpop.f32.mrf.mxu0
        %1558 = vmatprep.mubr.f32.mxu0 0.0
        %1559 = vmatmul.mubr.f32.gmra.mxu0 %v737
        %v1560 = vpop.f32.mrf.mxu0
        %v1561 = vadd.f32 0.0, %v1560
        %v1562 = vpop.f32.mrf.mxu0
        %1563 = vmatprep.mubr.f32.mxu0 0.0
        %1564 = vmatmul.mubr.f32.gmra.mxu0 %v739
        %v1565 = vpop.f32.mrf.mxu0
        %v1566 = vadd.f32 0.0, %v1565
        %v1567 = vpop.f32.mrf.mxu0
        %1568 = vmatprep.mubr.f32.mxu0 0.0
        %1569 = vmatmul.mubr.f32.gmra.mxu0 %v741
        %v1570 = vpop.f32.mrf.mxu0
        %v1571 = vadd.f32 0.0, %v1570
        %v1572 = vpop.f32.mrf.mxu0
        %1573 = vmatprep.mubr.f32.mxu0 0.0
        %1574 = vmatmul.mubr.f32.gmra.mxu0 %v743
        %v1575 = vpop.f32.mrf.mxu0
        %v1576 = vadd.f32 0.0, %v1575
        %v1577 = vpop.f32.mrf.mxu0
        %1578 = vmatprep.mubr.f32.mxu0 0.0
        %1579 = vmatmul.mubr.f32.gmra.mxu0 %v745
        %v1580 = vpop.f32.mrf.mxu0
        %v1581 = vadd.f32 0.0, %v1580
        %v1582 = vpop.f32.mrf.mxu0
        %1583 = vmatprep.mubr.f32.mxu0 0.0
        %1584 = vmatmul.mubr.f32.gmra.mxu0 %v747
        %v1585 = vpop.f32.mrf.mxu0
        %v1586 = vadd.f32 0.0, %v1585
        %v1587 = vpop.f32.mrf.mxu0
        %1588 = vmatprep.mubr.f32.mxu0 0.0
        %1589 = vmatmul.mubr.f32.gmra.mxu0 %v749
        %v1590 = vpop.f32.mrf.mxu0
        %v1591 = vadd.f32 0.0, %v1590
        %v1592 = vpop.f32.mrf.mxu0
        %1593 = vmatprep.mubr.f32.mxu0 0.0
        %1594 = vmatmul.mubr.f32.gmra.mxu0 %v751
        %v1595 = vpop.f32.mrf.mxu0
        %v1596 = vadd.f32 0.0, %v1595
        %v1597 = vpop.f32.mrf.mxu0
        %1598 = vmatprep.mubr.f32.mxu0 0.0
        %1599 = vmatmul.mubr.f32.gmra.mxu0 %v753
        %v1600 = vpop.f32.mrf.mxu0
        %v1601 = vadd.f32 0.0, %v1600
        %v1602 = vpop.f32.mrf.mxu0
        %1603 = vmatprep.mubr.f32.mxu0 0.0
        %1604 = vmatmul.mubr.f32.gmra.mxu0 %v755
        %v1605 = vpop.f32.mrf.mxu0
        %v1606 = vadd.f32 0.0, %v1605
        %v1607 = vpop.f32.mrf.mxu0
        %1608 = vmatprep.mubr.f32.mxu0 0.0
        %1609 = vmatmul.mubr.f32.gmra.mxu0 %v757
        %v1610 = vpop.f32.mrf.mxu0
        %v1611 = vadd.f32 0.0, %v1610
        %v1612 = vpop.f32.mrf.mxu0
        %1613 = vmatprep.mubr.f32.mxu0 0.0
        %1614 = vmatmul.mubr.f32.gmra.mxu0 %v759
        %v1615 = vpop.f32.mrf.mxu0
        %v1616 = vadd.f32 0.0, %v1615
        %v1617 = vpop.f32.mrf.mxu0
        %1618 = vmatprep.mubr.f32.mxu0 0.0
        %1619 = vmatmul.mubr.f32.gmra.mxu0 %v761
        %v1620 = vpop.f32.mrf.mxu0
        %v1621 = vadd.f32 0.0, %v1620
        %v1622 = vpop.f32.mrf.mxu0
        %1623 = vmatprep.mubr.f32.mxu0 0.0
        %1624 = vmatmul.mubr.f32.gmra.mxu0 %v1401
        %v1625 = vpop.f32.mrf.mxu0
        %v1626 = vadd.f32 0.0, %v1625
        %v1627 = vpop.f32.mrf.mxu0
        %1628 = vmatprep.mubr.f32.mxu0 0.0
        %1629 = vmatmul.mubr.f32.gmra.mxu0 %v1404
        %v1630 = vpop.f32.mrf.mxu0
        %v1631 = vadd.f32 0.0, %v1630
        %v1632 = vpop.f32.mrf.mxu0
        %1633 = vdwg.mxu0
        %v1634 = vadd.f32 %v1366, %v1476
        %v1635 = vadd.f32 %v1367, %v1481
        %v1636 = vadd.f32 %v1368, %v1486
        %v1637 = vadd.f32 %v1369, %v1491
        %v1638 = vadd.f32 %v1370, %v1496
        %v1639 = vadd.f32 %v1371, %v1501
        %v1640 = vadd.f32 %v1372, %v1506
        %v1641 = vadd.f32 %v1373, %v1511
        %v1642 = vadd.f32 %v1374, %v1516
        %v1643 = vadd.f32 %v1375, %v1521
        %v1644 = vadd.f32 %v1376, %v1526
        %v1645 = vadd.f32 %v1377, %v1531
        %v1646 = vadd.f32 %v1378, %v1536
        %v1647 = vadd.f32 %v1379, %v1541
        %v1648 = vadd.f32 %v1380, %v1546
        %v1649 = vadd.f32 %v1381, %v1551
        %v1650 = vadd.f32 %v1382, %v1556
        %v1651 = vadd.f32 %v1383, %v1561
        %v1652 = vadd.f32 %v1384, %v1566
        %v1653 = vadd.f32 %v1385, %v1571
        %v1654 = vadd.f32 %v1386, %v1576
        %v1655 = vadd.f32 %v1387, %v1581
        %v1656 = vadd.f32 %v1388, %v1586
        %v1657 = vadd.f32 %v1389, %v1591
        %v1658 = vadd.f32 %v1390, %v1596
        %v1659 = vadd.f32 %v1391, %v1601
        %v1660 = vadd.f32 %v1392, %v1606
        %v1661 = vadd.f32 %v1393, %v1611
        %v1662 = vadd.f32 %v1394, %v1616
        %v1663 = vadd.f32 %v1395, %v1621
        %v1664 = vadd.f32 %v1396, %v1626
        %v1665 = vadd.f32 %v1397, %v1631
        %v1667 = vrot.slane %v267, 1
        %v1668 = vrot.slane %v268, 1
        %v1669 = vsel %vm322, %v1667, %v1668
        %v1670 = vrot.slane %v269, 1
        %v1671 = vsel %vm322, %v1668, %v1670
        %s1672 = scalar_lea.vmem %s212, 16
        %v1673 = vld [vmem:[%s1672] sm:$0xf]
        %v1674 = vsel %vm405, %v1669, 0
        %v1676 = vsel %vm405, %v1671, 0
        %v1679 = vsel %vm470, %v1673, 0
        %1681 = vmatprep.subr.mxu0 0.0
        %1682 = vmatpush1.msra.mxu0 0.0
        %1683 = vmatprep.subr.mxu0 0.0
        %1684 = vmatpush1.msra.mxu0 0.0
        %1685 = vmatprep.subr.mxu0 0.0
        %1686 = vmatpush1.msra.mxu0 0.0
        %1687 = vmatprep.subr.mxu0 0.0
        %1688 = vmatpush1.msra.mxu0 0.0
        %1689 = vmatprep.subr.mxu0 0.0
        %1690 = vmatpush1.msra.mxu0 0.0
        %1691 = vmatprep.subr.mxu0 0.0
        %1692 = vmatpush1.msra.mxu0 0.0
        %1693 = vmatprep.subr.mxu0 0.0
        %1694 = vmatpush1.msra.mxu0 0.0
        %1695 = vmatprep.subr.mxu0 0.0
        %1696 = vmatpush1.msra.mxu0 0.0
        %1697 = vmatprep.subr.mxu0 0.0
        %1698 = vmatpush1.msra.mxu0 0.0
        %1699 = vmatprep.subr.mxu0 0.0
        %1700 = vmatpush1.msra.mxu0 0.0
        %1701 = vmatprep.subr.mxu0 0.0
        %1702 = vmatpush1.msra.mxu0 0.0
        %1703 = vmatprep.subr.mxu0 0.0
        %1704 = vmatpush1.msra.mxu0 0.0
        %1705 = vmatprep.subr.mxu0 0.0
        %1706 = vmatpush1.msra.mxu0 0.0
        %1707 = vmatprep.subr.mxu0 0.0
        %1708 = vmatpush1.msra.mxu0 0.0
        %1709 = vmatprep.subr.mxu0 0.0
        %1710 = vmatpush1.msra.mxu0 0.0
        %1711 = vmatprep.subr.mxu0 0.0
        %1712 = vmatpush1.msra.mxu0 %v1679
        %1713 = vmatprep.subr.mxu0 0.0
        %1714 = vmatpush2.msra.mxu0 0.0
        %1715 = vmatprep.subr.mxu0 0.0
        %1716 = vmatpush2.msra.mxu0 0.0
        %1717 = vmatprep.subr.mxu0 0.0
        %1718 = vmatpush2.msra.mxu0 0.0
        %1719 = vmatprep.subr.mxu0 0.0
        %1720 = vmatpush2.msra.mxu0 0.0
        %1721 = vmatprep.subr.mxu0 0.0
        %1722 = vmatpush2.msra.mxu0 0.0
        %1723 = vmatprep.subr.mxu0 0.0
        %1724 = vmatpush2.msra.mxu0 0.0
        %1725 = vmatprep.subr.mxu0 0.0
        %1726 = vmatpush2.msra.mxu0 0.0
        %1727 = vmatprep.subr.mxu0 0.0
        %1728 = vmatpush2.msra.mxu0 0.0
        %1729 = vmatprep.subr.mxu0 0.0
        %1730 = vmatpush2.msra.mxu0 0.0
        %1731 = vmatprep.subr.mxu0 0.0
        %1732 = vmatpush2.msra.mxu0 0.0
        %1733 = vmatprep.subr.mxu0 0.0
        %1734 = vmatpush2.msra.mxu0 0.0
        %1735 = vmatprep.subr.mxu0 0.0
        %1736 = vmatpush2.msra.mxu0 0.0
        %1737 = vmatprep.subr.mxu0 0.0
        %1738 = vmatpush2.msra.mxu0 0.0
        %1739 = vmatprep.subr.mxu0 0.0
        %1740 = vmatpush2.msra.mxu0 0.0
        %1741 = vmatprep.subr.mxu0 0.0
        %1742 = vmatpush2.msra.mxu0 0.0
        %1743 = vmatprep.subr.mxu0 0.0
        %1744 = vmatpush2.msra.mxu0 0.0
        %1745 = vmatprep.mubr.f32.mxu0 0.0
        %1746 = vmatmul.mubr.f32.gmra.mxu0 %v410
        %v1747 = vpop.f32.mrf.mxu0
        %v1748 = vadd.f32 0.0, %v1747
        %v1749 = vpop.f32.mrf.mxu0
        %1750 = vmatprep.mubr.f32.mxu0 0.0
        %1751 = vmatmul.mubr.f32.gmra.mxu0 %v412
        %v1752 = vpop.f32.mrf.mxu0
        %v1753 = vadd.f32 0.0, %v1752
        %v1754 = vpop.f32.mrf.mxu0
        %1755 = vmatprep.mubr.f32.mxu0 0.0
        %1756 = vmatmul.mubr.f32.gmra.mxu0 %v414
        %v1757 = vpop.f32.mrf.mxu0
        %v1758 = vadd.f32 0.0, %v1757
        %v1759 = vpop.f32.mrf.mxu0
        %1760 = vmatprep.mubr.f32.mxu0 0.0
        %1761 = vmatmul.mubr.f32.gmra.mxu0 %v416
        %v1762 = vpop.f32.mrf.mxu0
        %v1763 = vadd.f32 0.0, %v1762
        %v1764 = vpop.f32.mrf.mxu0
        %1765 = vmatprep.mubr.f32.mxu0 0.0
        %1766 = vmatmul.mubr.f32.gmra.mxu0 %v418
        %v1767 = vpop.f32.mrf.mxu0
        %v1768 = vadd.f32 0.0, %v1767
        %v1769 = vpop.f32.mrf.mxu0
        %1770 = vmatprep.mubr.f32.mxu0 0.0
        %1771 = vmatmul.mubr.f32.gmra.mxu0 %v420
        %v1772 = vpop.f32.mrf.mxu0
        %v1773 = vadd.f32 0.0, %v1772
        %v1774 = vpop.f32.mrf.mxu0
        %1775 = vmatprep.mubr.f32.mxu0 0.0
        %1776 = vmatmul.mubr.f32.gmra.mxu0 %v422
        %v1777 = vpop.f32.mrf.mxu0
        %v1778 = vadd.f32 0.0, %v1777
        %v1779 = vpop.f32.mrf.mxu0
        %1780 = vmatprep.mubr.f32.mxu0 0.0
        %1781 = vmatmul.mubr.f32.gmra.mxu0 %v424
        %v1782 = vpop.f32.mrf.mxu0
        %v1783 = vadd.f32 0.0, %v1782
        %v1784 = vpop.f32.mrf.mxu0
        %1785 = vmatprep.mubr.f32.mxu0 0.0
        %1786 = vmatmul.mubr.f32.gmra.mxu0 %v426
        %v1787 = vpop.f32.mrf.mxu0
        %v1788 = vadd.f32 0.0, %v1787
        %v1789 = vpop.f32.mrf.mxu0
        %1790 = vmatprep.mubr.f32.mxu0 0.0
        %1791 = vmatmul.mubr.f32.gmra.mxu0 %v428
        %v1792 = vpop.f32.mrf.mxu0
        %v1793 = vadd.f32 0.0, %v1792
        %v1794 = vpop.f32.mrf.mxu0
        %1795 = vmatprep.mubr.f32.mxu0 0.0
        %1796 = vmatmul.mubr.f32.gmra.mxu0 %v430
        %v1797 = vpop.f32.mrf.mxu0
        %v1798 = vadd.f32 0.0, %v1797
        %v1799 = vpop.f32.mrf.mxu0
        %1800 = vmatprep.mubr.f32.mxu0 0.0
        %1801 = vmatmul.mubr.f32.gmra.mxu0 %v432
        %v1802 = vpop.f32.mrf.mxu0
        %v1803 = vadd.f32 0.0, %v1802
        %v1804 = vpop.f32.mrf.mxu0
        %1805 = vmatprep.mubr.f32.mxu0 0.0
        %1806 = vmatmul.mubr.f32.gmra.mxu0 %v434
        %v1807 = vpop.f32.mrf.mxu0
        %v1808 = vadd.f32 0.0, %v1807
        %v1809 = vpop.f32.mrf.mxu0
        %1810 = vmatprep.mubr.f32.mxu0 0.0
        %1811 = vmatmul.mubr.f32.gmra.mxu0 %v436
        %v1812 = vpop.f32.mrf.mxu0
        %v1813 = vadd.f32 0.0, %v1812
        %v1814 = vpop.f32.mrf.mxu0
        %1815 = vmatprep.mubr.f32.mxu0 0.0
        %1816 = vmatmul.mubr.f32.gmra.mxu0 %v438
        %v1817 = vpop.f32.mrf.mxu0
        %v1818 = vadd.f32 0.0, %v1817
        %v1819 = vpop.f32.mrf.mxu0
        %1820 = vmatprep.mubr.f32.mxu0 0.0
        %1821 = vmatmul.mubr.f32.gmra.mxu0 %v440
        %v1822 = vpop.f32.mrf.mxu0
        %v1823 = vadd.f32 0.0, %v1822
        %v1824 = vpop.f32.mrf.mxu0
        %1825 = vmatprep.mubr.f32.mxu0 0.0
        %1826 = vmatmul.mubr.f32.gmra.mxu0 %v442
        %v1827 = vpop.f32.mrf.mxu0
        %v1828 = vadd.f32 0.0, %v1827
        %v1829 = vpop.f32.mrf.mxu0
        %1830 = vmatprep.mubr.f32.mxu0 0.0
        %1831 = vmatmul.mubr.f32.gmra.mxu0 %v444
        %v1832 = vpop.f32.mrf.mxu0
        %v1833 = vadd.f32 0.0, %v1832
        %v1834 = vpop.f32.mrf.mxu0
        %1835 = vmatprep.mubr.f32.mxu0 0.0
        %1836 = vmatmul.mubr.f32.gmra.mxu0 %v446
        %v1837 = vpop.f32.mrf.mxu0
        %v1838 = vadd.f32 0.0, %v1837
        %v1839 = vpop.f32.mrf.mxu0
        %1840 = vmatprep.mubr.f32.mxu0 0.0
        %1841 = vmatmul.mubr.f32.gmra.mxu0 %v448
        %v1842 = vpop.f32.mrf.mxu0
        %v1843 = vadd.f32 0.0, %v1842
        %v1844 = vpop.f32.mrf.mxu0
        %1845 = vmatprep.mubr.f32.mxu0 0.0
        %1846 = vmatmul.mubr.f32.gmra.mxu0 %v450
        %v1847 = vpop.f32.mrf.mxu0
        %v1848 = vadd.f32 0.0, %v1847
        %v1849 = vpop.f32.mrf.mxu0
        %1850 = vmatprep.mubr.f32.mxu0 0.0
        %1851 = vmatmul.mubr.f32.gmra.mxu0 %v452
        %v1852 = vpop.f32.mrf.mxu0
        %v1853 = vadd.f32 0.0, %v1852
        %v1854 = vpop.f32.mrf.mxu0
        %1855 = vmatprep.mubr.f32.mxu0 0.0
        %1856 = vmatmul.mubr.f32.gmra.mxu0 %v454
        %v1857 = vpop.f32.mrf.mxu0
        %v1858 = vadd.f32 0.0, %v1857
        %v1859 = vpop.f32.mrf.mxu0
        %1860 = vmatprep.mubr.f32.mxu0 0.0
        %1861 = vmatmul.mubr.f32.gmra.mxu0 %v456
        %v1862 = vpop.f32.mrf.mxu0
        %v1863 = vadd.f32 0.0, %v1862
        %v1864 = vpop.f32.mrf.mxu0
        %1865 = vmatprep.mubr.f32.mxu0 0.0
        %1866 = vmatmul.mubr.f32.gmra.mxu0 %v458
        %v1867 = vpop.f32.mrf.mxu0
        %v1868 = vadd.f32 0.0, %v1867
        %v1869 = vpop.f32.mrf.mxu0
        %1870 = vmatprep.mubr.f32.mxu0 0.0
        %1871 = vmatmul.mubr.f32.gmra.mxu0 %v460
        %v1872 = vpop.f32.mrf.mxu0
        %v1873 = vadd.f32 0.0, %v1872
        %v1874 = vpop.f32.mrf.mxu0
        %1875 = vmatprep.mubr.f32.mxu0 0.0
        %1876 = vmatmul.mubr.f32.gmra.mxu0 %v462
        %v1877 = vpop.f32.mrf.mxu0
        %v1878 = vadd.f32 0.0, %v1877
        %v1879 = vpop.f32.mrf.mxu0
        %1880 = vmatprep.mubr.f32.mxu0 0.0
        %1881 = vmatmul.mubr.f32.gmra.mxu0 %v464
        %v1882 = vpop.f32.mrf.mxu0
        %v1883 = vadd.f32 0.0, %v1882
        %v1884 = vpop.f32.mrf.mxu0
        %1885 = vmatprep.mubr.f32.mxu0 0.0
        %1886 = vmatmul.mubr.f32.gmra.mxu0 %v466
        %v1887 = vpop.f32.mrf.mxu0
        %v1888 = vadd.f32 0.0, %v1887
        %v1889 = vpop.f32.mrf.mxu0
        %1890 = vmatprep.mubr.f32.mxu0 0.0
        %1891 = vmatmul.mubr.f32.gmra.mxu0 %v468
        %v1892 = vpop.f32.mrf.mxu0
        %v1893 = vadd.f32 0.0, %v1892
        %v1894 = vpop.f32.mrf.mxu0
        %1895 = vmatprep.mubr.f32.mxu0 0.0
        %1896 = vmatmul.mubr.f32.gmra.mxu0 %v1674
        %v1897 = vpop.f32.mrf.mxu0
        %v1898 = vadd.f32 0.0, %v1897
        %v1899 = vpop.f32.mrf.mxu0
        %1900 = vmatprep.mubr.f32.mxu0 0.0
        %1901 = vmatmul.mubr.f32.gmra.mxu0 %v1676
        %v1902 = vpop.f32.mrf.mxu0
        %v1903 = vadd.f32 0.0, %v1902
        %v1904 = vpop.f32.mrf.mxu0
        %1905 = vdwg.mxu0
        %v1906 = vadd.f32 %v1634, %v1748
        %v1907 = vadd.f32 %v1635, %v1753
        %v1908 = vadd.f32 %v1636, %v1758
        %v1909 = vadd.f32 %v1637, %v1763
        %v1910 = vadd.f32 %v1638, %v1768
        %v1911 = vadd.f32 %v1639, %v1773
        %v1912 = vadd.f32 %v1640, %v1778
        %v1913 = vadd.f32 %v1641, %v1783
        %v1914 = vadd.f32 %v1642, %v1788
        %v1915 = vadd.f32 %v1643, %v1793
        %v1916 = vadd.f32 %v1644, %v1798
        %v1917 = vadd.f32 %v1645, %v1803
        %v1918 = vadd.f32 %v1646, %v1808
        %v1919 = vadd.f32 %v1647, %v1813
        %v1920 = vadd.f32 %v1648, %v1818
        %v1921 = vadd.f32 %v1649, %v1823
        %v1922 = vadd.f32 %v1650, %v1828
        %v1923 = vadd.f32 %v1651, %v1833
        %v1924 = vadd.f32 %v1652, %v1838
        %v1925 = vadd.f32 %v1653, %v1843
        %v1926 = vadd.f32 %v1654, %v1848
        %v1927 = vadd.f32 %v1655, %v1853
        %v1928 = vadd.f32 %v1656, %v1858
        %v1929 = vadd.f32 %v1657, %v1863
        %v1930 = vadd.f32 %v1658, %v1868
        %v1931 = vadd.f32 %v1659, %v1873
        %v1932 = vadd.f32 %v1660, %v1878
        %v1933 = vadd.f32 %v1661, %v1883
        %v1934 = vadd.f32 %v1662, %v1888
        %v1935 = vadd.f32 %v1663, %v1893
        %v1936 = vadd.f32 %v1664, %v1898
        %v1937 = vadd.f32 %v1665, %v1903
        %v1938 = vrot.slane %v267, 2
        %v1939 = vrot.slane %v268, 2
        %v1940 = vsel %vm991, %v1938, %v1939
        %v1941 = vrot.slane %v269, 2
        %v1942 = vsel %vm991, %v1939, %v1941
        %s1943 = scalar_lea.vmem %s212, 20
        %v1944 = vld [vmem:[%s1943] sm:$0xf]
        %v1945 = vsel %vm405, %v1940, 0
        %v1947 = vsel %vm405, %v1942, 0
        %v1950 = vsel %vm470, %v1944, 0
        %1952 = vmatprep.subr.mxu0 0.0
        %1953 = vmatpush1.msra.mxu0 0.0
        %1954 = vmatprep.subr.mxu0 0.0
        %1955 = vmatpush1.msra.mxu0 0.0
        %1956 = vmatprep.subr.mxu0 0.0
        %1957 = vmatpush1.msra.mxu0 0.0
        %1958 = vmatprep.subr.mxu0 0.0
        %1959 = vmatpush1.msra.mxu0 0.0
        %1960 = vmatprep.subr.mxu0 0.0
        %1961 = vmatpush1.msra.mxu0 0.0
        %1962 = vmatprep.subr.mxu0 0.0
        %1963 = vmatpush1.msra.mxu0 0.0
        %1964 = vmatprep.subr.mxu0 0.0
        %1965 = vmatpush1.msra.mxu0 0.0
        %1966 = vmatprep.subr.mxu0 0.0
        %1967 = vmatpush1.msra.mxu0 0.0
        %1968 = vmatprep.subr.mxu0 0.0
        %1969 = vmatpush1.msra.mxu0 0.0
        %1970 = vmatprep.subr.mxu0 0.0
        %1971 = vmatpush1.msra.mxu0 0.0
        %1972 = vmatprep.subr.mxu0 0.0
        %1973 = vmatpush1.msra.mxu0 0.0
        %1974 = vmatprep.subr.mxu0 0.0
        %1975 = vmatpush1.msra.mxu0 0.0
        %1976 = vmatprep.subr.mxu0 0.0
        %1977 = vmatpush1.msra.mxu0 0.0
        %1978 = vmatprep.subr.mxu0 0.0
        %1979 = vmatpush1.msra.mxu0 0.0
        %1980 = vmatprep.subr.mxu0 0.0
        %1981 = vmatpush1.msra.mxu0 0.0
        %1982 = vmatprep.subr.mxu0 0.0
        %1983 = vmatpush1.msra.mxu0 %v1950
        %1984 = vmatprep.subr.mxu0 0.0
        %1985 = vmatpush2.msra.mxu0 0.0
        %1986 = vmatprep.subr.mxu0 0.0
        %1987 = vmatpush2.msra.mxu0 0.0
        %1988 = vmatprep.subr.mxu0 0.0
        %1989 = vmatpush2.msra.mxu0 0.0
        %1990 = vmatprep.subr.mxu0 0.0
        %1991 = vmatpush2.msra.mxu0 0.0
        %1992 = vmatprep.subr.mxu0 0.0
        %1993 = vmatpush2.msra.mxu0 0.0
        %1994 = vmatprep.subr.mxu0 0.0
        %1995 = vmatpush2.msra.mxu0 0.0
        %1996 = vmatprep.subr.mxu0 0.0
        %1997 = vmatpush2.msra.mxu0 0.0
        %1998 = vmatprep.subr.mxu0 0.0
        %1999 = vmatpush2.msra.mxu0 0.0
        %2000 = vmatprep.subr.mxu0 0.0
        %2001 = vmatpush2.msra.mxu0 0.0
        %2002 = vmatprep.subr.mxu0 0.0
        %2003 = vmatpush2.msra.mxu0 0.0
        %2004 = vmatprep.subr.mxu0 0.0
        %2005 = vmatpush2.msra.mxu0 0.0
        %2006 = vmatprep.subr.mxu0 0.0
        %2007 = vmatpush2.msra.mxu0 0.0
        %2008 = vmatprep.subr.mxu0 0.0
        %2009 = vmatpush2.msra.mxu0 0.0
        %2010 = vmatprep.subr.mxu0 0.0
        %2011 = vmatpush2.msra.mxu0 0.0
        %2012 = vmatprep.subr.mxu0 0.0
        %2013 = vmatpush2.msra.mxu0 0.0
        %2014 = vmatprep.subr.mxu0 0.0
        %2015 = vmatpush2.msra.mxu0 0.0
        %2016 = vmatprep.mubr.f32.mxu0 0.0
        %2017 = vmatmul.mubr.f32.gmra.mxu0 %v1078
        %v2018 = vpop.f32.mrf.mxu0
        %v2019 = vadd.f32 0.0, %v2018
        %v2020 = vpop.f32.mrf.mxu0
        %2021 = vmatprep.mubr.f32.mxu0 0.0
        %2022 = vmatmul.mubr.f32.gmra.mxu0 %v1080
        %v2023 = vpop.f32.mrf.mxu0
        %v2024 = vadd.f32 0.0, %v2023
        %v2025 = vpop.f32.mrf.mxu0
        %2026 = vmatprep.mubr.f32.mxu0 0.0
        %2027 = vmatmul.mubr.f32.gmra.mxu0 %v1082
        %v2028 = vpop.f32.mrf.mxu0
        %v2029 = vadd.f32 0.0, %v2028
        %v2030 = vpop.f32.mrf.mxu0
        %2031 = vmatprep.mubr.f32.mxu0 0.0
        %2032 = vmatmul.mubr.f32.gmra.mxu0 %v1084
        %v2033 = vpop.f32.mrf.mxu0
        %v2034 = vadd.f32 0.0, %v2033
        %v2035 = vpop.f32.mrf.mxu0
        %2036 = vmatprep.mubr.f32.mxu0 0.0
        %2037 = vmatmul.mubr.f32.gmra.mxu0 %v1086
        %v2038 = vpop.f32.mrf.mxu0
        %v2039 = vadd.f32 0.0, %v2038
        %v2040 = vpop.f32.mrf.mxu0
        %2041 = vmatprep.mubr.f32.mxu0 0.0
        %2042 = vmatmul.mubr.f32.gmra.mxu0 %v1088
        %v2043 = vpop.f32.mrf.mxu0
        %v2044 = vadd.f32 0.0, %v2043
        %v2045 = vpop.f32.mrf.mxu0
        %2046 = vmatprep.mubr.f32.mxu0 0.0
        %2047 = vmatmul.mubr.f32.gmra.mxu0 %v1090
        %v2048 = vpop.f32.mrf.mxu0
        %v2049 = vadd.f32 0.0, %v2048
        %v2050 = vpop.f32.mrf.mxu0
        %2051 = vmatprep.mubr.f32.mxu0 0.0
        %2052 = vmatmul.mubr.f32.gmra.mxu0 %v1092
        %v2053 = vpop.f32.mrf.mxu0
        %v2054 = vadd.f32 0.0, %v2053
        %v2055 = vpop.f32.mrf.mxu0
        %2056 = vmatprep.mubr.f32.mxu0 0.0
        %2057 = vmatmul.mubr.f32.gmra.mxu0 %v1094
        %v2058 = vpop.f32.mrf.mxu0
        %v2059 = vadd.f32 0.0, %v2058
        %v2060 = vpop.f32.mrf.mxu0
        %2061 = vmatprep.mubr.f32.mxu0 0.0
        %2062 = vmatmul.mubr.f32.gmra.mxu0 %v1096
        %v2063 = vpop.f32.mrf.mxu0
        %v2064 = vadd.f32 0.0, %v2063
        %v2065 = vpop.f32.mrf.mxu0
        %2066 = vmatprep.mubr.f32.mxu0 0.0
        %2067 = vmatmul.mubr.f32.gmra.mxu0 %v1098
        %v2068 = vpop.f32.mrf.mxu0
        %v2069 = vadd.f32 0.0, %v2068
        %v2070 = vpop.f32.mrf.mxu0
        %2071 = vmatprep.mubr.f32.mxu0 0.0
        %2072 = vmatmul.mubr.f32.gmra.mxu0 %v1100
        %v2073 = vpop.f32.mrf.mxu0
        %v2074 = vadd.f32 0.0, %v2073
        %v2075 = vpop.f32.mrf.mxu0
        %2076 = vmatprep.mubr.f32.mxu0 0.0
        %2077 = vmatmul.mubr.f32.gmra.mxu0 %v1102
        %v2078 = vpop.f32.mrf.mxu0
        %v2079 = vadd.f32 0.0, %v2078
        %v2080 = vpop.f32.mrf.mxu0
        %2081 = vmatprep.mubr.f32.mxu0 0.0
        %2082 = vmatmul.mubr.f32.gmra.mxu0 %v1104
        %v2083 = vpop.f32.mrf.mxu0
        %v2084 = vadd.f32 0.0, %v2083
        %v2085 = vpop.f32.mrf.mxu0
        %2086 = vmatprep.mubr.f32.mxu0 0.0
        %2087 = vmatmul.mubr.f32.gmra.mxu0 %v1106
        %v2088 = vpop.f32.mrf.mxu0
        %v2089 = vadd.f32 0.0, %v2088
        %v2090 = vpop.f32.mrf.mxu0
        %2091 = vmatprep.mubr.f32.mxu0 0.0
        %2092 = vmatmul.mubr.f32.gmra.mxu0 %v1108
        %v2093 = vpop.f32.mrf.mxu0
        %v2094 = vadd.f32 0.0, %v2093
        %v2095 = vpop.f32.mrf.mxu0
        %2096 = vmatprep.mubr.f32.mxu0 0.0
        %2097 = vmatmul.mubr.f32.gmra.mxu0 %v1110
        %v2098 = vpop.f32.mrf.mxu0
        %v2099 = vadd.f32 0.0, %v2098
        %v2100 = vpop.f32.mrf.mxu0
        %2101 = vmatprep.mubr.f32.mxu0 0.0
        %2102 = vmatmul.mubr.f32.gmra.mxu0 %v1112
        %v2103 = vpop.f32.mrf.mxu0
        %v2104 = vadd.f32 0.0, %v2103
        %v2105 = vpop.f32.mrf.mxu0
        %2106 = vmatprep.mubr.f32.mxu0 0.0
        %2107 = vmatmul.mubr.f32.gmra.mxu0 %v1114
        %v2108 = vpop.f32.mrf.mxu0
        %v2109 = vadd.f32 0.0, %v2108
        %v2110 = vpop.f32.mrf.mxu0
        %2111 = vmatprep.mubr.f32.mxu0 0.0
        %2112 = vmatmul.mubr.f32.gmra.mxu0 %v1116
        %v2113 = vpop.f32.mrf.mxu0
        %v2114 = vadd.f32 0.0, %v2113
        %v2115 = vpop.f32.mrf.mxu0
        %2116 = vmatprep.mubr.f32.mxu0 0.0
        %2117 = vmatmul.mubr.f32.gmra.mxu0 %v1118
        %v2118 = vpop.f32.mrf.mxu0
        %v2119 = vadd.f32 0.0, %v2118
        %v2120 = vpop.f32.mrf.mxu0
        %2121 = vmatprep.mubr.f32.mxu0 0.0
        %2122 = vmatmul.mubr.f32.gmra.mxu0 %v1120
        %v2123 = vpop.f32.mrf.mxu0
        %v2124 = vadd.f32 0.0, %v2123
        %v2125 = vpop.f32.mrf.mxu0
        %2126 = vmatprep.mubr.f32.mxu0 0.0
        %2127 = vmatmul.mubr.f32.gmra.mxu0 %v1122
        %v2128 = vpop.f32.mrf.mxu0
        %v2129 = vadd.f32 0.0, %v2128
        %v2130 = vpop.f32.mrf.mxu0
        %2131 = vmatprep.mubr.f32.mxu0 0.0
        %2132 = vmatmul.mubr.f32.gmra.mxu0 %v1124
        %v2133 = vpop.f32.mrf.mxu0
        %v2134 = vadd.f32 0.0, %v2133
        %v2135 = vpop.f32.mrf.mxu0
        %2136 = vmatprep.mubr.f32.mxu0 0.0
        %2137 = vmatmul.mubr.f32.gmra.mxu0 %v1126
        %v2138 = vpop.f32.mrf.mxu0
        %v2139 = vadd.f32 0.0, %v2138
        %v2140 = vpop.f32.mrf.mxu0
        %2141 = vmatprep.mubr.f32.mxu0 0.0
        %2142 = vmatmul.mubr.f32.gmra.mxu0 %v1128
        %v2143 = vpop.f32.mrf.mxu0
        %v2144 = vadd.f32 0.0, %v2143
        %v2145 = vpop.f32.mrf.mxu0
        %2146 = vmatprep.mubr.f32.mxu0 0.0
        %2147 = vmatmul.mubr.f32.gmra.mxu0 %v1130
        %v2148 = vpop.f32.mrf.mxu0
        %v2149 = vadd.f32 0.0, %v2148
        %v2150 = vpop.f32.mrf.mxu0
        %2151 = vmatprep.mubr.f32.mxu0 0.0
        %2152 = vmatmul.mubr.f32.gmra.mxu0 %v1132
        %v2153 = vpop.f32.mrf.mxu0
        %v2154 = vadd.f32 0.0, %v2153
        %v2155 = vpop.f32.mrf.mxu0
        %2156 = vmatprep.mubr.f32.mxu0 0.0
        %2157 = vmatmul.mubr.f32.gmra.mxu0 %v1134
        %v2158 = vpop.f32.mrf.mxu0
        %v2159 = vadd.f32 0.0, %v2158
        %v2160 = vpop.f32.mrf.mxu0
        %2161 = vmatprep.mubr.f32.mxu0 0.0
        %2162 = vmatmul.mubr.f32.gmra.mxu0 %v1136
        %v2163 = vpop.f32.mrf.mxu0
        %v2164 = vadd.f32 0.0, %v2163
        %v2165 = vpop.f32.mrf.mxu0
        %2166 = vmatprep.mubr.f32.mxu0 0.0
        %2167 = vmatmul.mubr.f32.gmra.mxu0 %v1945
        %v2168 = vpop.f32.mrf.mxu0
        %v2169 = vadd.f32 0.0, %v2168
        %v2170 = vpop.f32.mrf.mxu0
        %2171 = vmatprep.mubr.f32.mxu0 0.0
        %2172 = vmatmul.mubr.f32.gmra.mxu0 %v1947
        %v2173 = vpop.f32.mrf.mxu0
        %v2174 = vadd.f32 0.0, %v2173
        %v2175 = vpop.f32.mrf.mxu0
        %2176 = vdwg.mxu0
        %v2177 = vadd.f32 %v1906, %v2019
        %v2178 = vadd.f32 %v1907, %v2024
        %v2179 = vadd.f32 %v1908, %v2029
        %v2180 = vadd.f32 %v1909, %v2034
        %v2181 = vadd.f32 %v1910, %v2039
        %v2182 = vadd.f32 %v1911, %v2044
        %v2183 = vadd.f32 %v1912, %v2049
        %v2184 = vadd.f32 %v1913, %v2054
        %v2185 = vadd.f32 %v1914, %v2059
        %v2186 = vadd.f32 %v1915, %v2064
        %v2187 = vadd.f32 %v1916, %v2069
        %v2188 = vadd.f32 %v1917, %v2074
        %v2189 = vadd.f32 %v1918, %v2079
        %v2190 = vadd.f32 %v1919, %v2084
        %v2191 = vadd.f32 %v1920, %v2089
        %v2192 = vadd.f32 %v1921, %v2094
        %v2193 = vadd.f32 %v1922, %v2099
        %v2194 = vadd.f32 %v1923, %v2104
        %v2195 = vadd.f32 %v1924, %v2109
        %v2196 = vadd.f32 %v1925, %v2114
        %v2197 = vadd.f32 %v1926, %v2119
        %v2198 = vadd.f32 %v1927, %v2124
        %v2199 = vadd.f32 %v1928, %v2129
        %v2200 = vadd.f32 %v1929, %v2134
        %v2201 = vadd.f32 %v1930, %v2139
        %v2202 = vadd.f32 %v1931, %v2144
        %v2203 = vadd.f32 %v1932, %v2149
        %v2204 = vadd.f32 %v1933, %v2154
        %v2205 = vadd.f32 %v1934, %v2159
        %v2206 = vadd.f32 %v1935, %v2164
        %v2207 = vadd.f32 %v1936, %v2169
        %v2208 = vadd.f32 %v1937, %v2174
        %s2209 = scalar_lea.vmem %s212, 24
        %v2210 = vld [vmem:[%s2209] sm:$0xf]
        %v2212 = vsel %vm405, %v270, 0
        %v2215 = vsel %vm405, %v271, 0
        %v2218 = vsel %vm470, %v2210, 0
        %2220 = vmatprep.subr.mxu0 0.0
        %2221 = vmatpush1.msra.mxu0 0.0
        %2222 = vmatprep.subr.mxu0 0.0
        %2223 = vmatpush1.msra.mxu0 0.0
        %2224 = vmatprep.subr.mxu0 0.0
        %2225 = vmatpush1.msra.mxu0 0.0
        %2226 = vmatprep.subr.mxu0 0.0
        %2227 = vmatpush1.msra.mxu0 0.0
        %2228 = vmatprep.subr.mxu0 0.0
        %2229 = vmatpush1.msra.mxu0 0.0
        %2230 = vmatprep.subr.mxu0 0.0
        %2231 = vmatpush1.msra.mxu0 0.0
        %2232 = vmatprep.subr.mxu0 0.0
        %2233 = vmatpush1.msra.mxu0 0.0
        %2234 = vmatprep.subr.mxu0 0.0
        %2235 = vmatpush1.msra.mxu0 0.0
        %2236 = vmatprep.subr.mxu0 0.0
        %2237 = vmatpush1.msra.mxu0 0.0
        %2238 = vmatprep.subr.mxu0 0.0
        %2239 = vmatpush1.msra.mxu0 0.0
        %2240 = vmatprep.subr.mxu0 0.0
        %2241 = vmatpush1.msra.mxu0 0.0
        %2242 = vmatprep.subr.mxu0 0.0
        %2243 = vmatpush1.msra.mxu0 0.0
        %2244 = vmatprep.subr.mxu0 0.0
        %2245 = vmatpush1.msra.mxu0 0.0
        %2246 = vmatprep.subr.mxu0 0.0
        %2247 = vmatpush1.msra.mxu0 0.0
        %2248 = vmatprep.subr.mxu0 0.0
        %2249 = vmatpush1.msra.mxu0 0.0
        %2250 = vmatprep.subr.mxu0 0.0
        %2251 = vmatpush1.msra.mxu0 %v2218
        %2252 = vmatprep.subr.mxu0 0.0
        %2253 = vmatpush2.msra.mxu0 0.0
        %2254 = vmatprep.subr.mxu0 0.0
        %2255 = vmatpush2.msra.mxu0 0.0
        %2256 = vmatprep.subr.mxu0 0.0
        %2257 = vmatpush2.msra.mxu0 0.0
        %2258 = vmatprep.subr.mxu0 0.0
        %2259 = vmatpush2.msra.mxu0 0.0
        %2260 = vmatprep.subr.mxu0 0.0
        %2261 = vmatpush2.msra.mxu0 0.0
        %2262 = vmatprep.subr.mxu0 0.0
        %2263 = vmatpush2.msra.mxu0 0.0
        %2264 = vmatprep.subr.mxu0 0.0
        %2265 = vmatpush2.msra.mxu0 0.0
        %2266 = vmatprep.subr.mxu0 0.0
        %2267 = vmatpush2.msra.mxu0 0.0
        %2268 = vmatprep.subr.mxu0 0.0
        %2269 = vmatpush2.msra.mxu0 0.0
        %2270 = vmatprep.subr.mxu0 0.0
        %2271 = vmatpush2.msra.mxu0 0.0
        %2272 = vmatprep.subr.mxu0 0.0
        %2273 = vmatpush2.msra.mxu0 0.0
        %2274 = vmatprep.subr.mxu0 0.0
        %2275 = vmatpush2.msra.mxu0 0.0
        %2276 = vmatprep.subr.mxu0 0.0
        %2277 = vmatpush2.msra.mxu0 0.0
        %2278 = vmatprep.subr.mxu0 0.0
        %2279 = vmatpush2.msra.mxu0 0.0
        %2280 = vmatprep.subr.mxu0 0.0
        %2281 = vmatpush2.msra.mxu0 0.0
        %2282 = vmatprep.subr.mxu0 0.0
        %2283 = vmatpush2.msra.mxu0 0.0
        %2284 = vmatprep.mubr.f32.mxu0 0.0
        %2285 = vmatmul.mubr.f32.gmra.mxu0 %v707
        %v2286 = vpop.f32.mrf.mxu0
        %v2287 = vadd.f32 0.0, %v2286
        %v2288 = vpop.f32.mrf.mxu0
        %2289 = vmatprep.mubr.f32.mxu0 0.0
        %2290 = vmatmul.mubr.f32.gmra.mxu0 %v709
        %v2291 = vpop.f32.mrf.mxu0
        %v2292 = vadd.f32 0.0, %v2291
        %v2293 = vpop.f32.mrf.mxu0
        %2294 = vmatprep.mubr.f32.mxu0 0.0
        %2295 = vmatmul.mubr.f32.gmra.mxu0 %v711
        %v2296 = vpop.f32.mrf.mxu0
        %v2297 = vadd.f32 0.0, %v2296
        %v2298 = vpop.f32.mrf.mxu0
        %2299 = vmatprep.mubr.f32.mxu0 0.0
        %2300 = vmatmul.mubr.f32.gmra.mxu0 %v713
        %v2301 = vpop.f32.mrf.mxu0
        %v2302 = vadd.f32 0.0, %v2301
        %v2303 = vpop.f32.mrf.mxu0
        %2304 = vmatprep.mubr.f32.mxu0 0.0
        %2305 = vmatmul.mubr.f32.gmra.mxu0 %v715
        %v2306 = vpop.f32.mrf.mxu0
        %v2307 = vadd.f32 0.0, %v2306
        %v2308 = vpop.f32.mrf.mxu0
        %2309 = vmatprep.mubr.f32.mxu0 0.0
        %2310 = vmatmul.mubr.f32.gmra.mxu0 %v717
        %v2311 = vpop.f32.mrf.mxu0
        %v2312 = vadd.f32 0.0, %v2311
        %v2313 = vpop.f32.mrf.mxu0
        %2314 = vmatprep.mubr.f32.mxu0 0.0
        %2315 = vmatmul.mubr.f32.gmra.mxu0 %v719
        %v2316 = vpop.f32.mrf.mxu0
        %v2317 = vadd.f32 0.0, %v2316
        %v2318 = vpop.f32.mrf.mxu0
        %2319 = vmatprep.mubr.f32.mxu0 0.0
        %2320 = vmatmul.mubr.f32.gmra.mxu0 %v721
        %v2321 = vpop.f32.mrf.mxu0
        %v2322 = vadd.f32 0.0, %v2321
        %v2323 = vpop.f32.mrf.mxu0
        %2324 = vmatprep.mubr.f32.mxu0 0.0
        %2325 = vmatmul.mubr.f32.gmra.mxu0 %v723
        %v2326 = vpop.f32.mrf.mxu0
        %v2327 = vadd.f32 0.0, %v2326
        %v2328 = vpop.f32.mrf.mxu0
        %2329 = vmatprep.mubr.f32.mxu0 0.0
        %2330 = vmatmul.mubr.f32.gmra.mxu0 %v725
        %v2331 = vpop.f32.mrf.mxu0
        %v2332 = vadd.f32 0.0, %v2331
        %v2333 = vpop.f32.mrf.mxu0
        %2334 = vmatprep.mubr.f32.mxu0 0.0
        %2335 = vmatmul.mubr.f32.gmra.mxu0 %v727
        %v2336 = vpop.f32.mrf.mxu0
        %v2337 = vadd.f32 0.0, %v2336
        %v2338 = vpop.f32.mrf.mxu0
        %2339 = vmatprep.mubr.f32.mxu0 0.0
        %2340 = vmatmul.mubr.f32.gmra.mxu0 %v729
        %v2341 = vpop.f32.mrf.mxu0
        %v2342 = vadd.f32 0.0, %v2341
        %v2343 = vpop.f32.mrf.mxu0
        %2344 = vmatprep.mubr.f32.mxu0 0.0
        %2345 = vmatmul.mubr.f32.gmra.mxu0 %v731
        %v2346 = vpop.f32.mrf.mxu0
        %v2347 = vadd.f32 0.0, %v2346
        %v2348 = vpop.f32.mrf.mxu0
        %2349 = vmatprep.mubr.f32.mxu0 0.0
        %2350 = vmatmul.mubr.f32.gmra.mxu0 %v733
        %v2351 = vpop.f32.mrf.mxu0
        %v2352 = vadd.f32 0.0, %v2351
        %v2353 = vpop.f32.mrf.mxu0
        %2354 = vmatprep.mubr.f32.mxu0 0.0
        %2355 = vmatmul.mubr.f32.gmra.mxu0 %v735
        %v2356 = vpop.f32.mrf.mxu0
        %v2357 = vadd.f32 0.0, %v2356
        %v2358 = vpop.f32.mrf.mxu0
        %2359 = vmatprep.mubr.f32.mxu0 0.0
        %2360 = vmatmul.mubr.f32.gmra.mxu0 %v737
        %v2361 = vpop.f32.mrf.mxu0
        %v2362 = vadd.f32 0.0, %v2361
        %v2363 = vpop.f32.mrf.mxu0
        %2364 = vmatprep.mubr.f32.mxu0 0.0
        %2365 = vmatmul.mubr.f32.gmra.mxu0 %v739
        %v2366 = vpop.f32.mrf.mxu0
        %v2367 = vadd.f32 0.0, %v2366
        %v2368 = vpop.f32.mrf.mxu0
        %2369 = vmatprep.mubr.f32.mxu0 0.0
        %2370 = vmatmul.mubr.f32.gmra.mxu0 %v741
        %v2371 = vpop.f32.mrf.mxu0
        %v2372 = vadd.f32 0.0, %v2371
        %v2373 = vpop.f32.mrf.mxu0
        %2374 = vmatprep.mubr.f32.mxu0 0.0
        %2375 = vmatmul.mubr.f32.gmra.mxu0 %v743
        %v2376 = vpop.f32.mrf.mxu0
        %v2377 = vadd.f32 0.0, %v2376
        %v2378 = vpop.f32.mrf.mxu0
        %2379 = vmatprep.mubr.f32.mxu0 0.0
        %2380 = vmatmul.mubr.f32.gmra.mxu0 %v745
        %v2381 = vpop.f32.mrf.mxu0
        %v2382 = vadd.f32 0.0, %v2381
        %v2383 = vpop.f32.mrf.mxu0
        %2384 = vmatprep.mubr.f32.mxu0 0.0
        %2385 = vmatmul.mubr.f32.gmra.mxu0 %v747
        %v2386 = vpop.f32.mrf.mxu0
        %v2387 = vadd.f32 0.0, %v2386
        %v2388 = vpop.f32.mrf.mxu0
        %2389 = vmatprep.mubr.f32.mxu0 0.0
        %2390 = vmatmul.mubr.f32.gmra.mxu0 %v749
        %v2391 = vpop.f32.mrf.mxu0
        %v2392 = vadd.f32 0.0, %v2391
        %v2393 = vpop.f32.mrf.mxu0
        %2394 = vmatprep.mubr.f32.mxu0 0.0
        %2395 = vmatmul.mubr.f32.gmra.mxu0 %v751
        %v2396 = vpop.f32.mrf.mxu0
        %v2397 = vadd.f32 0.0, %v2396
        %v2398 = vpop.f32.mrf.mxu0
        %2399 = vmatprep.mubr.f32.mxu0 0.0
        %2400 = vmatmul.mubr.f32.gmra.mxu0 %v753
        %v2401 = vpop.f32.mrf.mxu0
        %v2402 = vadd.f32 0.0, %v2401
        %v2403 = vpop.f32.mrf.mxu0
        %2404 = vmatprep.mubr.f32.mxu0 0.0
        %2405 = vmatmul.mubr.f32.gmra.mxu0 %v755
        %v2406 = vpop.f32.mrf.mxu0
        %v2407 = vadd.f32 0.0, %v2406
        %v2408 = vpop.f32.mrf.mxu0
        %2409 = vmatprep.mubr.f32.mxu0 0.0
        %2410 = vmatmul.mubr.f32.gmra.mxu0 %v757
        %v2411 = vpop.f32.mrf.mxu0
        %v2412 = vadd.f32 0.0, %v2411
        %v2413 = vpop.f32.mrf.mxu0
        %2414 = vmatprep.mubr.f32.mxu0 0.0
        %2415 = vmatmul.mubr.f32.gmra.mxu0 %v759
        %v2416 = vpop.f32.mrf.mxu0
        %v2417 = vadd.f32 0.0, %v2416
        %v2418 = vpop.f32.mrf.mxu0
        %2419 = vmatprep.mubr.f32.mxu0 0.0
        %2420 = vmatmul.mubr.f32.gmra.mxu0 %v761
        %v2421 = vpop.f32.mrf.mxu0
        %v2422 = vadd.f32 0.0, %v2421
        %v2423 = vpop.f32.mrf.mxu0
        %2424 = vmatprep.mubr.f32.mxu0 0.0
        %2425 = vmatmul.mubr.f32.gmra.mxu0 %v1401
        %v2426 = vpop.f32.mrf.mxu0
        %v2427 = vadd.f32 0.0, %v2426
        %v2428 = vpop.f32.mrf.mxu0
        %2429 = vmatprep.mubr.f32.mxu0 0.0
        %2430 = vmatmul.mubr.f32.gmra.mxu0 %v1404
        %v2431 = vpop.f32.mrf.mxu0
        %v2432 = vadd.f32 0.0, %v2431
        %v2433 = vpop.f32.mrf.mxu0
        %2434 = vmatprep.mubr.f32.mxu0 0.0
        %2435 = vmatmul.mubr.f32.gmra.mxu0 %v2212
        %v2436 = vpop.f32.mrf.mxu0
        %v2437 = vadd.f32 0.0, %v2436
        %v2438 = vpop.f32.mrf.mxu0
        %2439 = vmatprep.mubr.f32.mxu0 0.0
        %2440 = vmatmul.mubr.f32.gmra.mxu0 %v2215
        %v2441 = vpop.f32.mrf.mxu0
        %v2442 = vadd.f32 0.0, %v2441
        %v2443 = vpop.f32.mrf.mxu0
        %2444 = vdwg.mxu0
        %v2445 = vadd.f32 %v2177, %v2287
        %v2446 = vadd.f32 %v2178, %v2292
        %v2447 = vadd.f32 %v2179, %v2297
        %v2448 = vadd.f32 %v2180, %v2302
        %v2449 = vadd.f32 %v2181, %v2307
        %v2450 = vadd.f32 %v2182, %v2312
        %v2451 = vadd.f32 %v2183, %v2317
        %v2452 = vadd.f32 %v2184, %v2322
        %v2453 = vadd.f32 %v2185, %v2327
        %v2454 = vadd.f32 %v2186, %v2332
        %v2455 = vadd.f32 %v2187, %v2337
        %v2456 = vadd.f32 %v2188, %v2342
        %v2457 = vadd.f32 %v2189, %v2347
        %v2458 = vadd.f32 %v2190, %v2352
        %v2459 = vadd.f32 %v2191, %v2357
        %v2460 = vadd.f32 %v2192, %v2362
        %v2461 = vadd.f32 %v2193, %v2367
        %v2462 = vadd.f32 %v2194, %v2372
        %v2463 = vadd.f32 %v2195, %v2377
        %v2464 = vadd.f32 %v2196, %v2382
        %v2465 = vadd.f32 %v2197, %v2387
        %v2466 = vadd.f32 %v2198, %v2392
        %v2467 = vadd.f32 %v2199, %v2397
        %v2468 = vadd.f32 %v2200, %v2402
        %v2469 = vadd.f32 %v2201, %v2407
        %v2470 = vadd.f32 %v2202, %v2412
        %v2471 = vadd.f32 %v2203, %v2417
        %v2472 = vadd.f32 %v2204, %v2422
        %v2473 = vadd.f32 %v2205, %v2427
        %v2474 = vadd.f32 %v2206, %v2432
        %v2475 = vadd.f32 %v2207, %v2437
        %v2476 = vadd.f32 %v2208, %v2442
        %v2478 = vrot.slane %v270, 1
        %v2479 = vrot.slane %v271, 1
        %v2480 = vsel %vm322, %v2478, %v2479
        %v2481 = vrot.slane %v272, 1
        %v2482 = vsel %vm322, %v2479, %v2481
        %s2483 = scalar_lea.vmem %s212, 28
        %v2484 = vld [vmem:[%s2483] sm:$0xf]
        %v2485 = vsel %vm405, %v2480, 0
        %v2487 = vsel %vm405, %v2482, 0
        %v2490 = vsel %vm470, %v2484, 0
        %2492 = vmatprep.subr.mxu0 0.0
        %2493 = vmatpush1.msra.mxu0 0.0
        %2494 = vmatprep.subr.mxu0 0.0
        %2495 = vmatpush1.msra.mxu0 0.0
        %2496 = vmatprep.subr.mxu0 0.0
        %2497 = vmatpush1.msra.mxu0 0.0
        %2498 = vmatprep.subr.mxu0 0.0
        %2499 = vmatpush1.msra.mxu0 0.0
        %2500 = vmatprep.subr.mxu0 0.0
        %2501 = vmatpush1.msra.mxu0 0.0
        %2502 = vmatprep.subr.mxu0 0.0
        %2503 = vmatpush1.msra.mxu0 0.0
        %2504 = vmatprep.subr.mxu0 0.0
        %2505 = vmatpush1.msra.mxu0 0.0
        %2506 = vmatprep.subr.mxu0 0.0
        %2507 = vmatpush1.msra.mxu0 0.0
        %2508 = vmatprep.subr.mxu0 0.0
        %2509 = vmatpush1.msra.mxu0 0.0
        %2510 = vmatprep.subr.mxu0 0.0
        %2511 = vmatpush1.msra.mxu0 0.0
        %2512 = vmatprep.subr.mxu0 0.0
        %2513 = vmatpush1.msra.mxu0 0.0
        %2514 = vmatprep.subr.mxu0 0.0
        %2515 = vmatpush1.msra.mxu0 0.0
        %2516 = vmatprep.subr.mxu0 0.0
        %2517 = vmatpush1.msra.mxu0 0.0
        %2518 = vmatprep.subr.mxu0 0.0
        %2519 = vmatpush1.msra.mxu0 0.0
        %2520 = vmatprep.subr.mxu0 0.0
        %2521 = vmatpush1.msra.mxu0 0.0
        %2522 = vmatprep.subr.mxu0 0.0
        %2523 = vmatpush1.msra.mxu0 %v2490
        %2524 = vmatprep.subr.mxu0 0.0
        %2525 = vmatpush2.msra.mxu0 0.0
        %2526 = vmatprep.subr.mxu0 0.0
        %2527 = vmatpush2.msra.mxu0 0.0
        %2528 = vmatprep.subr.mxu0 0.0
        %2529 = vmatpush2.msra.mxu0 0.0
        %2530 = vmatprep.subr.mxu0 0.0
        %2531 = vmatpush2.msra.mxu0 0.0
        %2532 = vmatprep.subr.mxu0 0.0
        %2533 = vmatpush2.msra.mxu0 0.0
        %2534 = vmatprep.subr.mxu0 0.0
        %2535 = vmatpush2.msra.mxu0 0.0
        %2536 = vmatprep.subr.mxu0 0.0
        %2537 = vmatpush2.msra.mxu0 0.0
        %2538 = vmatprep.subr.mxu0 0.0
        %2539 = vmatpush2.msra.mxu0 0.0
        %2540 = vmatprep.subr.mxu0 0.0
        %2541 = vmatpush2.msra.mxu0 0.0
        %2542 = vmatprep.subr.mxu0 0.0
        %2543 = vmatpush2.msra.mxu0 0.0
        %2544 = vmatprep.subr.mxu0 0.0
        %2545 = vmatpush2.msra.mxu0 0.0
        %2546 = vmatprep.subr.mxu0 0.0
        %2547 = vmatpush2.msra.mxu0 0.0
        %2548 = vmatprep.subr.mxu0 0.0
        %2549 = vmatpush2.msra.mxu0 0.0
        %2550 = vmatprep.subr.mxu0 0.0
        %2551 = vmatpush2.msra.mxu0 0.0
        %2552 = vmatprep.subr.mxu0 0.0
        %2553 = vmatpush2.msra.mxu0 0.0
        %2554 = vmatprep.subr.mxu0 0.0
        %2555 = vmatpush2.msra.mxu0 0.0
        %2556 = vmatprep.mubr.f32.mxu0 0.0
        %2557 = vmatmul.mubr.f32.gmra.mxu0 %v414
        %v2558 = vpop.f32.mrf.mxu0
        %v2559 = vadd.f32 0.0, %v2558
        %v2560 = vpop.f32.mrf.mxu0
        %2561 = vmatprep.mubr.f32.mxu0 0.0
        %2562 = vmatmul.mubr.f32.gmra.mxu0 %v416
        %v2563 = vpop.f32.mrf.mxu0
        %v2564 = vadd.f32 0.0, %v2563
        %v2565 = vpop.f32.mrf.mxu0
        %2566 = vmatprep.mubr.f32.mxu0 0.0
        %2567 = vmatmul.mubr.f32.gmra.mxu0 %v418
        %v2568 = vpop.f32.mrf.mxu0
        %v2569 = vadd.f32 0.0, %v2568
        %v2570 = vpop.f32.mrf.mxu0
        %2571 = vmatprep.mubr.f32.mxu0 0.0
        %2572 = vmatmul.mubr.f32.gmra.mxu0 %v420
        %v2573 = vpop.f32.mrf.mxu0
        %v2574 = vadd.f32 0.0, %v2573
        %v2575 = vpop.f32.mrf.mxu0
        %2576 = vmatprep.mubr.f32.mxu0 0.0
        %2577 = vmatmul.mubr.f32.gmra.mxu0 %v422
        %v2578 = vpop.f32.mrf.mxu0
        %v2579 = vadd.f32 0.0, %v2578
        %v2580 = vpop.f32.mrf.mxu0
        %2581 = vmatprep.mubr.f32.mxu0 0.0
        %2582 = vmatmul.mubr.f32.gmra.mxu0 %v424
        %v2583 = vpop.f32.mrf.mxu0
        %v2584 = vadd.f32 0.0, %v2583
        %v2585 = vpop.f32.mrf.mxu0
        %2586 = vmatprep.mubr.f32.mxu0 0.0
        %2587 = vmatmul.mubr.f32.gmra.mxu0 %v426
        %v2588 = vpop.f32.mrf.mxu0
        %v2589 = vadd.f32 0.0, %v2588
        %v2590 = vpop.f32.mrf.mxu0
        %2591 = vmatprep.mubr.f32.mxu0 0.0
        %2592 = vmatmul.mubr.f32.gmra.mxu0 %v428
        %v2593 = vpop.f32.mrf.mxu0
        %v2594 = vadd.f32 0.0, %v2593
        %v2595 = vpop.f32.mrf.mxu0
        %2596 = vmatprep.mubr.f32.mxu0 0.0
        %2597 = vmatmul.mubr.f32.gmra.mxu0 %v430
        %v2598 = vpop.f32.mrf.mxu0
        %v2599 = vadd.f32 0.0, %v2598
        %v2600 = vpop.f32.mrf.mxu0
        %2601 = vmatprep.mubr.f32.mxu0 0.0
        %2602 = vmatmul.mubr.f32.gmra.mxu0 %v432
        %v2603 = vpop.f32.mrf.mxu0
        %v2604 = vadd.f32 0.0, %v2603
        %v2605 = vpop.f32.mrf.mxu0
        %2606 = vmatprep.mubr.f32.mxu0 0.0
        %2607 = vmatmul.mubr.f32.gmra.mxu0 %v434
        %v2608 = vpop.f32.mrf.mxu0
        %v2609 = vadd.f32 0.0, %v2608
        %v2610 = vpop.f32.mrf.mxu0
        %2611 = vmatprep.mubr.f32.mxu0 0.0
        %2612 = vmatmul.mubr.f32.gmra.mxu0 %v436
        %v2613 = vpop.f32.mrf.mxu0
        %v2614 = vadd.f32 0.0, %v2613
        %v2615 = vpop.f32.mrf.mxu0
        %2616 = vmatprep.mubr.f32.mxu0 0.0
        %2617 = vmatmul.mubr.f32.gmra.mxu0 %v438
        %v2618 = vpop.f32.mrf.mxu0
        %v2619 = vadd.f32 0.0, %v2618
        %v2620 = vpop.f32.mrf.mxu0
        %2621 = vmatprep.mubr.f32.mxu0 0.0
        %2622 = vmatmul.mubr.f32.gmra.mxu0 %v440
        %v2623 = vpop.f32.mrf.mxu0
        %v2624 = vadd.f32 0.0, %v2623
        %v2625 = vpop.f32.mrf.mxu0
        %2626 = vmatprep.mubr.f32.mxu0 0.0
        %2627 = vmatmul.mubr.f32.gmra.mxu0 %v442
        %v2628 = vpop.f32.mrf.mxu0
        %v2629 = vadd.f32 0.0, %v2628
        %v2630 = vpop.f32.mrf.mxu0
        %2631 = vmatprep.mubr.f32.mxu0 0.0
        %2632 = vmatmul.mubr.f32.gmra.mxu0 %v444
        %v2633 = vpop.f32.mrf.mxu0
        %v2634 = vadd.f32 0.0, %v2633
        %v2635 = vpop.f32.mrf.mxu0
        %2636 = vmatprep.mubr.f32.mxu0 0.0
        %2637 = vmatmul.mubr.f32.gmra.mxu0 %v446
        %v2638 = vpop.f32.mrf.mxu0
        %v2639 = vadd.f32 0.0, %v2638
        %v2640 = vpop.f32.mrf.mxu0
        %2641 = vmatprep.mubr.f32.mxu0 0.0
        %2642 = vmatmul.mubr.f32.gmra.mxu0 %v448
        %v2643 = vpop.f32.mrf.mxu0
        %v2644 = vadd.f32 0.0, %v2643
        %v2645 = vpop.f32.mrf.mxu0
        %2646 = vmatprep.mubr.f32.mxu0 0.0
        %2647 = vmatmul.mubr.f32.gmra.mxu0 %v450
        %v2648 = vpop.f32.mrf.mxu0
        %v2649 = vadd.f32 0.0, %v2648
        %v2650 = vpop.f32.mrf.mxu0
        %2651 = vmatprep.mubr.f32.mxu0 0.0
        %2652 = vmatmul.mubr.f32.gmra.mxu0 %v452
        %v2653 = vpop.f32.mrf.mxu0
        %v2654 = vadd.f32 0.0, %v2653
        %v2655 = vpop.f32.mrf.mxu0
        %2656 = vmatprep.mubr.f32.mxu0 0.0
        %2657 = vmatmul.mubr.f32.gmra.mxu0 %v454
        %v2658 = vpop.f32.mrf.mxu0
        %v2659 = vadd.f32 0.0, %v2658
        %v2660 = vpop.f32.mrf.mxu0
        %2661 = vmatprep.mubr.f32.mxu0 0.0
        %2662 = vmatmul.mubr.f32.gmra.mxu0 %v456
        %v2663 = vpop.f32.mrf.mxu0
        %v2664 = vadd.f32 0.0, %v2663
        %v2665 = vpop.f32.mrf.mxu0
        %2666 = vmatprep.mubr.f32.mxu0 0.0
        %2667 = vmatmul.mubr.f32.gmra.mxu0 %v458
        %v2668 = vpop.f32.mrf.mxu0
        %v2669 = vadd.f32 0.0, %v2668
        %v2670 = vpop.f32.mrf.mxu0
        %2671 = vmatprep.mubr.f32.mxu0 0.0
        %2672 = vmatmul.mubr.f32.gmra.mxu0 %v460
        %v2673 = vpop.f32.mrf.mxu0
        %v2674 = vadd.f32 0.0, %v2673
        %v2675 = vpop.f32.mrf.mxu0
        %2676 = vmatprep.mubr.f32.mxu0 0.0
        %2677 = vmatmul.mubr.f32.gmra.mxu0 %v462
        %v2678 = vpop.f32.mrf.mxu0
        %v2679 = vadd.f32 0.0, %v2678
        %v2680 = vpop.f32.mrf.mxu0
        %2681 = vmatprep.mubr.f32.mxu0 0.0
        %2682 = vmatmul.mubr.f32.gmra.mxu0 %v464
        %v2683 = vpop.f32.mrf.mxu0
        %v2684 = vadd.f32 0.0, %v2683
        %v2685 = vpop.f32.mrf.mxu0
        %2686 = vmatprep.mubr.f32.mxu0 0.0
        %2687 = vmatmul.mubr.f32.gmra.mxu0 %v466
        %v2688 = vpop.f32.mrf.mxu0
        %v2689 = vadd.f32 0.0, %v2688
        %v2690 = vpop.f32.mrf.mxu0
        %2691 = vmatprep.mubr.f32.mxu0 0.0
        %2692 = vmatmul.mubr.f32.gmra.mxu0 %v468
        %v2693 = vpop.f32.mrf.mxu0
        %v2694 = vadd.f32 0.0, %v2693
        %v2695 = vpop.f32.mrf.mxu0
        %2696 = vmatprep.mubr.f32.mxu0 0.0
        %2697 = vmatmul.mubr.f32.gmra.mxu0 %v1674
        %v2698 = vpop.f32.mrf.mxu0
        %v2699 = vadd.f32 0.0, %v2698
        %v2700 = vpop.f32.mrf.mxu0
        %2701 = vmatprep.mubr.f32.mxu0 0.0
        %2702 = vmatmul.mubr.f32.gmra.mxu0 %v1676
        %v2703 = vpop.f32.mrf.mxu0
        %v2704 = vadd.f32 0.0, %v2703
        %v2705 = vpop.f32.mrf.mxu0
        %2706 = vmatprep.mubr.f32.mxu0 0.0
        %2707 = vmatmul.mubr.f32.gmra.mxu0 %v2485
        %v2708 = vpop.f32.mrf.mxu0
        %v2709 = vadd.f32 0.0, %v2708
        %v2710 = vpop.f32.mrf.mxu0
        %2711 = vmatprep.mubr.f32.mxu0 0.0
        %2712 = vmatmul.mubr.f32.gmra.mxu0 %v2487
        %v2713 = vpop.f32.mrf.mxu0
        %v2714 = vadd.f32 0.0, %v2713
        %v2715 = vpop.f32.mrf.mxu0
        %2716 = vdwg.mxu0
        %v2717 = vadd.f32 %v2445, %v2559
        %v2718 = vadd.f32 %v2446, %v2564
        %v2719 = vadd.f32 %v2447, %v2569
        %v2720 = vadd.f32 %v2448, %v2574
        %v2721 = vadd.f32 %v2449, %v2579
        %v2722 = vadd.f32 %v2450, %v2584
        %v2723 = vadd.f32 %v2451, %v2589
        %v2724 = vadd.f32 %v2452, %v2594
        %v2725 = vadd.f32 %v2453, %v2599
        %v2726 = vadd.f32 %v2454, %v2604
        %v2727 = vadd.f32 %v2455, %v2609
        %v2728 = vadd.f32 %v2456, %v2614
        %v2729 = vadd.f32 %v2457, %v2619
        %v2730 = vadd.f32 %v2458, %v2624
        %v2731 = vadd.f32 %v2459, %v2629
        %v2732 = vadd.f32 %v2460, %v2634
        %v2733 = vadd.f32 %v2461, %v2639
        %v2734 = vadd.f32 %v2462, %v2644
        %v2735 = vadd.f32 %v2463, %v2649
        %v2736 = vadd.f32 %v2464, %v2654
        %v2737 = vadd.f32 %v2465, %v2659
        %v2738 = vadd.f32 %v2466, %v2664
        %v2739 = vadd.f32 %v2467, %v2669
        %v2740 = vadd.f32 %v2468, %v2674
        %v2741 = vadd.f32 %v2469, %v2679
        %v2742 = vadd.f32 %v2470, %v2684
        %v2743 = vadd.f32 %v2471, %v2689
        %v2744 = vadd.f32 %v2472, %v2694
        %v2745 = vadd.f32 %v2473, %v2699
        %v2746 = vadd.f32 %v2474, %v2704
        %v2747 = vadd.f32 %v2475, %v2709
        %v2748 = vadd.f32 %v2476, %v2714
        %v2749 = vrot.slane %v270, 2
        %v2750 = vrot.slane %v271, 2
        %v2751 = vsel %vm991, %v2749, %v2750
        %v2752 = vrot.slane %v272, 2
        %v2753 = vsel %vm991, %v2750, %v2752
        %s2754 = scalar_lea.vmem %s212, 32
        %v2755 = vld [vmem:[%s2754] sm:$0xf]
        %v2756 = vsel %vm405, %v2751, 0
        %v2758 = vsel %vm405, %v2753, 0
        %v2761 = vsel %vm470, %v2755, 0
        %2763 = vmatprep.subr.mxu0 0.0
        %2764 = vmatpush1.msra.mxu0 0.0
        %2765 = vmatprep.subr.mxu0 0.0
        %2766 = vmatpush1.msra.mxu0 0.0
        %2767 = vmatprep.subr.mxu0 0.0
        %2768 = vmatpush1.msra.mxu0 0.0
        %2769 = vmatprep.subr.mxu0 0.0
        %2770 = vmatpush1.msra.mxu0 0.0
        %2771 = vmatprep.subr.mxu0 0.0
        %2772 = vmatpush1.msra.mxu0 0.0
        %2773 = vmatprep.subr.mxu0 0.0
        %2774 = vmatpush1.msra.mxu0 0.0
        %2775 = vmatprep.subr.mxu0 0.0
        %2776 = vmatpush1.msra.mxu0 0.0
        %2777 = vmatprep.subr.mxu0 0.0
        %2778 = vmatpush1.msra.mxu0 0.0
        %2779 = vmatprep.subr.mxu0 0.0
        %2780 = vmatpush1.msra.mxu0 0.0
        %2781 = vmatprep.subr.mxu0 0.0
        %2782 = vmatpush1.msra.mxu0 0.0
        %2783 = vmatprep.subr.mxu0 0.0
        %2784 = vmatpush1.msra.mxu0 0.0
        %2785 = vmatprep.subr.mxu0 0.0
        %2786 = vmatpush1.msra.mxu0 0.0
        %2787 = vmatprep.subr.mxu0 0.0
        %2788 = vmatpush1.msra.mxu0 0.0
        %2789 = vmatprep.subr.mxu0 0.0
        %2790 = vmatpush1.msra.mxu0 0.0
        %2791 = vmatprep.subr.mxu0 0.0
        %2792 = vmatpush1.msra.mxu0 0.0
        %2793 = vmatprep.subr.mxu0 0.0
        %2794 = vmatpush1.msra.mxu0 %v2761
        %2795 = vmatprep.subr.mxu0 0.0
        %2796 = vmatpush2.msra.mxu0 0.0
        %2797 = vmatprep.subr.mxu0 0.0
        %2798 = vmatpush2.msra.mxu0 0.0
        %2799 = vmatprep.subr.mxu0 0.0
        %2800 = vmatpush2.msra.mxu0 0.0
        %2801 = vmatprep.subr.mxu0 0.0
        %2802 = vmatpush2.msra.mxu0 0.0
        %2803 = vmatprep.subr.mxu0 0.0
        %2804 = vmatpush2.msra.mxu0 0.0
        %2805 = vmatprep.subr.mxu0 0.0
        %2806 = vmatpush2.msra.mxu0 0.0
        %2807 = vmatprep.subr.mxu0 0.0
        %2808 = vmatpush2.msra.mxu0 0.0
        %2809 = vmatprep.subr.mxu0 0.0
        %2810 = vmatpush2.msra.mxu0 0.0
        %2811 = vmatprep.subr.mxu0 0.0
        %2812 = vmatpush2.msra.mxu0 0.0
        %2813 = vmatprep.subr.mxu0 0.0
        %2814 = vmatpush2.msra.mxu0 0.0
        %2815 = vmatprep.subr.mxu0 0.0
        %2816 = vmatpush2.msra.mxu0 0.0
        %2817 = vmatprep.subr.mxu0 0.0
        %2818 = vmatpush2.msra.mxu0 0.0
        %2819 = vmatprep.subr.mxu0 0.0
        %2820 = vmatpush2.msra.mxu0 0.0
        %2821 = vmatprep.subr.mxu0 0.0
        %2822 = vmatpush2.msra.mxu0 0.0
        %2823 = vmatprep.subr.mxu0 0.0
        %2824 = vmatpush2.msra.mxu0 0.0
        %2825 = vmatprep.subr.mxu0 0.0
        %2826 = vmatpush2.msra.mxu0 0.0
        %2827 = vmatprep.mubr.f32.mxu0 0.0
        %2828 = vmatmul.mubr.f32.gmra.mxu0 %v1082
        %v2829 = vpop.f32.mrf.mxu0
        %v2830 = vadd.f32 0.0, %v2829
        %v2831 = vpop.f32.mrf.mxu0
        %2832 = vmatprep.mubr.f32.mxu0 0.0
        %2833 = vmatmul.mubr.f32.gmra.mxu0 %v1084
        %v2834 = vpop.f32.mrf.mxu0
        %v2835 = vadd.f32 0.0, %v2834
        %v2836 = vpop.f32.mrf.mxu0
        %2837 = vmatprep.mubr.f32.mxu0 0.0
        %2838 = vmatmul.mubr.f32.gmra.mxu0 %v1086
        %v2839 = vpop.f32.mrf.mxu0
        %v2840 = vadd.f32 0.0, %v2839
        %v2841 = vpop.f32.mrf.mxu0
        %2842 = vmatprep.mubr.f32.mxu0 0.0
        %2843 = vmatmul.mubr.f32.gmra.mxu0 %v1088
        %v2844 = vpop.f32.mrf.mxu0
        %v2845 = vadd.f32 0.0, %v2844
        %v2846 = vpop.f32.mrf.mxu0
        %2847 = vmatprep.mubr.f32.mxu0 0.0
        %2848 = vmatmul.mubr.f32.gmra.mxu0 %v1090
        %v2849 = vpop.f32.mrf.mxu0
        %v2850 = vadd.f32 0.0, %v2849
        %v2851 = vpop.f32.mrf.mxu0
        %2852 = vmatprep.mubr.f32.mxu0 0.0
        %2853 = vmatmul.mubr.f32.gmra.mxu0 %v1092
        %v2854 = vpop.f32.mrf.mxu0
        %v2855 = vadd.f32 0.0, %v2854
        %v2856 = vpop.f32.mrf.mxu0
        %2857 = vmatprep.mubr.f32.mxu0 0.0
        %2858 = vmatmul.mubr.f32.gmra.mxu0 %v1094
        %v2859 = vpop.f32.mrf.mxu0
        %v2860 = vadd.f32 0.0, %v2859
        %v2861 = vpop.f32.mrf.mxu0
        %2862 = vmatprep.mubr.f32.mxu0 0.0
        %2863 = vmatmul.mubr.f32.gmra.mxu0 %v1096
        %v2864 = vpop.f32.mrf.mxu0
        %v2865 = vadd.f32 0.0, %v2864
        %v2866 = vpop.f32.mrf.mxu0
        %2867 = vmatprep.mubr.f32.mxu0 0.0
        %2868 = vmatmul.mubr.f32.gmra.mxu0 %v1098
        %v2869 = vpop.f32.mrf.mxu0
        %v2870 = vadd.f32 0.0, %v2869
        %v2871 = vpop.f32.mrf.mxu0
        %2872 = vmatprep.mubr.f32.mxu0 0.0
        %2873 = vmatmul.mubr.f32.gmra.mxu0 %v1100
        %v2874 = vpop.f32.mrf.mxu0
        %v2875 = vadd.f32 0.0, %v2874
        %v2876 = vpop.f32.mrf.mxu0
        %2877 = vmatprep.mubr.f32.mxu0 0.0
        %2878 = vmatmul.mubr.f32.gmra.mxu0 %v1102
        %v2879 = vpop.f32.mrf.mxu0
        %v2880 = vadd.f32 0.0, %v2879
        %v2881 = vpop.f32.mrf.mxu0
        %2882 = vmatprep.mubr.f32.mxu0 0.0
        %2883 = vmatmul.mubr.f32.gmra.mxu0 %v1104
        %v2884 = vpop.f32.mrf.mxu0
        %v2885 = vadd.f32 0.0, %v2884
        %v2886 = vpop.f32.mrf.mxu0
        %2887 = vmatprep.mubr.f32.mxu0 0.0
        %2888 = vmatmul.mubr.f32.gmra.mxu0 %v1106
        %v2889 = vpop.f32.mrf.mxu0
        %v2890 = vadd.f32 0.0, %v2889
        %v2891 = vpop.f32.mrf.mxu0
        %2892 = vmatprep.mubr.f32.mxu0 0.0
        %2893 = vmatmul.mubr.f32.gmra.mxu0 %v1108
        %v2894 = vpop.f32.mrf.mxu0
        %v2895 = vadd.f32 0.0, %v2894
        %v2896 = vpop.f32.mrf.mxu0
        %2897 = vmatprep.mubr.f32.mxu0 0.0
        %2898 = vmatmul.mubr.f32.gmra.mxu0 %v1110
        %v2899 = vpop.f32.mrf.mxu0
        %v2900 = vadd.f32 0.0, %v2899
        %v2901 = vpop.f32.mrf.mxu0
        %2902 = vmatprep.mubr.f32.mxu0 0.0
        %2903 = vmatmul.mubr.f32.gmra.mxu0 %v1112
        %v2904 = vpop.f32.mrf.mxu0
        %v2905 = vadd.f32 0.0, %v2904
        %v2906 = vpop.f32.mrf.mxu0
        %2907 = vmatprep.mubr.f32.mxu0 0.0
        %2908 = vmatmul.mubr.f32.gmra.mxu0 %v1114
        %v2909 = vpop.f32.mrf.mxu0
        %v2910 = vadd.f32 0.0, %v2909
        %v2911 = vpop.f32.mrf.mxu0
        %2912 = vmatprep.mubr.f32.mxu0 0.0
        %2913 = vmatmul.mubr.f32.gmra.mxu0 %v1116
        %v2914 = vpop.f32.mrf.mxu0
        %v2915 = vadd.f32 0.0, %v2914
        %v2916 = vpop.f32.mrf.mxu0
        %2917 = vmatprep.mubr.f32.mxu0 0.0
        %2918 = vmatmul.mubr.f32.gmra.mxu0 %v1118
        %v2919 = vpop.f32.mrf.mxu0
        %v2920 = vadd.f32 0.0, %v2919
        %v2921 = vpop.f32.mrf.mxu0
        %2922 = vmatprep.mubr.f32.mxu0 0.0
        %2923 = vmatmul.mubr.f32.gmra.mxu0 %v1120
        %v2924 = vpop.f32.mrf.mxu0
        %v2925 = vadd.f32 0.0, %v2924
        %v2926 = vpop.f32.mrf.mxu0
        %2927 = vmatprep.mubr.f32.mxu0 0.0
        %2928 = vmatmul.mubr.f32.gmra.mxu0 %v1122
        %v2929 = vpop.f32.mrf.mxu0
        %v2930 = vadd.f32 0.0, %v2929
        %v2931 = vpop.f32.mrf.mxu0
        %2932 = vmatprep.mubr.f32.mxu0 0.0
        %2933 = vmatmul.mubr.f32.gmra.mxu0 %v1124
        %v2934 = vpop.f32.mrf.mxu0
        %v2935 = vadd.f32 0.0, %v2934
        %v2936 = vpop.f32.mrf.mxu0
        %2937 = vmatprep.mubr.f32.mxu0 0.0
        %2938 = vmatmul.mubr.f32.gmra.mxu0 %v1126
        %v2939 = vpop.f32.mrf.mxu0
        %v2940 = vadd.f32 0.0, %v2939
        %v2941 = vpop.f32.mrf.mxu0
        %2942 = vmatprep.mubr.f32.mxu0 0.0
        %2943 = vmatmul.mubr.f32.gmra.mxu0 %v1128
        %v2944 = vpop.f32.mrf.mxu0
        %v2945 = vadd.f32 0.0, %v2944
        %v2946 = vpop.f32.mrf.mxu0
        %2947 = vmatprep.mubr.f32.mxu0 0.0
        %2948 = vmatmul.mubr.f32.gmra.mxu0 %v1130
        %v2949 = vpop.f32.mrf.mxu0
        %v2950 = vadd.f32 0.0, %v2949
        %v2951 = vpop.f32.mrf.mxu0
        %2952 = vmatprep.mubr.f32.mxu0 0.0
        %2953 = vmatmul.mubr.f32.gmra.mxu0 %v1132
        %v2954 = vpop.f32.mrf.mxu0
        %v2955 = vadd.f32 0.0, %v2954
        %v2956 = vpop.f32.mrf.mxu0
        %2957 = vmatprep.mubr.f32.mxu0 0.0
        %2958 = vmatmul.mubr.f32.gmra.mxu0 %v1134
        %v2959 = vpop.f32.mrf.mxu0
        %v2960 = vadd.f32 0.0, %v2959
        %v2961 = vpop.f32.mrf.mxu0
        %2962 = vmatprep.mubr.f32.mxu0 0.0
        %2963 = vmatmul.mubr.f32.gmra.mxu0 %v1136
        %v2964 = vpop.f32.mrf.mxu0
        %v2965 = vadd.f32 0.0, %v2964
        %v2966 = vpop.f32.mrf.mxu0
        %2967 = vmatprep.mubr.f32.mxu0 0.0
        %2968 = vmatmul.mubr.f32.gmra.mxu0 %v1945
        %v2969 = vpop.f32.mrf.mxu0
        %v2970 = vadd.f32 0.0, %v2969
        %v2971 = vpop.f32.mrf.mxu0
        %2972 = vmatprep.mubr.f32.mxu0 0.0
        %2973 = vmatmul.mubr.f32.gmra.mxu0 %v1947
        %v2974 = vpop.f32.mrf.mxu0
        %v2975 = vadd.f32 0.0, %v2974
        %v2976 = vpop.f32.mrf.mxu0
        %2977 = vmatprep.mubr.f32.mxu0 0.0
        %2978 = vmatmul.mubr.f32.gmra.mxu0 %v2756
        %v2979 = vpop.f32.mrf.mxu0
        %v2980 = vadd.f32 0.0, %v2979
        %v2981 = vpop.f32.mrf.mxu0
        %2982 = vmatprep.mubr.f32.mxu0 0.0
        %2983 = vmatmul.mubr.f32.gmra.mxu0 %v2758
        %v2984 = vpop.f32.mrf.mxu0
        %v2985 = vadd.f32 0.0, %v2984
        %v2986 = vpop.f32.mrf.mxu0
        %2987 = vdwg.mxu0
        %v2988 = vadd.f32 %v2717, %v2830
        %v2989 = vadd.f32 %v2718, %v2835
        %v2990 = vadd.f32 %v2719, %v2840
        %v2991 = vadd.f32 %v2720, %v2845
        %v2992 = vadd.f32 %v2721, %v2850
        %v2993 = vadd.f32 %v2722, %v2855
        %v2994 = vadd.f32 %v2723, %v2860
        %v2995 = vadd.f32 %v2724, %v2865
        %v2996 = vadd.f32 %v2725, %v2870
        %v2997 = vadd.f32 %v2726, %v2875
        %v2998 = vadd.f32 %v2727, %v2880
        %v2999 = vadd.f32 %v2728, %v2885
        %v3000 = vadd.f32 %v2729, %v2890
        %v3001 = vadd.f32 %v2730, %v2895
        %v3002 = vadd.f32 %v2731, %v2900
        %v3003 = vadd.f32 %v2732, %v2905
        %v3004 = vadd.f32 %v2733, %v2910
        %v3005 = vadd.f32 %v2734, %v2915
        %v3006 = vadd.f32 %v2735, %v2920
        %v3007 = vadd.f32 %v2736, %v2925
        %v3008 = vadd.f32 %v2737, %v2930
        %v3009 = vadd.f32 %v2738, %v2935
        %v3010 = vadd.f32 %v2739, %v2940
        %v3011 = vadd.f32 %v2740, %v2945
        %v3012 = vadd.f32 %v2741, %v2950
        %v3013 = vadd.f32 %v2742, %v2955
        %v3014 = vadd.f32 %v2743, %v2960
        %v3015 = vadd.f32 %v2744, %v2965
        %v3016 = vadd.f32 %v2745, %v2970
        %v3017 = vadd.f32 %v2746, %v2975
        %v3018 = vadd.f32 %v2747, %v2980
        %v3019 = vadd.f32 %v2748, %v2985
        %v3020 = vlaneseq
        %v3021 = vshrl.u32 %v3020, 7
        %v3022 = vsub.s32 0, %v3021
        %v3023 = vrot.slane %v217, %v3022
        %v3024 = vmul.f32 %v2988, %v3023
        %v3025 = vmul.f32 %v2989, %v3023
        %v3026 = vmul.f32 %v2990, %v3023
        %v3027 = vmul.f32 %v2991, %v3023
        %v3028 = vmul.f32 %v2992, %v3023
        %v3029 = vmul.f32 %v2993, %v3023
        %v3030 = vmul.f32 %v2994, %v3023
        %v3031 = vmul.f32 %v2995, %v3023
        %v3032 = vmul.f32 %v2996, %v3023
        %v3033 = vmul.f32 %v2997, %v3023
        %v3034 = vmul.f32 %v2998, %v3023
        %v3035 = vmul.f32 %v2999, %v3023
        %v3036 = vmul.f32 %v3000, %v3023
        %v3037 = vmul.f32 %v3001, %v3023
        %v3038 = vmul.f32 %v3002, %v3023
        %v3039 = vmul.f32 %v3003, %v3023
        %v3040 = vmul.f32 %v3004, %v3023
        %v3041 = vmul.f32 %v3005, %v3023
        %v3042 = vmul.f32 %v3006, %v3023
        %v3043 = vmul.f32 %v3007, %v3023
        %v3044 = vmul.f32 %v3008, %v3023
        %v3045 = vmul.f32 %v3009, %v3023
        %v3046 = vmul.f32 %v3010, %v3023
        %v3047 = vmul.f32 %v3011, %v3023
        %v3048 = vmul.f32 %v3012, %v3023
        %v3049 = vmul.f32 %v3013, %v3023
        %v3050 = vmul.f32 %v3014, %v3023
        %v3051 = vmul.f32 %v3015, %v3023
        %v3052 = vmul.f32 %v3016, %v3023
        %v3053 = vmul.f32 %v3017, %v3023
        %v3054 = vmul.f32 %v3018, %v3023
        %v3055 = vmul.f32 %v3019, %v3023
        %v3056 = vlaneseq
        %v3057 = vshrl.u32 %v3056, 7
        %v3058 = vsub.s32 0, %v3057
        %v3059 = vrot.slane %v218, %v3058
        %v3060 = vadd.f32 %v3024, %v3059
        %v3061 = vadd.f32 %v3025, %v3059
        %v3062 = vadd.f32 %v3026, %v3059
        %v3063 = vadd.f32 %v3027, %v3059
        %v3064 = vadd.f32 %v3028, %v3059
        %v3065 = vadd.f32 %v3029, %v3059
        %v3066 = vadd.f32 %v3030, %v3059
        %v3067 = vadd.f32 %v3031, %v3059
        %v3068 = vadd.f32 %v3032, %v3059
        %v3069 = vadd.f32 %v3033, %v3059
        %v3070 = vadd.f32 %v3034, %v3059
        %v3071 = vadd.f32 %v3035, %v3059
        %v3072 = vadd.f32 %v3036, %v3059
        %v3073 = vadd.f32 %v3037, %v3059
        %v3074 = vadd.f32 %v3038, %v3059
        %v3075 = vadd.f32 %v3039, %v3059
        %v3076 = vadd.f32 %v3040, %v3059
        %v3077 = vadd.f32 %v3041, %v3059
        %v3078 = vadd.f32 %v3042, %v3059
        %v3079 = vadd.f32 %v3043, %v3059
        %v3080 = vadd.f32 %v3044, %v3059
        %v3081 = vadd.f32 %v3045, %v3059
        %v3082 = vadd.f32 %v3046, %v3059
        %v3083 = vadd.f32 %v3047, %v3059
        %v3084 = vadd.f32 %v3048, %v3059
        %v3085 = vadd.f32 %v3049, %v3059
        %v3086 = vadd.f32 %v3050, %v3059
        %v3087 = vadd.f32 %v3051, %v3059
        %v3088 = vadd.f32 %v3052, %v3059
        %v3089 = vadd.f32 %v3053, %v3059
        %v3090 = vadd.f32 %v3054, %v3059
        %v3091 = vadd.f32 %v3055, %v3059
        %v3092 = vmax.f32 %v3060, 0.0
        %v3093 = vmax.f32 %v3061, 0.0
        %v3094 = vmax.f32 %v3062, 0.0
        %v3095 = vmax.f32 %v3063, 0.0
        %v3096 = vmax.f32 %v3064, 0.0
        %v3097 = vmax.f32 %v3065, 0.0
        %v3098 = vmax.f32 %v3066, 0.0
        %v3099 = vmax.f32 %v3067, 0.0
        %v3100 = vmax.f32 %v3068, 0.0
        %v3101 = vmax.f32 %v3069, 0.0
        %v3102 = vmax.f32 %v3070, 0.0
        %v3103 = vmax.f32 %v3071, 0.0
        %v3104 = vmax.f32 %v3072, 0.0
        %v3105 = vmax.f32 %v3073, 0.0
        %v3106 = vmax.f32 %v3074, 0.0
        %v3107 = vmax.f32 %v3075, 0.0
        %v3108 = vmax.f32 %v3076, 0.0
        %v3109 = vmax.f32 %v3077, 0.0
        %v3110 = vmax.f32 %v3078, 0.0
        %v3111 = vmax.f32 %v3079, 0.0
        %v3112 = vmax.f32 %v3080, 0.0
        %v3113 = vmax.f32 %v3081, 0.0
        %v3114 = vmax.f32 %v3082, 0.0
        %v3115 = vmax.f32 %v3083, 0.0
        %v3116 = vmax.f32 %v3084, 0.0
        %v3117 = vmax.f32 %v3085, 0.0
        %v3118 = vmax.f32 %v3086, 0.0
        %v3119 = vmax.f32 %v3087, 0.0
        %v3120 = vmax.f32 %v3088, 0.0
        %v3121 = vmax.f32 %v3089, 0.0
        %v3122 = vmax.f32 %v3090, 0.0
        %v3123 = vmax.f32 %v3091, 0.0
        %3124 = vst [vmem:[%s203] sm:$0xff] %v3092
        %3125 = vst [vmem:[%s203 + $0x8] sm:$0xff] %v3093
        %3126 = vst [vmem:[%s203 + $0x10] sm:$0xff] %v3094
        %3127 = vst [vmem:[%s203 + $0x18] sm:$0xff] %v3095
        %3128 = vst [vmem:[%s203 + $0x20] sm:$0xff] %v3096
        %3129 = vst [vmem:[%s203 + $0x28] sm:$0xff] %v3097
        %3130 = vst [vmem:[%s203 + $0x30] sm:$0xff] %v3098
        %3131 = vst [vmem:[%s203 + $0x38] sm:$0xff] %v3099
        %3132 = vst [vmem:[%s203 + $0x40] sm:$0xff] %v3100
        %3133 = vst [vmem:[%s203 + $0x48] sm:$0xff] %v3101
        %3134 = vst [vmem:[%s203 + $0x50] sm:$0xff] %v3102
        %3135 = vst [vmem:[%s203 + $0x58] sm:$0xff] %v3103
        %3136 = vst [vmem:[%s203 + $0x60] sm:$0xff] %v3104
        %3137 = vst [vmem:[%s203 + $0x68] sm:$0xff] %v3105
        %3138 = vst [vmem:[%s203 + $0x70] sm:$0xff] %v3106
        %3139 = vst [vmem:[%s203 + $0x78] sm:$0xff] %v3107
        %3140 = vst [vmem:[%s203 + $0x80] sm:$0xff] %v3108
        %3141 = vst [vmem:[%s203 + $0x88] sm:$0xff] %v3109
        %3142 = vst [vmem:[%s203 + $0x90] sm:$0xff] %v3110
        %3143 = vst [vmem:[%s203 + $0x98] sm:$0xff] %v3111
        %3144 = vst [vmem:[%s203 + $0xa0] sm:$0xff] %v3112
        %3145 = vst [vmem:[%s203 + $0xa8] sm:$0xff] %v3113
        %3146 = vst [vmem:[%s203 + $0xb0] sm:$0xff] %v3114
        %3147 = vst [vmem:[%s203 + $0xb8] sm:$0xff] %v3115
        %3148 = vst [vmem:[%s203 + $0xc0] sm:$0xff] %v3116
        %3149 = vst [vmem:[%s203 + $0xc8] sm:$0xff] %v3117
        %3150 = vst [vmem:[%s203 + $0xd0] sm:$0xff] %v3118
        %3151 = vst [vmem:[%s203 + $0xd8] sm:$0xff] %v3119
        %3152 = vst [vmem:[%s203 + $0xe0] sm:$0xff] %v3120
        %3153 = vst [vmem:[%s203 + $0xe8] sm:$0xff] %v3121
        %3154 = vst [vmem:[%s203 + $0xf0] sm:$0xff] %v3122
        %3155 = vst [vmem:[%s203 + $0xf8] sm:$0xff] %v3123
        %s3156 = sand.u32 %s117, 1
        %s3157 = scalar_lea.sflag [#allocation3], %s3156
        %s3158 = sand.u32 %s117, 1
        %s3159 = smul.addr %s3158, 256
        %s3160 = scalar_lea.vmem [#allocation2], %s3159
        // Predicated region
        $region33: #{tpu_custom_call.1} parent=31 // pred_check
          %p3161 = pneg %p127
        $region34: #{tpu_custom_call.1} parent=31 // pred_check_branch
          %3163 = sbr.rel (%p3161) target = $region36
        $region35: #{tpu_custom_call.1} parent=31 // pred_region
          %s3165 = ssub.s32 4096, 4096
          %3166 = vsyncadd %s3157, %s3165
          %s3167 = smul.addr %s22, 32
          %s3168 = sadd.s32 %s21, %s3167
          %s3169 = smul.addr %s3168, 128
          %s3170 = scalar_lea.hbm %s3, %s3169
          %s3171 = sshll.u32 %s3160, 4
          %s3172 = int_to_ptr.vmem [resolvable:$true] %s3171
          %3177 = dma.vmem_to_hbm [thread:$0]  %s3172, 4096, %s3170, %s3157, 128, 128, 8
        $region36: #{tpu_custom_call.1} parent=31 // pred_fallthru
          _
      $region32: #{tpu_custom_call.1} parent=5 // pred_fallthru
        _
      %p3178 = scmp.le.s32.totalorder 2, %s12
      // Predicated region
      $region37: #{tpu_custom_call.1} parent=5 // pred_check
        %p3179 = pneg %p3178
      $region38: #{tpu_custom_call.1} parent=5 // pred_check_branch
        %3181 = sbr.rel (%p3179) target = $region40
      $region39: #{tpu_custom_call.1} parent=5 // pred_region
        %s3182 = ssub.s32 %s12, 2
        // Predicated region
        $region41: #{tpu_custom_call.1} parent=39 // pred_check
          %p3183 = pneg %p133
        $region42: #{tpu_custom_call.1} parent=39 // pred_check_branch
          %3185 = sbr.rel (%p3183) target = $region44
        $region43: #{tpu_custom_call.1} parent=39 // pred_region
          %s3186 = sand.u32 %s118, 1
          %s3187 = scalar_lea.sflag [#allocation3], %s3186
          %s3188 = sand.u32 %s118, 1
          %s3189 = smul.addr %s3188, 256
          %s3190 = scalar_lea.vmem [#allocation2], %s3189
          %3191 = dma.done %s3187, 4096
        $region44: #{tpu_custom_call.1} parent=39 // pred_fallthru
          _
      $region40: #{tpu_custom_call.1} parent=5 // pred_fallthru
        _
    $region6: #{tpu_custom_call.1} parent=1 // loop_footer
      %s16 = sadd.s32 1, %s12
    $region7: #{tpu_custom_call.1} parent=1 // loop_footer_branch
      %11 = sbr.rel target = $region3
    $region8: #{tpu_custom_call.1} parent=1 // loop_exit
      _
    %3192 = vsyncpa [#allocation3], 1
    %s3193 = scalar_lea.sflag [#allocation3], 1
    %3194 = vsyncpa %s3193, 1

</llo_original>
